<compile_context>
chip_gen: v6e
topology: v6e:2x2x1
jax: 0.10.0
libtpu: 0.0.40
codegen_flags: <defaults>
</compile_context>

<pallas_src>
import functools

import numpy as np
import jax
import jax.numpy as jnp
from jax.experimental import pallas as pl
from jax.experimental.pallas import tpu as pltpu


# ---------------------------------------------------------------------------
# Fused forward kernel: one grid step == TB images.
# Row layout: global row = b*slot + h  (slot = 32 for conv1/pool1, 24 for
# conv2/pool2).  Lane layouts: input w; conv1 w'*6+oc; pool1 q*6+c (compacted);
# conv2 w2*16+oc; pool2 kept un-compacted (even-w2 lanes of 144).
# ---------------------------------------------------------------------------
def _lenet_kernel(x_ref, g1_ref, m1_ref, b1_ref, selc1_ref, m2_ref, b2_ref,
                  wfc1_ref, bfc1_ref, wfc2_ref, bfc2_ref, wfc3_ref, bfc3_ref,
                  o_ref, *, tb):
    f32 = jnp.float32
    cd = m1_ref.dtype                       # compute dtype (bf16 by default)
    R = tb * 32                             # rows for 32-row/image slots

    def mm(a, b):                           # MXU matmul, f32 accumulation
        return jnp.dot(a, b, preferred_element_type=f32)

    # ---- NCHW -> lane-dense (h, w*3+c) via 3 tiny 0/1 scatter matmuls ------
    xh = jnp.zeros((R, 96), f32)
    for c in range(3):
        lhs = x_ref[:, 32 * c:32 * c + 32, :].astype(cd).reshape(R, 32)
        xh = xh + mm(lhs, g1_ref[c])
    xhp = jnp.concatenate([xh.astype(cd), jnp.zeros((8, 96), cd)], axis=0)

    # ---- conv1 (valid 5x5, 3->6): 5 banded matmuls on the whole slab -------
    # Row b*32+h' (h'<28) is valid; rows 28..31 per slot are ignored garbage.
    y1 = jnp.zeros((R, 168), f32)
    for kh in range(5):
        y1 = y1 + mm(xhp[kh:kh + R, :], m1_ref[kh])
    y1 = jnp.maximum(y1 + b1_ref[...], 0.0)

    # ---- pool1: w-pairs via lane-shifted max, then one 0/1 lane compaction;
    #      h-pairs via sublane-shifted max (valid at even rows 2p) ------------
    y1w = jnp.maximum(y1[:, 0:162], y1[:, 6:168]).astype(cd)   # max(w, w+1)
    y1wc = mm(y1w, selc1_ref[...]).astype(cd)                  # (R, 84) even-w only
    y1wcp = jnp.concatenate([y1wc, jnp.zeros((8, 84), cd)], axis=0)
    a1 = jnp.maximum(y1wcp[0:R, :], y1wcp[1:R + 1, :])         # max(h, h+1)
    a1 = a1.reshape(tb, 32, 84)             # row 2p holds P1[:, p, :]

    # ---- conv2 (valid 5x5, 6->16) on 24-row/image slots (valid at rows 2*h2)
    R2 = tb * 24
    y2 = jnp.zeros((R2, 160), f32)
    for kh in range(5):
        lhs = a1[:, 2 * kh:2 * kh + 24, :].reshape(R2, 84)
        y2 = y2 + mm(lhs, m2_ref[kh])
    y2 = jnp.maximum(y2 + b2_ref[...], 0.0)

    # ---- pool2: w-pairs via lane-shifted max; h-pairs folded into fc1 ------
    y2w = jnp.maximum(y2[:, 0:144], y2[:, 16:160]).astype(cd)  # even-w2 lanes valid
    y2w = y2w.reshape(tb, 24, 144)

    # ---- fc1: torch NCHW flatten + pool2 compaction folded into wfc1 -------
    z = jnp.zeros((tb, 120), f32)
    for k in range(5):
        sel = jnp.maximum(y2w[:, 4 * k, :], y2w[:, 4 * k + 2, :])  # P2 row k
        z = z + mm(sel, wfc1_ref[k])
    z = jnp.maximum(z + bfc1_ref[...], 0.0).astype(cd)

    # ---- fc2, fc3 (fc3 padded to 128 lanes -> lane-dense HBM store) --------
    z = jnp.maximum(mm(z, wfc2_ref[...]) + bfc2_ref[...], 0.0).astype(cd)
    z = mm(z, wfc3_ref[...]) + bfc3_ref[...]
    o_ref[0] = z.astype(o_ref.dtype)


# ---------------------------------------------------------------------------
# One-time host-side repack of torch-layout params into kernel layouts.
# ---------------------------------------------------------------------------
def prepare_params(p, compute_dtype=jnp.bfloat16):
    f32 = np.float32
    g = lambda a: np.asarray(a, dtype=f32)
    c1w, c1b = g(p["conv1_w"]), g(p["conv1_b"])        # (6,3,5,5), (6,)
    c2w, c2b = g(p["conv2_w"]), g(p["conv2_b"])        # (16,6,5,5), (16,)
    f1w, f1b = g(p["fc1_w"]), g(p["fc1_b"])            # (120,400), (120,)
    f2w, f2b = g(p["fc2_w"]), g(p["fc2_b"])            # (84,120), (84,)
    f3w, f3b = g(p["fc3_w"]), g(p["fc3_b"])            # (10,84), (10,)

    def banded(w_oihw, w_in, w_out):
        # M[kh, (wo+kw)*IC + ic, wo*OC + oc] = w[oc, ic, kh, kw]
        oc_n, ic_n, kh_n, kw_n = w_oihw.shape
        m = np.zeros((kh_n, w_in * ic_n, w_out * oc_n), f32)
        for kh in range(kh_n):
            for kw in range(kw_n):
                blk = w_oihw[:, :, kh, kw].T           # (ic, oc)
                for wo in range(w_out):
                    r, c = (wo + kw) * ic_n, wo * oc_n
                    m[kh, r:r + ic_n, c:c + oc_n] = blk
        return m

    # NCHW -> lane-dense scatter: g1[c][w, w*3+c] = 1
    g1 = np.zeros((3, 32, 96), f32)
    for c in range(3):
        for w in range(32):
            g1[c, w, w * 3 + c] = 1.0

    m1 = banded(c1w, 32, 28)                           # (5, 96, 168)
    m2 = banded(c2w, 14, 10)                           # (5, 84, 160)
    b1 = np.tile(c1b, 28).reshape(1, 168)
    b2 = np.tile(c2b, 10).reshape(1, 160)

    # pool1 lane compaction: keep even pooled-w columns of the 162-wide max
    selc1 = np.zeros((162, 84), f32)
    for q in range(14):
        for c in range(6):
            selc1[(2 * q) * 6 + c, q * 6 + c] = 1.0

    # fc1: fold in (a) torch's NCHW flatten (idx = c*25 + k*5 + s) and (b) the
    # un-compacted pool2 lane layout (row (2s)*16 + c of tap k).
    wfc1 = np.zeros((5, 144, 120), f32)
    for k in range(5):
        for s in range(5):
            for c in range(16):
                wfc1[k, (2 * s) * 16 + c, :] = f1w[:, c * 25 + k * 5 + s]

    wfc3 = np.zeros((84, 128), f32)
    wfc3[:, :10] = f3w.T
    bfc3 = np.zeros((1, 128), f32)
    bfc3[0, :10] = f3b

    jw = lambda a: jnp.asarray(a, dtype=compute_dtype)   # matmul operands
    jf = lambda a: jnp.asarray(a, dtype=jnp.float32)     # biases stay f32
    return {
        "g1": jw(g1), "m1": jw(m1), "b1": jf(b1),
        "selc1": jw(selc1), "m2": jw(m2), "b2": jf(b2),
        "wfc1": jw(wfc1), "bfc1": jf(f1b.reshape(1, 120)),
        "wfc2": jw(np.ascontiguousarray(f2w.T)), "bfc2": jf(f2b.reshape(1, 84)),
        "wfc3": jw(wfc3), "bfc3": jf(bfc3),
    }


# ---------------------------------------------------------------------------
# Wrapper: one pallas_call for the whole net, TB images per grid step.
# ---------------------------------------------------------------------------
def net_forward(x_nchw, prep, *, block_b=32):
    B = x_nchw.shape[0]
    tb = min(block_b, B)                    # images per grid step
    nblk = pl.cdiv(B, tb)
    Bp = nblk * tb
    # NCHW -> (B, 96, 32) is a pure view (rows = c*32+h, lanes = w); the
    # lane-dense scatter happens on the MXU inside the kernel, so there is no
    # HBM transpose pre-pass.
    x = x_nchw.astype(jnp.float32).reshape(B, 96, 32)
    if Bp != B:
        x = jnp.pad(x, ((0, Bp - B), (0, 0), (0, 0)))

    def const(shape):
        return pl.BlockSpec(shape, lambda *_: (0,) * len(shape))

    consts = (prep["g1"], prep["m1"], prep["b1"], prep["selc1"], prep["m2"],
              prep["b2"], prep["wfc1"], prep["bfc1"], prep["wfc2"],
              prep["bfc2"], prep["wfc3"], prep["bfc3"])

    macs = Bp * (3 * 32 * 32 * 96 + 5 * 32 * 96 * 168 + 32 * 162 * 84
                 + 5 * 24 * 84 * 160 + 5 * 144 * 120 + 120 * 84 + 84 * 128)
    const_bytes = sum(int(np.prod(c.shape)) * c.dtype.itemsize for c in consts)
    cost = pl.CostEstimate(flops=2 * macs, transcendentals=0,
                           bytes_accessed=x.size * 4 + Bp * 128 * 4 + const_bytes)

    out = pl.pallas_call(
        functools.partial(_lenet_kernel, tb=tb),
        out_shape=jax.ShapeDtypeStruct((nblk, tb, 128), jnp.float32),
        grid=(nblk,),
        in_specs=[pl.BlockSpec((tb, 96, 32), lambda i: (i, 0, 0))]
                 + [const(c.shape) for c in consts],
        out_specs=pl.BlockSpec((1, tb, 128), lambda i: (i, 0, 0)),
        compiler_params=pltpu.CompilerParams(
            dimension_semantics=("parallel",)),     # megacore over batch blocks
        cost_estimate=cost,
    )(x, *consts)
    return out.reshape(Bp, 128)[:B, :10]


# ---------------------------------------------------------------------------
# Pure-JAX f32 reference (matches the torch module) and param init.
# ---------------------------------------------------------------------------
def net_forward_ref(x_nchw, p):
    x = x_nchw.astype(jnp.float32)

    def conv_relu(x, w, b):
        y = jax.lax.conv_general_dilated(
            x, w, window_strides=(1, 1), padding="VALID",
            dimension_numbers=("NCHW", "OIHW", "NCHW"))
        return jax.nn.relu(y + b.reshape(1, -1, 1, 1))

    def pool(x):
        return jax.lax.reduce_window(
            x, -jnp.inf, jax.lax.max, (1, 1, 2, 2), (1, 1, 2, 2), "VALID")

    x = pool(conv_relu(x, p["conv1_w"], p["conv1_b"]))
    x = pool(conv_relu(x, p["conv2_w"], p["conv2_b"]))
    x = x.reshape(x.shape[0], 16 * 5 * 5)              # torch NCHW flatten
    x = jax.nn.relu(x @ p["fc1_w"].T + p["fc1_b"])
    x = jax.nn.relu(x @ p["fc2_w"].T + p["fc2_b"])
    return x @ p["fc3_w"].T + p["fc3_b"]


def init_params(key):
    """Deterministic init mimicking PyTorch defaults (uniform +/- 1/sqrt(fan_in))."""
    ks = jax.random.split(key, 10)

    def u(k, shape, fan_in):
        bound = 1.0 / float(fan_in) ** 0.5
        return jax.random.uniform(k, shape, jnp.float32, -bound, bound)

    return {
        "conv1_w": u(ks[0], (6, 3, 5, 5), 3 * 5 * 5),
        "conv1_b": u(ks[1], (6,), 3 * 5 * 5),
        "conv2_w": u(ks[2], (16, 6, 5, 5), 6 * 5 * 5),
        "conv2_b": u(ks[3], (16,), 6 * 5 * 5),
        "fc1_w": u(ks[4], (120, 400), 400),
        "fc1_b": u(ks[5], (120,), 400),
        "fc2_w": u(ks[6], (84, 120), 120),
        "fc2_b": u(ks[7], (84,), 120),
        "fc3_w": u(ks[8], (10, 84), 84),
        "fc3_b": u(ks[9], (10,), 84),
    }


if __name__ == "__main__":
    key = jax.random.PRNGKey(0)
    k_params, k_x = jax.random.split(key)
    params = init_params(k_params)
    # fc1 hard-codes 16*5*5, which forces 3x32x32 spatial input (NCHW).
    x = jax.random.normal(k_x, (5, 3, 32, 32), dtype=jnp.float32)

    prep = prepare_params(params)                      # one-time weight repack
    fwd = jax.jit(net_forward, static_argnames=("block_b",))

    # block_b=2 -> tb=2 images/step, 3 grid steps, batch padded 5 -> 6:
    # exercises multi-image slots, multi-step grid and the padding path.
    out = jax.block_until_ready(fwd(x, prep, block_b=2))
    assert out.shape == (5, 10), out.shape

    # Sanity check against the pure-JAX f32 reference (loose tol: bf16 matmuls).
    ref = jax.block_until_ready(jax.jit(net_forward_ref)(x, params))
    np.testing.assert_allclose(np.asarray(out), np.asarray(ref),
                               atol=1.5e-2, rtol=1.5e-2)

    print("KERNEL_OK")
</pallas_src>

<mosaic_0001>
module attributes {stable_mosaic.version = 11 : i64} {
  func.func @_lenet_kernel(%arg0: i32, %arg1: memref<2x96x32xf32, #tpu.memory_space<vmem>>, %arg2: memref<3x32x96xbf16, #tpu.memory_space<vmem>>, %arg3: memref<5x96x168xbf16, #tpu.memory_space<vmem>>, %arg4: memref<1x168xf32, #tpu.memory_space<vmem>>, %arg5: memref<162x84xbf16, #tpu.memory_space<vmem>>, %arg6: memref<5x84x160xbf16, #tpu.memory_space<vmem>>, %arg7: memref<1x160xf32, #tpu.memory_space<vmem>>, %arg8: memref<5x144x120xbf16, #tpu.memory_space<vmem>>, %arg9: memref<1x120xf32, #tpu.memory_space<vmem>>, %arg10: memref<120x84xbf16, #tpu.memory_space<vmem>>, %arg11: memref<1x84xf32, #tpu.memory_space<vmem>>, %arg12: memref<84x128xbf16, #tpu.memory_space<vmem>>, %arg13: memref<1x128xf32, #tpu.memory_space<vmem>>, %arg14: memref<1x2x128xf32, #tpu.memory_space<vmem>>) attributes {dimension_semantics = [#tpu.dimension_semantics<parallel>], iteration_bounds = array<i64: 3>, scalar_prefetch = 0 : i64, scratch_operands = 0 : i64, tpu.core_type = #tpu.core_type<tc>, window_params = [{transform_indices = @transform_0, window_bounds = array<i64: 2, 96, 32>}, {pipeline_mode = #tpu.pipeline_mode<synchronous>, transform_indices = @transform_1, window_bounds = array<i64: 3, 32, 96>}, {pipeline_mode = #tpu.pipeline_mode<synchronous>, transform_indices = @transform_2, window_bounds = array<i64: 5, 96, 168>}, {pipeline_mode = #tpu.pipeline_mode<synchronous>, transform_indices = @transform_3, window_bounds = array<i64: 1, 168>}, {pipeline_mode = #tpu.pipeline_mode<synchronous>, transform_indices = @transform_4, window_bounds = array<i64: 162, 84>}, {pipeline_mode = #tpu.pipeline_mode<synchronous>, transform_indices = @transform_5, window_bounds = array<i64: 5, 84, 160>}, {pipeline_mode = #tpu.pipeline_mode<synchronous>, transform_indices = @transform_6, window_bounds = array<i64: 1, 160>}, {pipeline_mode = #tpu.pipeline_mode<synchronous>, transform_indices = @transform_7, window_bounds = array<i64: 5, 144, 120>}, {pipeline_mode = #tpu.pipeline_mode<synchronous>, transform_indices = @transform_8, window_bounds = array<i64: 1, 120>}, {pipeline_mode = #tpu.pipeline_mode<synchronous>, transform_indices = @transform_9, window_bounds = array<i64: 120, 84>}, {pipeline_mode = #tpu.pipeline_mode<synchronous>, transform_indices = @transform_10, window_bounds = array<i64: 1, 84>}, {pipeline_mode = #tpu.pipeline_mode<synchronous>, transform_indices = @transform_11, window_bounds = array<i64: 84, 128>}, {pipeline_mode = #tpu.pipeline_mode<synchronous>, transform_indices = @transform_12, window_bounds = array<i64: 1, 128>}, {transform_indices = @transform_13, window_bounds = array<i64: 1, 2, 128>}]} {
    %cst = arith.constant 0.000000e+00 : f32
    %0 = vector.broadcast %cst : f32 to vector<64x96xf32>
    %c0 = arith.constant 0 : index
    %c0_0 = arith.constant 0 : index
    %c0_1 = arith.constant 0 : index
    %1 = vector.load %arg1[%c0, %c0_0, %c0_1] : memref<2x96x32xf32, #tpu.memory_space<vmem>>, vector<2x32x32xf32>
    %2 = arith.truncf %1 : vector<2x32x32xf32> to vector<2x32x32xbf16>
    %3 = vector.shape_cast %2 : vector<2x32x32xbf16> to vector<64x32xbf16>
    %c0_2 = arith.constant 0 : index
    %c0_3 = arith.constant 0 : index
    %c0_4 = arith.constant 0 : index
    %4 = vector.load %arg2[%c0_2, %c0_3, %c0_4] : memref<3x32x96xbf16, #tpu.memory_space<vmem>>, vector<1x32x96xbf16>
    %5 = vector.shape_cast %4 : vector<1x32x96xbf16> to vector<32x96xbf16>
    %cst_5 = arith.constant dense<0.000000e+00> : vector<64x96xf32>
    %6 = tpu.matmul %3, %5, %cst_5 {dimension_numbers = #tpu.dot_dimension_numbers<[1], [0], [0], [1], [0, 0, 1, 1], [], []>} : vector<64x32xbf16>, vector<32x96xbf16>, vector<64x96xf32> -> vector<64x96xf32>
    %7 = arith.addf %0, %6 : vector<64x96xf32>
    %c0_6 = arith.constant 0 : index
    %c32 = arith.constant 32 : index
    %c0_7 = arith.constant 0 : index
    %8 = vector.load %arg1[%c0_6, %c32, %c0_7] : memref<2x96x32xf32, #tpu.memory_space<vmem>>, vector<2x32x32xf32>
    %9 = arith.truncf %8 : vector<2x32x32xf32> to vector<2x32x32xbf16>
    %10 = vector.shape_cast %9 : vector<2x32x32xbf16> to vector<64x32xbf16>
    %c1 = arith.constant 1 : index
    %c0_8 = arith.constant 0 : index
    %c0_9 = arith.constant 0 : index
    %11 = vector.load %arg2[%c1, %c0_8, %c0_9] : memref<3x32x96xbf16, #tpu.memory_space<vmem>>, vector<1x32x96xbf16>
    %12 = vector.shape_cast %11 : vector<1x32x96xbf16> to vector<32x96xbf16>
    %cst_10 = arith.constant dense<0.000000e+00> : vector<64x96xf32>
    %13 = tpu.matmul %10, %12, %cst_10 {dimension_numbers = #tpu.dot_dimension_numbers<[1], [0], [0], [1], [0, 0, 1, 1], [], []>} : vector<64x32xbf16>, vector<32x96xbf16>, vector<64x96xf32> -> vector<64x96xf32>
    %14 = arith.addf %7, %13 : vector<64x96xf32>
    %c0_11 = arith.constant 0 : index
    %c64 = arith.constant 64 : index
    %c0_12 = arith.constant 0 : index
    %15 = vector.load %arg1[%c0_11, %c64, %c0_12] : memref<2x96x32xf32, #tpu.memory_space<vmem>>, vector<2x32x32xf32>
    %16 = arith.truncf %15 : vector<2x32x32xf32> to vector<2x32x32xbf16>
    %17 = vector.shape_cast %16 : vector<2x32x32xbf16> to vector<64x32xbf16>
    %c2 = arith.constant 2 : index
    %c0_13 = arith.constant 0 : index
    %c0_14 = arith.constant 0 : index
    %18 = vector.load %arg2[%c2, %c0_13, %c0_14] : memref<3x32x96xbf16, #tpu.memory_space<vmem>>, vector<1x32x96xbf16>
    %19 = vector.shape_cast %18 : vector<1x32x96xbf16> to vector<32x96xbf16>
    %cst_15 = arith.constant dense<0.000000e+00> : vector<64x96xf32>
    %20 = tpu.matmul %17, %19, %cst_15 {dimension_numbers = #tpu.dot_dimension_numbers<[1], [0], [0], [1], [0, 0, 1, 1], [], []>} : vector<64x32xbf16>, vector<32x96xbf16>, vector<64x96xf32> -> vector<64x96xf32>
    %21 = arith.addf %14, %20 : vector<64x96xf32>
    %22 = arith.truncf %21 : vector<64x96xf32> to vector<64x96xbf16>
    %cst_16 = arith.constant 0.000000e+00 : bf16
    %23 = vector.broadcast %cst_16 : bf16 to vector<8x96xbf16>
    %24 = tpu.concatenate %22, %23 in 0 : vector<64x96xbf16>, vector<8x96xbf16> -> vector<72x96xbf16>
    %cst_17 = arith.constant 0.000000e+00 : f32
    %25 = vector.broadcast %cst_17 : f32 to vector<64x168xf32>
    %26 = vector.extract_strided_slice %24 {offsets = [0, 0], sizes = [64, 96], strides = [1, 1]} : vector<72x96xbf16> to vector<64x96xbf16>
    %c0_18 = arith.constant 0 : index
    %c0_19 = arith.constant 0 : index
    %c0_20 = arith.constant 0 : index
    %27 = vector.load %arg3[%c0_18, %c0_19, %c0_20] : memref<5x96x168xbf16, #tpu.memory_space<vmem>>, vector<1x96x168xbf16>
    %28 = vector.shape_cast %27 : vector<1x96x168xbf16> to vector<96x168xbf16>
    %cst_21 = arith.constant dense<0.000000e+00> : vector<64x168xf32>
    %29 = tpu.matmul %26, %28, %cst_21 {dimension_numbers = #tpu.dot_dimension_numbers<[1], [0], [0], [1], [0, 0, 1, 1], [], []>} : vector<64x96xbf16>, vector<96x168xbf16>, vector<64x168xf32> -> vector<64x168xf32>
    %30 = arith.addf %25, %29 : vector<64x168xf32>
    %31 = vector.extract_strided_slice %24 {offsets = [1, 0], sizes = [64, 96], strides = [1, 1]} : vector<72x96xbf16> to vector<64x96xbf16>
    %c1_22 = arith.constant 1 : index
    %c0_23 = arith.constant 0 : index
    %c0_24 = arith.constant 0 : index
    %32 = vector.load %arg3[%c1_22, %c0_23, %c0_24] : memref<5x96x168xbf16, #tpu.memory_space<vmem>>, vector<1x96x168xbf16>
    %33 = vector.shape_cast %32 : vector<1x96x168xbf16> to vector<96x168xbf16>
    %cst_25 = arith.constant dense<0.000000e+00> : vector<64x168xf32>
    %34 = tpu.matmul %31, %33, %cst_25 {dimension_numbers = #tpu.dot_dimension_numbers<[1], [0], [0], [1], [0, 0, 1, 1], [], []>} : vector<64x96xbf16>, vector<96x168xbf16>, vector<64x168xf32> -> vector<64x168xf32>
    %35 = arith.addf %30, %34 : vector<64x168xf32>
    %36 = vector.extract_strided_slice %24 {offsets = [2, 0], sizes = [64, 96], strides = [1, 1]} : vector<72x96xbf16> to vector<64x96xbf16>
    %c2_26 = arith.constant 2 : index
    %c0_27 = arith.constant 0 : index
    %c0_28 = arith.constant 0 : index
    %37 = vector.load %arg3[%c2_26, %c0_27, %c0_28] : memref<5x96x168xbf16, #tpu.memory_space<vmem>>, vector<1x96x168xbf16>
    %38 = vector.shape_cast %37 : vector<1x96x168xbf16> to vector<96x168xbf16>
    %cst_29 = arith.constant dense<0.000000e+00> : vector<64x168xf32>
    %39 = tpu.matmul %36, %38, %cst_29 {dimension_numbers = #tpu.dot_dimension_numbers<[1], [0], [0], [1], [0, 0, 1, 1], [], []>} : vector<64x96xbf16>, vector<96x168xbf16>, vector<64x168xf32> -> vector<64x168xf32>
    %40 = arith.addf %35, %39 : vector<64x168xf32>
    %41 = vector.extract_strided_slice %24 {offsets = [3, 0], sizes = [64, 96], strides = [1, 1]} : vector<72x96xbf16> to vector<64x96xbf16>
    %c3 = arith.constant 3 : index
    %c0_30 = arith.constant 0 : index
    %c0_31 = arith.constant 0 : index
    %42 = vector.load %arg3[%c3, %c0_30, %c0_31] : memref<5x96x168xbf16, #tpu.memory_space<vmem>>, vector<1x96x168xbf16>
    %43 = vector.shape_cast %42 : vector<1x96x168xbf16> to vector<96x168xbf16>
    %cst_32 = arith.constant dense<0.000000e+00> : vector<64x168xf32>
    %44 = tpu.matmul %41, %43, %cst_32 {dimension_numbers = #tpu.dot_dimension_numbers<[1], [0], [0], [1], [0, 0, 1, 1], [], []>} : vector<64x96xbf16>, vector<96x168xbf16>, vector<64x168xf32> -> vector<64x168xf32>
    %45 = arith.addf %40, %44 : vector<64x168xf32>
    %46 = vector.extract_strided_slice %24 {offsets = [4, 0], sizes = [64, 96], strides = [1, 1]} : vector<72x96xbf16> to vector<64x96xbf16>
    %c4 = arith.constant 4 : index
    %c0_33 = arith.constant 0 : index
    %c0_34 = arith.constant 0 : index
    %47 = vector.load %arg3[%c4, %c0_33, %c0_34] : memref<5x96x168xbf16, #tpu.memory_space<vmem>>, vector<1x96x168xbf16>
    %48 = vector.shape_cast %47 : vector<1x96x168xbf16> to vector<96x168xbf16>
    %cst_35 = arith.constant dense<0.000000e+00> : vector<64x168xf32>
    %49 = tpu.matmul %46, %48, %cst_35 {dimension_numbers = #tpu.dot_dimension_numbers<[1], [0], [0], [1], [0, 0, 1, 1], [], []>} : vector<64x96xbf16>, vector<96x168xbf16>, vector<64x168xf32> -> vector<64x168xf32>
    %50 = arith.addf %45, %49 : vector<64x168xf32>
    %c0_36 = arith.constant 0 : index
    %c0_37 = arith.constant 0 : index
    %51 = vector.load %arg4[%c0_36, %c0_37] : memref<1x168xf32, #tpu.memory_space<vmem>>, vector<1x168xf32>
    %52 = vector.broadcast %51 : vector<1x168xf32> to vector<64x168xf32>
    %53 = arith.addf %50, %52 : vector<64x168xf32>
    %cst_38 = arith.constant 0.000000e+00 : f32
    %54 = vector.broadcast %cst_38 : f32 to vector<64x168xf32>
    %55 = arith.maximumf %53, %54 : vector<64x168xf32>
    %56 = vector.extract_strided_slice %55 {offsets = [0, 0], sizes = [64, 162], strides = [1, 1]} : vector<64x168xf32> to vector<64x162xf32>
    %57 = vector.extract_strided_slice %55 {offsets = [0, 6], sizes = [64, 162], strides = [1, 1]} : vector<64x168xf32> to vector<64x162xf32>
    %58 = arith.maximumf %56, %57 : vector<64x162xf32>
    %59 = arith.truncf %58 : vector<64x162xf32> to vector<64x162xbf16>
    %c0_39 = arith.constant 0 : index
    %c0_40 = arith.constant 0 : index
    %60 = vector.load %arg5[%c0_39, %c0_40] : memref<162x84xbf16, #tpu.memory_space<vmem>>, vector<162x84xbf16>
    %cst_41 = arith.constant dense<0.000000e+00> : vector<64x84xf32>
    %61 = tpu.matmul %59, %60, %cst_41 {dimension_numbers = #tpu.dot_dimension_numbers<[1], [0], [0], [1], [0, 0, 1, 1], [], []>} : vector<64x162xbf16>, vector<162x84xbf16>, vector<64x84xf32> -> vector<64x84xf32>
    %62 = arith.truncf %61 : vector<64x84xf32> to vector<64x84xbf16>
    %cst_42 = arith.constant 0.000000e+00 : bf16
    %63 = vector.broadcast %cst_42 : bf16 to vector<8x84xbf16>
    %64 = tpu.concatenate %62, %63 in 0 : vector<64x84xbf16>, vector<8x84xbf16> -> vector<72x84xbf16>
    %65 = vector.extract_strided_slice %64 {offsets = [0, 0], sizes = [64, 84], strides = [1, 1]} : vector<72x84xbf16> to vector<64x84xbf16>
    %66 = vector.extract_strided_slice %64 {offsets = [1, 0], sizes = [64, 84], strides = [1, 1]} : vector<72x84xbf16> to vector<64x84xbf16>
    %67 = arith.maximumf %65, %66 : vector<64x84xbf16>
    %68 = vector.shape_cast %67 : vector<64x84xbf16> to vector<2x32x84xbf16>
    %cst_43 = arith.constant 0.000000e+00 : f32
    %69 = vector.broadcast %cst_43 : f32 to vector<48x160xf32>
    %70 = vector.extract_strided_slice %68 {offsets = [0, 0, 0], sizes = [2, 24, 84], strides = [1, 1, 1]} : vector<2x32x84xbf16> to vector<2x24x84xbf16>
    %71 = vector.shape_cast %70 : vector<2x24x84xbf16> to vector<48x84xbf16>
    %c0_44 = arith.constant 0 : index
    %c0_45 = arith.constant 0 : index
    %c0_46 = arith.constant 0 : index
    %72 = vector.load %arg6[%c0_44, %c0_45, %c0_46] : memref<5x84x160xbf16, #tpu.memory_space<vmem>>, vector<1x84x160xbf16>
    %73 = vector.shape_cast %72 : vector<1x84x160xbf16> to vector<84x160xbf16>
    %cst_47 = arith.constant dense<0.000000e+00> : vector<48x160xf32>
    %74 = tpu.matmul %71, %73, %cst_47 {dimension_numbers = #tpu.dot_dimension_numbers<[1], [0], [0], [1], [0, 0, 1, 1], [], []>} : vector<48x84xbf16>, vector<84x160xbf16>, vector<48x160xf32> -> vector<48x160xf32>
    %75 = arith.addf %69, %74 : vector<48x160xf32>
    %76 = vector.extract_strided_slice %68 {offsets = [0, 2, 0], sizes = [2, 24, 84], strides = [1, 1, 1]} : vector<2x32x84xbf16> to vector<2x24x84xbf16>
    %77 = vector.shape_cast %76 : vector<2x24x84xbf16> to vector<48x84xbf16>
    %c1_48 = arith.constant 1 : index
    %c0_49 = arith.constant 0 : index
    %c0_50 = arith.constant 0 : index
    %78 = vector.load %arg6[%c1_48, %c0_49, %c0_50] : memref<5x84x160xbf16, #tpu.memory_space<vmem>>, vector<1x84x160xbf16>
    %79 = vector.shape_cast %78 : vector<1x84x160xbf16> to vector<84x160xbf16>
    %cst_51 = arith.constant dense<0.000000e+00> : vector<48x160xf32>
    %80 = tpu.matmul %77, %79, %cst_51 {dimension_numbers = #tpu.dot_dimension_numbers<[1], [0], [0], [1], [0, 0, 1, 1], [], []>} : vector<48x84xbf16>, vector<84x160xbf16>, vector<48x160xf32> -> vector<48x160xf32>
    %81 = arith.addf %75, %80 : vector<48x160xf32>
    %82 = vector.extract_strided_slice %68 {offsets = [0, 4, 0], sizes = [2, 24, 84], strides = [1, 1, 1]} : vector<2x32x84xbf16> to vector<2x24x84xbf16>
    %83 = vector.shape_cast %82 : vector<2x24x84xbf16> to vector<48x84xbf16>
    %c2_52 = arith.constant 2 : index
    %c0_53 = arith.constant 0 : index
    %c0_54 = arith.constant 0 : index
    %84 = vector.load %arg6[%c2_52, %c0_53, %c0_54] : memref<5x84x160xbf16, #tpu.memory_space<vmem>>, vector<1x84x160xbf16>
    %85 = vector.shape_cast %84 : vector<1x84x160xbf16> to vector<84x160xbf16>
    %cst_55 = arith.constant dense<0.000000e+00> : vector<48x160xf32>
    %86 = tpu.matmul %83, %85, %cst_55 {dimension_numbers = #tpu.dot_dimension_numbers<[1], [0], [0], [1], [0, 0, 1, 1], [], []>} : vector<48x84xbf16>, vector<84x160xbf16>, vector<48x160xf32> -> vector<48x160xf32>
    %87 = arith.addf %81, %86 : vector<48x160xf32>
    %88 = vector.extract_strided_slice %68 {offsets = [0, 6, 0], sizes = [2, 24, 84], strides = [1, 1, 1]} : vector<2x32x84xbf16> to vector<2x24x84xbf16>
    %89 = vector.shape_cast %88 : vector<2x24x84xbf16> to vector<48x84xbf16>
    %c3_56 = arith.constant 3 : index
    %c0_57 = arith.constant 0 : index
    %c0_58 = arith.constant 0 : index
    %90 = vector.load %arg6[%c3_56, %c0_57, %c0_58] : memref<5x84x160xbf16, #tpu.memory_space<vmem>>, vector<1x84x160xbf16>
    %91 = vector.shape_cast %90 : vector<1x84x160xbf16> to vector<84x160xbf16>
    %cst_59 = arith.constant dense<0.000000e+00> : vector<48x160xf32>
    %92 = tpu.matmul %89, %91, %cst_59 {dimension_numbers = #tpu.dot_dimension_numbers<[1], [0], [0], [1], [0, 0, 1, 1], [], []>} : vector<48x84xbf16>, vector<84x160xbf16>, vector<48x160xf32> -> vector<48x160xf32>
    %93 = arith.addf %87, %92 : vector<48x160xf32>
    %94 = vector.extract_strided_slice %68 {offsets = [0, 8, 0], sizes = [2, 24, 84], strides = [1, 1, 1]} : vector<2x32x84xbf16> to vector<2x24x84xbf16>
    %95 = vector.shape_cast %94 : vector<2x24x84xbf16> to vector<48x84xbf16>
    %c4_60 = arith.constant 4 : index
    %c0_61 = arith.constant 0 : index
    %c0_62 = arith.constant 0 : index
    %96 = vector.load %arg6[%c4_60, %c0_61, %c0_62] : memref<5x84x160xbf16, #tpu.memory_space<vmem>>, vector<1x84x160xbf16>
    %97 = vector.shape_cast %96 : vector<1x84x160xbf16> to vector<84x160xbf16>
    %cst_63 = arith.constant dense<0.000000e+00> : vector<48x160xf32>
    %98 = tpu.matmul %95, %97, %cst_63 {dimension_numbers = #tpu.dot_dimension_numbers<[1], [0], [0], [1], [0, 0, 1, 1], [], []>} : vector<48x84xbf16>, vector<84x160xbf16>, vector<48x160xf32> -> vector<48x160xf32>
    %99 = arith.addf %93, %98 : vector<48x160xf32>
    %c0_64 = arith.constant 0 : index
    %c0_65 = arith.constant 0 : index
    %100 = vector.load %arg7[%c0_64, %c0_65] : memref<1x160xf32, #tpu.memory_space<vmem>>, vector<1x160xf32>
    %101 = vector.broadcast %100 : vector<1x160xf32> to vector<48x160xf32>
    %102 = arith.addf %99, %101 : vector<48x160xf32>
    %cst_66 = arith.constant 0.000000e+00 : f32
    %103 = vector.broadcast %cst_66 : f32 to vector<48x160xf32>
    %104 = arith.maximumf %102, %103 : vector<48x160xf32>
    %105 = vector.extract_strided_slice %104 {offsets = [0, 0], sizes = [48, 144], strides = [1, 1]} : vector<48x160xf32> to vector<48x144xf32>
    %106 = vector.extract_strided_slice %104 {offsets = [0, 16], sizes = [48, 144], strides = [1, 1]} : vector<48x160xf32> to vector<48x144xf32>
    %107 = arith.maximumf %105, %106 : vector<48x144xf32>
    %108 = arith.truncf %107 : vector<48x144xf32> to vector<48x144xbf16>
    %109 = vector.shape_cast %108 : vector<48x144xbf16> to vector<2x24x144xbf16>
    %cst_67 = arith.constant 0.000000e+00 : f32
    %110 = vector.broadcast %cst_67 : f32 to vector<2x120xf32>
    %111 = vector.extract_strided_slice %109 {offsets = [0, 0, 0], sizes = [2, 1, 144], strides = [1, 1, 1]} : vector<2x24x144xbf16> to vector<2x1x144xbf16>
    %112 = vector.shape_cast %111 : vector<2x1x144xbf16> to vector<2x144xbf16>
    %113 = vector.extract_strided_slice %109 {offsets = [0, 2, 0], sizes = [2, 1, 144], strides = [1, 1, 1]} : vector<2x24x144xbf16> to vector<2x1x144xbf16>
    %114 = vector.shape_cast %113 : vector<2x1x144xbf16> to vector<2x144xbf16>
    %115 = arith.maximumf %112, %114 : vector<2x144xbf16>
    %c0_68 = arith.constant 0 : index
    %c0_69 = arith.constant 0 : index
    %c0_70 = arith.constant 0 : index
    %116 = vector.load %arg8[%c0_68, %c0_69, %c0_70] : memref<5x144x120xbf16, #tpu.memory_space<vmem>>, vector<1x144x120xbf16>
    %117 = vector.shape_cast %116 : vector<1x144x120xbf16> to vector<144x120xbf16>
    %cst_71 = arith.constant dense<0.000000e+00> : vector<2x120xf32>
    %118 = tpu.matmul %115, %117, %cst_71 {dimension_numbers = #tpu.dot_dimension_numbers<[1], [0], [0], [1], [0, 0, 1, 1], [], []>} : vector<2x144xbf16>, vector<144x120xbf16>, vector<2x120xf32> -> vector<2x120xf32>
    %119 = arith.addf %110, %118 : vector<2x120xf32>
    %120 = vector.extract_strided_slice %109 {offsets = [0, 4, 0], sizes = [2, 1, 144], strides = [1, 1, 1]} : vector<2x24x144xbf16> to vector<2x1x144xbf16>
    %121 = vector.shape_cast %120 : vector<2x1x144xbf16> to vector<2x144xbf16>
    %122 = vector.extract_strided_slice %109 {offsets = [0, 6, 0], sizes = [2, 1, 144], strides = [1, 1, 1]} : vector<2x24x144xbf16> to vector<2x1x144xbf16>
    %123 = vector.shape_cast %122 : vector<2x1x144xbf16> to vector<2x144xbf16>
    %124 = arith.maximumf %121, %123 : vector<2x144xbf16>
    %c1_72 = arith.constant 1 : index
    %c0_73 = arith.constant 0 : index
    %c0_74 = arith.constant 0 : index
    %125 = vector.load %arg8[%c1_72, %c0_73, %c0_74] : memref<5x144x120xbf16, #tpu.memory_space<vmem>>, vector<1x144x120xbf16>
    %126 = vector.shape_cast %125 : vector<1x144x120xbf16> to vector<144x120xbf16>
    %cst_75 = arith.constant dense<0.000000e+00> : vector<2x120xf32>
    %127 = tpu.matmul %124, %126, %cst_75 {dimension_numbers = #tpu.dot_dimension_numbers<[1], [0], [0], [1], [0, 0, 1, 1], [], []>} : vector<2x144xbf16>, vector<144x120xbf16>, vector<2x120xf32> -> vector<2x120xf32>
    %128 = arith.addf %119, %127 : vector<2x120xf32>
    %129 = vector.extract_strided_slice %109 {offsets = [0, 8, 0], sizes = [2, 1, 144], strides = [1, 1, 1]} : vector<2x24x144xbf16> to vector<2x1x144xbf16>
    %130 = vector.shape_cast %129 : vector<2x1x144xbf16> to vector<2x144xbf16>
    %131 = vector.extract_strided_slice %109 {offsets = [0, 10, 0], sizes = [2, 1, 144], strides = [1, 1, 1]} : vector<2x24x144xbf16> to vector<2x1x144xbf16>
    %132 = vector.shape_cast %131 : vector<2x1x144xbf16> to vector<2x144xbf16>
    %133 = arith.maximumf %130, %132 : vector<2x144xbf16>
    %c2_76 = arith.constant 2 : index
    %c0_77 = arith.constant 0 : index
    %c0_78 = arith.constant 0 : index
    %134 = vector.load %arg8[%c2_76, %c0_77, %c0_78] : memref<5x144x120xbf16, #tpu.memory_space<vmem>>, vector<1x144x120xbf16>
    %135 = vector.shape_cast %134 : vector<1x144x120xbf16> to vector<144x120xbf16>
    %cst_79 = arith.constant dense<0.000000e+00> : vector<2x120xf32>
    %136 = tpu.matmul %133, %135, %cst_79 {dimension_numbers = #tpu.dot_dimension_numbers<[1], [0], [0], [1], [0, 0, 1, 1], [], []>} : vector<2x144xbf16>, vector<144x120xbf16>, vector<2x120xf32> -> vector<2x120xf32>
    %137 = arith.addf %128, %136 : vector<2x120xf32>
    %138 = vector.extract_strided_slice %109 {offsets = [0, 12, 0], sizes = [2, 1, 144], strides = [1, 1, 1]} : vector<2x24x144xbf16> to vector<2x1x144xbf16>
    %139 = vector.shape_cast %138 : vector<2x1x144xbf16> to vector<2x144xbf16>
    %140 = vector.extract_strided_slice %109 {offsets = [0, 14, 0], sizes = [2, 1, 144], strides = [1, 1, 1]} : vector<2x24x144xbf16> to vector<2x1x144xbf16>
    %141 = vector.shape_cast %140 : vector<2x1x144xbf16> to vector<2x144xbf16>
    %142 = arith.maximumf %139, %141 : vector<2x144xbf16>
    %c3_80 = arith.constant 3 : index
    %c0_81 = arith.constant 0 : index
    %c0_82 = arith.constant 0 : index
    %143 = vector.load %arg8[%c3_80, %c0_81, %c0_82] : memref<5x144x120xbf16, #tpu.memory_space<vmem>>, vector<1x144x120xbf16>
    %144 = vector.shape_cast %143 : vector<1x144x120xbf16> to vector<144x120xbf16>
    %cst_83 = arith.constant dense<0.000000e+00> : vector<2x120xf32>
    %145 = tpu.matmul %142, %144, %cst_83 {dimension_numbers = #tpu.dot_dimension_numbers<[1], [0], [0], [1], [0, 0, 1, 1], [], []>} : vector<2x144xbf16>, vector<144x120xbf16>, vector<2x120xf32> -> vector<2x120xf32>
    %146 = arith.addf %137, %145 : vector<2x120xf32>
    %147 = vector.extract_strided_slice %109 {offsets = [0, 16, 0], sizes = [2, 1, 144], strides = [1, 1, 1]} : vector<2x24x144xbf16> to vector<2x1x144xbf16>
    %148 = vector.shape_cast %147 : vector<2x1x144xbf16> to vector<2x144xbf16>
    %149 = vector.extract_strided_slice %109 {offsets = [0, 18, 0], sizes = [2, 1, 144], strides = [1, 1, 1]} : vector<2x24x144xbf16> to vector<2x1x144xbf16>
    %150 = vector.shape_cast %149 : vector<2x1x144xbf16> to vector<2x144xbf16>
    %151 = arith.maximumf %148, %150 : vector<2x144xbf16>
    %c4_84 = arith.constant 4 : index
    %c0_85 = arith.constant 0 : index
    %c0_86 = arith.constant 0 : index
    %152 = vector.load %arg8[%c4_84, %c0_85, %c0_86] : memref<5x144x120xbf16, #tpu.memory_space<vmem>>, vector<1x144x120xbf16>
    %153 = vector.shape_cast %152 : vector<1x144x120xbf16> to vector<144x120xbf16>
    %cst_87 = arith.constant dense<0.000000e+00> : vector<2x120xf32>
    %154 = tpu.matmul %151, %153, %cst_87 {dimension_numbers = #tpu.dot_dimension_numbers<[1], [0], [0], [1], [0, 0, 1, 1], [], []>} : vector<2x144xbf16>, vector<144x120xbf16>, vector<2x120xf32> -> vector<2x120xf32>
    %155 = arith.addf %146, %154 : vector<2x120xf32>
    %c0_88 = arith.constant 0 : index
    %c0_89 = arith.constant 0 : index
    %156 = vector.load %arg9[%c0_88, %c0_89] : memref<1x120xf32, #tpu.memory_space<vmem>>, vector<1x120xf32>
    %157 = vector.broadcast %156 : vector<1x120xf32> to vector<2x120xf32>
    %158 = arith.addf %155, %157 : vector<2x120xf32>
    %cst_90 = arith.constant 0.000000e+00 : f32
    %159 = vector.broadcast %cst_90 : f32 to vector<2x120xf32>
    %160 = arith.maximumf %158, %159 : vector<2x120xf32>
    %161 = arith.truncf %160 : vector<2x120xf32> to vector<2x120xbf16>
    %c0_91 = arith.constant 0 : index
    %c0_92 = arith.constant 0 : index
    %162 = vector.load %arg10[%c0_91, %c0_92] : memref<120x84xbf16, #tpu.memory_space<vmem>>, vector<120x84xbf16>
    %cst_93 = arith.constant dense<0.000000e+00> : vector<2x84xf32>
    %163 = tpu.matmul %161, %162, %cst_93 {dimension_numbers = #tpu.dot_dimension_numbers<[1], [0], [0], [1], [0, 0, 1, 1], [], []>} : vector<2x120xbf16>, vector<120x84xbf16>, vector<2x84xf32> -> vector<2x84xf32>
    %c0_94 = arith.constant 0 : index
    %c0_95 = arith.constant 0 : index
    %164 = vector.load %arg11[%c0_94, %c0_95] : memref<1x84xf32, #tpu.memory_space<vmem>>, vector<1x84xf32>
    %165 = vector.broadcast %164 : vector<1x84xf32> to vector<2x84xf32>
    %166 = arith.addf %163, %165 : vector<2x84xf32>
    %cst_96 = arith.constant 0.000000e+00 : f32
    %167 = vector.broadcast %cst_96 : f32 to vector<2x84xf32>
    %168 = arith.maximumf %166, %167 : vector<2x84xf32>
    %169 = arith.truncf %168 : vector<2x84xf32> to vector<2x84xbf16>
    %c0_97 = arith.constant 0 : index
    %c0_98 = arith.constant 0 : index
    %170 = vector.load %arg12[%c0_97, %c0_98] : memref<84x128xbf16, #tpu.memory_space<vmem>>, vector<84x128xbf16>
    %cst_99 = arith.constant dense<0.000000e+00> : vector<2x128xf32>
    %171 = tpu.matmul %169, %170, %cst_99 {dimension_numbers = #tpu.dot_dimension_numbers<[1], [0], [0], [1], [0, 0, 1, 1], [], []>} : vector<2x84xbf16>, vector<84x128xbf16>, vector<2x128xf32> -> vector<2x128xf32>
    %c0_100 = arith.constant 0 : index
    %c0_101 = arith.constant 0 : index
    %172 = vector.load %arg13[%c0_100, %c0_101] : memref<1x128xf32, #tpu.memory_space<vmem>>, vector<1x128xf32>
    %173 = vector.broadcast %172 : vector<1x128xf32> to vector<2x128xf32>
    %174 = arith.addf %171, %173 : vector<2x128xf32>
    %c0_102 = arith.constant 0 : index
    %c0_103 = arith.constant 0 : index
    %c0_104 = arith.constant 0 : index
    %175 = vector.load %arg14[%c0_102, %c0_103, %c0_104] : memref<1x2x128xf32, #tpu.memory_space<vmem>>, vector<1x2x128xf32>
    %176 = vector.shape_cast %175 : vector<1x2x128xf32> to vector<2x128xf32>
    %177 = vector.shape_cast %174 : vector<2x128xf32> to vector<1x2x128xf32>
    tpu.vector_store %arg14[%c0_102, %c0_103, %c0_104], %177 {strides = array<i32>} : memref<1x2x128xf32, #tpu.memory_space<vmem>>, vector<1x2x128xf32>,
    return
  }
  func.func @transform_0(%arg0: i32) -> (i32, i32, i32) {
    %c0_i32 = arith.constant 0 : i32
    %c0_i32_0 = arith.constant 0 : i32
    %c0_i32_1 = arith.constant 0 : i32
    return %arg0, %c0_i32, %c0_i32_0 : i32, i32, i32
  }
  func.func @transform_1(%arg0: i32) -> (i32, i32, i32) {
    %c0_i32 = arith.constant 0 : i32
    %c0_i32_0 = arith.constant 0 : i32
    %c0_i32_1 = arith.constant 0 : i32
    %c0_i32_2 = arith.constant 0 : i32
    return %c0_i32, %c0_i32_0, %c0_i32_1 : i32, i32, i32
  }
  func.func @transform_2(%arg0: i32) -> (i32, i32, i32) {
    %c0_i32 = arith.constant 0 : i32
    %c0_i32_0 = arith.constant 0 : i32
    %c0_i32_1 = arith.constant 0 : i32
    %c0_i32_2 = arith.constant 0 : i32
    return %c0_i32, %c0_i32_0, %c0_i32_1 : i32, i32, i32
  }
  func.func @transform_3(%arg0: i32) -> (i32, i32) {
    %c0_i32 = arith.constant 0 : i32
    %c0_i32_0 = arith.constant 0 : i32
    %c0_i32_1 = arith.constant 0 : i32
    return %c0_i32, %c0_i32_0 : i32, i32
  }
  func.func @transform_4(%arg0: i32) -> (i32, i32) {
    %c0_i32 = arith.constant 0 : i32
    %c0_i32_0 = arith.constant 0 : i32
    %c0_i32_1 = arith.constant 0 : i32
    return %c0_i32, %c0_i32_0 : i32, i32
  }
  func.func @transform_5(%arg0: i32) -> (i32, i32, i32) {
    %c0_i32 = arith.constant 0 : i32
    %c0_i32_0 = arith.constant 0 : i32
    %c0_i32_1 = arith.constant 0 : i32
    %c0_i32_2 = arith.constant 0 : i32
    return %c0_i32, %c0_i32_0, %c0_i32_1 : i32, i32, i32
  }
  func.func @transform_6(%arg0: i32) -> (i32, i32) {
    %c0_i32 = arith.constant 0 : i32
    %c0_i32_0 = arith.constant 0 : i32
    %c0_i32_1 = arith.constant 0 : i32
    return %c0_i32, %c0_i32_0 : i32, i32
  }
  func.func @transform_7(%arg0: i32) -> (i32, i32, i32) {
    %c0_i32 = arith.constant 0 : i32
    %c0_i32_0 = arith.constant 0 : i32
    %c0_i32_1 = arith.constant 0 : i32
    %c0_i32_2 = arith.constant 0 : i32
    return %c0_i32, %c0_i32_0, %c0_i32_1 : i32, i32, i32
  }
  func.func @transform_8(%arg0: i32) -> (i32, i32) {
    %c0_i32 = arith.constant 0 : i32
    %c0_i32_0 = arith.constant 0 : i32
    %c0_i32_1 = arith.constant 0 : i32
    return %c0_i32, %c0_i32_0 : i32, i32
  }
  func.func @transform_9(%arg0: i32) -> (i32, i32) {
    %c0_i32 = arith.constant 0 : i32
    %c0_i32_0 = arith.constant 0 : i32
    %c0_i32_1 = arith.constant 0 : i32
    return %c0_i32, %c0_i32_0 : i32, i32
  }
  func.func @transform_10(%arg0: i32) -> (i32, i32) {
    %c0_i32 = arith.constant 0 : i32
    %c0_i32_0 = arith.constant 0 : i32
    %c0_i32_1 = arith.constant 0 : i32
    return %c0_i32, %c0_i32_0 : i32, i32
  }
  func.func @transform_11(%arg0: i32) -> (i32, i32) {
    %c0_i32 = arith.constant 0 : i32
    %c0_i32_0 = arith.constant 0 : i32
    %c0_i32_1 = arith.constant 0 : i32
    return %c0_i32, %c0_i32_0 : i32, i32
  }
  func.func @transform_12(%arg0: i32) -> (i32, i32) {
    %c0_i32 = arith.constant 0 : i32
    %c0_i32_0 = arith.constant 0 : i32
    %c0_i32_1 = arith.constant 0 : i32
    return %c0_i32, %c0_i32_0 : i32, i32
  }
  func.func @transform_13(%arg0: i32) -> (i32, i32, i32) {
    %c0_i32 = arith.constant 0 : i32
    %c0_i32_0 = arith.constant 0 : i32
    %c0_i32_1 = arith.constant 0 : i32
    return %arg0, %c0_i32, %c0_i32_0 : i32, i32, i32
  }
}

</mosaic_0001>

<llo_original>
// kernel: net_forward.1
$region0: #{net_forward.1}
  #allocation0 [shape = 'u32[]', space=smem, size = 0x4, offset = 0x4, fixed_abs, tag = 'smem constant byte address 0x4 - core index']
  #allocation1 [shape = 'u32[144,128]{1,0:T(1,128)}', space=vmem, size = 0x12000, scoped, tag = 'internal scratch']
  %s0 = inlined_call_operand.vmem [shape: f32[6,96,32], index: 0, kind: input, shape index: {}]
  %s1 = inlined_call_operand.vmem [shape: bf16[3,32,96], index: 1, kind: input, shape index: {}]
  %s2 = inlined_call_operand.vmem [shape: bf16[5,96,168], index: 2, kind: input, shape index: {}]
  %s3 = inlined_call_operand.vmem [shape: f32[1,168], index: 3, kind: input, shape index: {}]
  %s4 = inlined_call_operand.vmem [shape: bf16[162,84], index: 4, kind: input, shape index: {}]
  %s5 = inlined_call_operand.vmem [shape: bf16[5,84,160], index: 5, kind: input, shape index: {}]
  %s6 = inlined_call_operand.vmem [shape: f32[1,160], index: 6, kind: input, shape index: {}]
  %s7 = inlined_call_operand.vmem [shape: bf16[5,144,120], index: 7, kind: input, shape index: {}]
  %s8 = inlined_call_operand.vmem [shape: f32[1,120], index: 8, kind: input, shape index: {}]
  %s9 = inlined_call_operand.vmem [shape: bf16[120,84], index: 9, kind: input, shape index: {}]
  %s10 = inlined_call_operand.vmem [shape: f32[1,84], index: 10, kind: input, shape index: {}]
  %s11 = inlined_call_operand.vmem [shape: bf16[84,128], index: 11, kind: input, shape index: {}]
  %s12 = inlined_call_operand.vmem [shape: f32[1,128], index: 12, kind: input, shape index: {}]
  %s13 = inlined_call_operand.vmem [shape: f32[3,2,128], index: 13, kind: output, shape index: {}]
  %s14 = sld [smem:[#allocation0]]
  $region85: #{net_forward.1} parent=0
    _
  %s16 = ssub.s32 1, %s14
  %s17 = scalar_select 0, %s16, %s14
  loop: start=0, step=1, limit=5
  $region2: #{net_forward.1} parent=0 // loop_pre_header
    _
  $region3: #{net_forward.1} parent=0 // loop_header
    %s19 = sphi 0, %s23
    %p20 = scmp.ge.s32.totalorder %s19, 5
    %s29 = sphi 0, %s31
    %s32 = sphi 0, %s29
    %s33 = sphi 0, %s32
    %s49 = sphi 0, %s33
    %s53 = sphi 0, %s53
    %s55 = sphi 0, %s53
    %s56 = sphi 0, %s55
    %s70 = sphi 0, %s56
    %s74 = sphi 0, %s74
    %s76 = sphi 0, %s74
    %s77 = sphi 0, %s76
    %s91 = sphi 0, %s77
    %s95 = sphi 0, %s95
    %s97 = sphi 0, %s95
    %s98 = sphi 0, %s97
    %s112 = sphi 0, %s98
    %s116 = sphi 0, %s116
    %s118 = sphi 0, %s116
    %s119 = sphi 0, %s118
    %s133 = sphi 0, %s119
    %s137 = sphi 0, %s137
    %s139 = sphi 0, %s137
    %s140 = sphi 0, %s139
    %s154 = sphi 0, %s140
    %s158 = sphi 0, %s158
    %s160 = sphi 0, %s158
    %s161 = sphi 0, %s160
    %s175 = sphi 0, %s161
    %s179 = sphi 0, %s179
    %s181 = sphi 0, %s179
    %s182 = sphi 0, %s181
    %s196 = sphi 0, %s182
    %s200 = sphi 0, %s200
    %s202 = sphi 0, %s200
    %s203 = sphi 0, %s202
    %s217 = sphi 0, %s203
    %s221 = sphi 0, %s221
    %s223 = sphi 0, %s221
    %s224 = sphi 0, %s223
    %s238 = sphi 0, %s224
    %s242 = sphi 0, %s242
    %s244 = sphi 0, %s242
    %s245 = sphi 0, %s244
    %s259 = sphi 0, %s245
    %s263 = sphi 0, %s263
    %s265 = sphi 0, %s263
    %s266 = sphi 0, %s265
    %s280 = sphi 0, %s266
    %s284 = sphi 0, %s284
    %s286 = sphi 0, %s284
    %s287 = sphi 0, %s286
    %s301 = sphi 0, %s287
    %s307 = sphi 0, %s309
    %s310 = sphi 0, %s307
    %s311 = sphi 0, %s310
    %s327 = sphi 0, %s311
  $region4: #{net_forward.1} parent=0 // loop_header_branch
    %22 = sbr.rel (%p20) target = $region8
  $region5: #{net_forward.1} parent=0 // loop_body
    %s24 = ssub.s32 %s19, 1
    %s25 = ssub.s32 %s19, 2
    %s26 = sadd.s32 %s19, 1
    %s27 = ssub.s32 %s19, %s26
    %p28 = scmp.eq.s32.totalorder %s27, 0
    %s30 = sadd.s32 %s29, 1
    %s31 = scalar_select %p28, %s29, %s30
    %p34 = pneg %p28
    %p35 = scmp.eq.s32.totalorder %s19, 2
    %p36 = por %p34, %p35
    %p37 = scmp.ne.s32.totalorder %s29, %s32
    %p38 = scmp.eq.s32.totalorder %s19, 0
    %p39 = por %p37, %p38
    %p40 = scmp.ne.s32.totalorder %s29, %s32
    %p41 = scmp.eq.s32.totalorder %s24, 2
    %p42 = por %p40, %p41
    %p43 = scmp.ne.s32.totalorder %s32, %s33
    %p44 = scmp.eq.s32.totalorder %s24, 0
    %p45 = por %p43, %p44
    %p46 = scmp.ne.s32.totalorder %s32, %s33
    %p47 = scmp.eq.s32.totalorder %s25, 2
    %p48 = por %p46, %p47
    %p50 = scmp.ne.s32.totalorder %s33, %s49
    %p51 = scmp.eq.s32.totalorder %s25, 0
    %p52 = por %p50, %p51
    %s54 = sadd.s32 %s53, 1
    %p57 = scmp.eq.s32.totalorder %s19, 2
    %p58 = scmp.ne.s32.totalorder %s53, %s55
    %p59 = scmp.eq.s32.totalorder %s19, 0
    %p60 = por %p58, %p59
    %p61 = scmp.ne.s32.totalorder %s53, %s55
    %p62 = scmp.eq.s32.totalorder %s24, 2
    %p63 = por %p61, %p62
    %p64 = scmp.ne.s32.totalorder %s55, %s56
    %p65 = scmp.eq.s32.totalorder %s24, 0
    %p66 = por %p64, %p65
    %p67 = scmp.ne.s32.totalorder %s55, %s56
    %p68 = scmp.eq.s32.totalorder %s25, 2
    %p69 = por %p67, %p68
    %p71 = scmp.ne.s32.totalorder %s56, %s70
    %p72 = scmp.eq.s32.totalorder %s25, 0
    %p73 = por %p71, %p72
    %s75 = sadd.s32 %s74, 1
    %p78 = scmp.eq.s32.totalorder %s19, 2
    %p79 = scmp.ne.s32.totalorder %s74, %s76
    %p80 = scmp.eq.s32.totalorder %s19, 0
    %p81 = por %p79, %p80
    %p82 = scmp.ne.s32.totalorder %s74, %s76
    %p83 = scmp.eq.s32.totalorder %s24, 2
    %p84 = por %p82, %p83
    %p85 = scmp.ne.s32.totalorder %s76, %s77
    %p86 = scmp.eq.s32.totalorder %s24, 0
    %p87 = por %p85, %p86
    %p88 = scmp.ne.s32.totalorder %s76, %s77
    %p89 = scmp.eq.s32.totalorder %s25, 2
    %p90 = por %p88, %p89
    %p92 = scmp.ne.s32.totalorder %s77, %s91
    %p93 = scmp.eq.s32.totalorder %s25, 0
    %p94 = por %p92, %p93
    %s96 = sadd.s32 %s95, 1
    %p99 = scmp.eq.s32.totalorder %s19, 2
    %p100 = scmp.ne.s32.totalorder %s95, %s97
    %p101 = scmp.eq.s32.totalorder %s19, 0
    %p102 = por %p100, %p101
    %p103 = scmp.ne.s32.totalorder %s95, %s97
    %p104 = scmp.eq.s32.totalorder %s24, 2
    %p105 = por %p103, %p104
    %p106 = scmp.ne.s32.totalorder %s97, %s98
    %p107 = scmp.eq.s32.totalorder %s24, 0
    %p108 = por %p106, %p107
    %p109 = scmp.ne.s32.totalorder %s97, %s98
    %p110 = scmp.eq.s32.totalorder %s25, 2
    %p111 = por %p109, %p110
    %p113 = scmp.ne.s32.totalorder %s98, %s112
    %p114 = scmp.eq.s32.totalorder %s25, 0
    %p115 = por %p113, %p114
    %s117 = sadd.s32 %s116, 1
    %p120 = scmp.eq.s32.totalorder %s19, 2
    %p121 = scmp.ne.s32.totalorder %s116, %s118
    %p122 = scmp.eq.s32.totalorder %s19, 0
    %p123 = por %p121, %p122
    %p124 = scmp.ne.s32.totalorder %s116, %s118
    %p125 = scmp.eq.s32.totalorder %s24, 2
    %p126 = por %p124, %p125
    %p127 = scmp.ne.s32.totalorder %s118, %s119
    %p128 = scmp.eq.s32.totalorder %s24, 0
    %p129 = por %p127, %p128
    %p130 = scmp.ne.s32.totalorder %s118, %s119
    %p131 = scmp.eq.s32.totalorder %s25, 2
    %p132 = por %p130, %p131
    %p134 = scmp.ne.s32.totalorder %s119, %s133
    %p135 = scmp.eq.s32.totalorder %s25, 0
    %p136 = por %p134, %p135
    %s138 = sadd.s32 %s137, 1
    %p141 = scmp.eq.s32.totalorder %s19, 2
    %p142 = scmp.ne.s32.totalorder %s137, %s139
    %p143 = scmp.eq.s32.totalorder %s19, 0
    %p144 = por %p142, %p143
    %p145 = scmp.ne.s32.totalorder %s137, %s139
    %p146 = scmp.eq.s32.totalorder %s24, 2
    %p147 = por %p145, %p146
    %p148 = scmp.ne.s32.totalorder %s139, %s140
    %p149 = scmp.eq.s32.totalorder %s24, 0
    %p150 = por %p148, %p149
    %p151 = scmp.ne.s32.totalorder %s139, %s140
    %p152 = scmp.eq.s32.totalorder %s25, 2
    %p153 = por %p151, %p152
    %p155 = scmp.ne.s32.totalorder %s140, %s154
    %p156 = scmp.eq.s32.totalorder %s25, 0
    %p157 = por %p155, %p156
    %s159 = sadd.s32 %s158, 1
    %p162 = scmp.eq.s32.totalorder %s19, 2
    %p163 = scmp.ne.s32.totalorder %s158, %s160
    %p164 = scmp.eq.s32.totalorder %s19, 0
    %p165 = por %p163, %p164
    %p166 = scmp.ne.s32.totalorder %s158, %s160
    %p167 = scmp.eq.s32.totalorder %s24, 2
    %p168 = por %p166, %p167
    %p169 = scmp.ne.s32.totalorder %s160, %s161
    %p170 = scmp.eq.s32.totalorder %s24, 0
    %p171 = por %p169, %p170
    %p172 = scmp.ne.s32.totalorder %s160, %s161
    %p173 = scmp.eq.s32.totalorder %s25, 2
    %p174 = por %p172, %p173
    %p176 = scmp.ne.s32.totalorder %s161, %s175
    %p177 = scmp.eq.s32.totalorder %s25, 0
    %p178 = por %p176, %p177
    %s180 = sadd.s32 %s179, 1
    %p183 = scmp.eq.s32.totalorder %s19, 2
    %p184 = scmp.ne.s32.totalorder %s179, %s181
    %p185 = scmp.eq.s32.totalorder %s19, 0
    %p186 = por %p184, %p185
    %p187 = scmp.ne.s32.totalorder %s179, %s181
    %p188 = scmp.eq.s32.totalorder %s24, 2
    %p189 = por %p187, %p188
    %p190 = scmp.ne.s32.totalorder %s181, %s182
    %p191 = scmp.eq.s32.totalorder %s24, 0
    %p192 = por %p190, %p191
    %p193 = scmp.ne.s32.totalorder %s181, %s182
    %p194 = scmp.eq.s32.totalorder %s25, 2
    %p195 = por %p193, %p194
    %p197 = scmp.ne.s32.totalorder %s182, %s196
    %p198 = scmp.eq.s32.totalorder %s25, 0
    %p199 = por %p197, %p198
    %s201 = sadd.s32 %s200, 1
    %p204 = scmp.eq.s32.totalorder %s19, 2
    %p205 = scmp.ne.s32.totalorder %s200, %s202
    %p206 = scmp.eq.s32.totalorder %s19, 0
    %p207 = por %p205, %p206
    %p208 = scmp.ne.s32.totalorder %s200, %s202
    %p209 = scmp.eq.s32.totalorder %s24, 2
    %p210 = por %p208, %p209
    %p211 = scmp.ne.s32.totalorder %s202, %s203
    %p212 = scmp.eq.s32.totalorder %s24, 0
    %p213 = por %p211, %p212
    %p214 = scmp.ne.s32.totalorder %s202, %s203
    %p215 = scmp.eq.s32.totalorder %s25, 2
    %p216 = por %p214, %p215
    %p218 = scmp.ne.s32.totalorder %s203, %s217
    %p219 = scmp.eq.s32.totalorder %s25, 0
    %p220 = por %p218, %p219
    %s222 = sadd.s32 %s221, 1
    %p225 = scmp.eq.s32.totalorder %s19, 2
    %p226 = scmp.ne.s32.totalorder %s221, %s223
    %p227 = scmp.eq.s32.totalorder %s19, 0
    %p228 = por %p226, %p227
    %p229 = scmp.ne.s32.totalorder %s221, %s223
    %p230 = scmp.eq.s32.totalorder %s24, 2
    %p231 = por %p229, %p230
    %p232 = scmp.ne.s32.totalorder %s223, %s224
    %p233 = scmp.eq.s32.totalorder %s24, 0
    %p234 = por %p232, %p233
    %p235 = scmp.ne.s32.totalorder %s223, %s224
    %p236 = scmp.eq.s32.totalorder %s25, 2
    %p237 = por %p235, %p236
    %p239 = scmp.ne.s32.totalorder %s224, %s238
    %p240 = scmp.eq.s32.totalorder %s25, 0
    %p241 = por %p239, %p240
    %s243 = sadd.s32 %s242, 1
    %p246 = scmp.eq.s32.totalorder %s19, 2
    %p247 = scmp.ne.s32.totalorder %s242, %s244
    %p248 = scmp.eq.s32.totalorder %s19, 0
    %p249 = por %p247, %p248
    %p250 = scmp.ne.s32.totalorder %s242, %s244
    %p251 = scmp.eq.s32.totalorder %s24, 2
    %p252 = por %p250, %p251
    %p253 = scmp.ne.s32.totalorder %s244, %s245
    %p254 = scmp.eq.s32.totalorder %s24, 0
    %p255 = por %p253, %p254
    %p256 = scmp.ne.s32.totalorder %s244, %s245
    %p257 = scmp.eq.s32.totalorder %s25, 2
    %p258 = por %p256, %p257
    %p260 = scmp.ne.s32.totalorder %s245, %s259
    %p261 = scmp.eq.s32.totalorder %s25, 0
    %p262 = por %p260, %p261
    %s264 = sadd.s32 %s263, 1
    %p267 = scmp.eq.s32.totalorder %s19, 2
    %p268 = scmp.ne.s32.totalorder %s263, %s265
    %p269 = scmp.eq.s32.totalorder %s19, 0
    %p270 = por %p268, %p269
    %p271 = scmp.ne.s32.totalorder %s263, %s265
    %p272 = scmp.eq.s32.totalorder %s24, 2
    %p273 = por %p271, %p272
    %p274 = scmp.ne.s32.totalorder %s265, %s266
    %p275 = scmp.eq.s32.totalorder %s24, 0
    %p276 = por %p274, %p275
    %p277 = scmp.ne.s32.totalorder %s265, %s266
    %p278 = scmp.eq.s32.totalorder %s25, 2
    %p279 = por %p277, %p278
    %p281 = scmp.ne.s32.totalorder %s266, %s280
    %p282 = scmp.eq.s32.totalorder %s25, 0
    %p283 = por %p281, %p282
    %s285 = sadd.s32 %s284, 1
    %p288 = scmp.eq.s32.totalorder %s19, 2
    %p289 = scmp.ne.s32.totalorder %s284, %s286
    %p290 = scmp.eq.s32.totalorder %s19, 0
    %p291 = por %p289, %p290
    %p292 = scmp.ne.s32.totalorder %s284, %s286
    %p293 = scmp.eq.s32.totalorder %s24, 2
    %p294 = por %p292, %p293
    %p295 = scmp.ne.s32.totalorder %s286, %s287
    %p296 = scmp.eq.s32.totalorder %s24, 0
    %p297 = por %p295, %p296
    %p298 = scmp.ne.s32.totalorder %s286, %s287
    %p299 = scmp.eq.s32.totalorder %s25, 2
    %p300 = por %p298, %p299
    %p302 = scmp.ne.s32.totalorder %s287, %s301
    %p303 = scmp.eq.s32.totalorder %s25, 0
    %p304 = por %p302, %p303
    %s305 = ssub.s32 %s19, %s26
    %p306 = scmp.eq.s32.totalorder %s305, 0
    %s308 = sadd.s32 %s307, 1
    %s309 = scalar_select %p306, %s307, %s308
    %p312 = pneg %p306
    %p313 = scmp.eq.s32.totalorder %s19, 2
    %p314 = por %p312, %p313
    %p315 = scmp.ne.s32.totalorder %s307, %s310
    %p316 = scmp.eq.s32.totalorder %s19, 0
    %p317 = por %p315, %p316
    %p318 = scmp.ne.s32.totalorder %s307, %s310
    %p319 = scmp.eq.s32.totalorder %s24, 2
    %p320 = por %p318, %p319
    %p321 = scmp.ne.s32.totalorder %s310, %s311
    %p322 = scmp.eq.s32.totalorder %s24, 0
    %p323 = por %p321, %p322
    %p324 = scmp.ne.s32.totalorder %s310, %s311
    %p325 = scmp.eq.s32.totalorder %s25, 2
    %p326 = por %p324, %p325
    %p328 = scmp.ne.s32.totalorder %s311, %s327
    %p329 = scmp.eq.s32.totalorder %s25, 0
    %p330 = por %p328, %p329
    %p331 = scmp.le.s32.totalorder 1, %s19
    %p332 = scmp.lt.s32.totalorder %s19, 4
    %p333 = pnand %p331, %p332
    %p334 = pneg %p333
    // Predicated region
    $region9: #{net_forward.1} parent=5 // pred_check
      _
    $region10: #{net_forward.1} parent=5 // pred_check_branch
      %336 = sbr.rel (%p333) target = $region12
    $region11: #{net_forward.1} parent=5 // pred_region
      %s337 = ssub.s32 %s19, 1
      // Predicated region
      $region13: #{net_forward.1} parent=11 // pred_check
        %p338 = pneg %p66
      $region14: #{net_forward.1} parent=11 // pred_check_branch
        %340 = sbr.rel (%p338) target = $region16
      $region15: #{net_forward.1} parent=11 // pred_region
        _
      $region16: #{net_forward.1} parent=11 // pred_fallthru
        _
      // Predicated region
      $region17: #{net_forward.1} parent=11 // pred_check
        %p341 = pneg %p87
      $region18: #{net_forward.1} parent=11 // pred_check_branch
        %343 = sbr.rel (%p341) target = $region20
      $region19: #{net_forward.1} parent=11 // pred_region
        _
      $region20: #{net_forward.1} parent=11 // pred_fallthru
        _
      // Predicated region
      $region21: #{net_forward.1} parent=11 // pred_check
        %p344 = pneg %p108
      $region22: #{net_forward.1} parent=11 // pred_check_branch
        %346 = sbr.rel (%p344) target = $region24
      $region23: #{net_forward.1} parent=11 // pred_region
        _
      $region24: #{net_forward.1} parent=11 // pred_fallthru
        _
      // Predicated region
      $region25: #{net_forward.1} parent=11 // pred_check
        %p347 = pneg %p129
      $region26: #{net_forward.1} parent=11 // pred_check_branch
        %349 = sbr.rel (%p347) target = $region28
      $region27: #{net_forward.1} parent=11 // pred_region
        _
      $region28: #{net_forward.1} parent=11 // pred_fallthru
        _
      // Predicated region
      $region29: #{net_forward.1} parent=11 // pred_check
        %p350 = pneg %p150
      $region30: #{net_forward.1} parent=11 // pred_check_branch
        %352 = sbr.rel (%p350) target = $region32
      $region31: #{net_forward.1} parent=11 // pred_region
        _
      $region32: #{net_forward.1} parent=11 // pred_fallthru
        _
      // Predicated region
      $region33: #{net_forward.1} parent=11 // pred_check
        %p353 = pneg %p171
      $region34: #{net_forward.1} parent=11 // pred_check_branch
        %355 = sbr.rel (%p353) target = $region36
      $region35: #{net_forward.1} parent=11 // pred_region
        _
      $region36: #{net_forward.1} parent=11 // pred_fallthru
        _
      // Predicated region
      $region37: #{net_forward.1} parent=11 // pred_check
        %p356 = pneg %p192
      $region38: #{net_forward.1} parent=11 // pred_check_branch
        %358 = sbr.rel (%p356) target = $region40
      $region39: #{net_forward.1} parent=11 // pred_region
        _
      $region40: #{net_forward.1} parent=11 // pred_fallthru
        _
      // Predicated region
      $region41: #{net_forward.1} parent=11 // pred_check
        %p359 = pneg %p213
      $region42: #{net_forward.1} parent=11 // pred_check_branch
        %361 = sbr.rel (%p359) target = $region44
      $region43: #{net_forward.1} parent=11 // pred_region
        _
      $region44: #{net_forward.1} parent=11 // pred_fallthru
        _
      // Predicated region
      $region45: #{net_forward.1} parent=11 // pred_check
        %p362 = pneg %p234
      $region46: #{net_forward.1} parent=11 // pred_check_branch
        %364 = sbr.rel (%p362) target = $region48
      $region47: #{net_forward.1} parent=11 // pred_region
        _
      $region48: #{net_forward.1} parent=11 // pred_fallthru
        _
      // Predicated region
      $region49: #{net_forward.1} parent=11 // pred_check
        %p365 = pneg %p255
      $region50: #{net_forward.1} parent=11 // pred_check_branch
        %367 = sbr.rel (%p365) target = $region52
      $region51: #{net_forward.1} parent=11 // pred_region
        _
      $region52: #{net_forward.1} parent=11 // pred_fallthru
        _
      // Predicated region
      $region53: #{net_forward.1} parent=11 // pred_check
        %p368 = pneg %p276
      $region54: #{net_forward.1} parent=11 // pred_check_branch
        %370 = sbr.rel (%p368) target = $region56
      $region55: #{net_forward.1} parent=11 // pred_region
        _
      $region56: #{net_forward.1} parent=11 // pred_fallthru
        _
      // Predicated region
      $region57: #{net_forward.1} parent=11 // pred_check
        %p371 = pneg %p297
      $region58: #{net_forward.1} parent=11 // pred_check_branch
        %373 = sbr.rel (%p371) target = $region60
      $region59: #{net_forward.1} parent=11 // pred_region
        _
      $region60: #{net_forward.1} parent=11 // pred_fallthru
        _
    $region12: #{net_forward.1} parent=5 // pred_fallthru
      _
    %p374 = scmp.lt.s32.totalorder %s19, 3
    // Predicated region
    $region61: #{net_forward.1} parent=5 // pred_check
      %p375 = pneg %p374
    $region62: #{net_forward.1} parent=5 // pred_check_branch
      %377 = sbr.rel (%p375) target = $region64
    $region63: #{net_forward.1} parent=5 // pred_region
      // Predicated region
      $region65: #{net_forward.1} parent=63 // pred_check
        %p378 = pneg %p39
      $region66: #{net_forward.1} parent=63 // pred_check_branch
        %380 = sbr.rel (%p378) target = $region68
      $region67: #{net_forward.1} parent=63 // pred_region
        %s381 = smul.u32 2, %s19
        %p382 = scmp.lt.s32.totalorder %s381, 5
        %s383 = scalar_select %p382, %s381, 5
        %s384 = smul.addr %s383, 12
        %s385 = smul.addr %s384, 8
        %s386 = scalar_lea.vmem %s0, %s385
        %s387 = smul.u32 2, %s19
      $region68: #{net_forward.1} parent=63 // pred_fallthru
        _
    $region64: #{net_forward.1} parent=5 // pred_fallthru
      _
    %p388 = scmp.le.s32.totalorder 1, %s19
    %p389 = scmp.lt.s32.totalorder %s19, 4
    %p390 = pnand %p388, %p389
    %p391 = pneg %p390
    // Predicated region
    $region69: #{net_forward.1} parent=5 // pred_check
      _
    $region70: #{net_forward.1} parent=5 // pred_check_branch
      %393 = sbr.rel (%p390) target = $region72
    $region71: #{net_forward.1} parent=5 // pred_region
      %s394 = ssub.s32 %s19, 1
      %s395 = smul.u32 2, %s24
      %p396 = scmp.lt.s32.totalorder %s395, 5
      %s397 = scalar_select %p396, %s395, 5
      %s398 = smul.addr %s397, 12
      %s399 = smul.addr %s398, 8
      %s400 = scalar_lea.vmem %s0, %s399
      %p401 = pneg %p45
      %p402 = pneg %p42
      %p403 = pneg %p66
      %p404 = pneg %p63
      %p405 = pneg %p87
      %p406 = pneg %p84
      %p407 = pneg %p108
      %p408 = pneg %p105
      %p409 = pneg %p129
      %p410 = pneg %p126
      %p411 = pneg %p150
      %p412 = pneg %p147
      %p413 = pneg %p171
      %p414 = pneg %p168
      %p415 = pneg %p192
      %p416 = pneg %p189
      %p417 = pneg %p213
      %p418 = pneg %p210
      %p419 = pneg %p234
      %p420 = pneg %p231
      %p421 = pneg %p255
      %p422 = pneg %p252
      %p423 = pneg %p276
      %p424 = pneg %p273
      %p425 = pneg %p297
      %p426 = pneg %p294
      %p427 = pneg %p323
      %p428 = pneg %p320
      %p429 = scmp.lt.s32.totalorder %s24, 2
      %s430 = scalar_select %p429, %s24, 2
      %s431 = smul.addr %s430, 2
      %s432 = scalar_lea.vmem %s13, %s431
      %s433 = smul.u32 2, %s24
      %p434 = scmp.lt.s32.totalorder %s433, 5
      %s435 = scalar_select %p434, %s433, 5
      %s436 = smul.addr %s435, 12
      %s437 = smul.addr %s436, 8
      %s438 = scalar_lea.vmem %s0, %s437
      %s439 = smul.u32 2, %s24
      %p440 = scmp.lt.s32.totalorder %s24, 2
      %s441 = scalar_select %p440, %s24, 2
      %s442 = smul.addr %s441, 2
      %s443 = scalar_lea.vmem %s13, %s442
      %v445 = vld [vmem:[%s438] sm:$0xff]
      %v446 = vld [vmem:[%s438 + $0x8] sm:$0xff]
      %v447 = vld [vmem:[%s438 + $0x10] sm:$0xff]
      %v448 = vld [vmem:[%s438 + $0x18] sm:$0xff]
      %v449 = vld [vmem:[%s438 + $0x60] sm:$0xff]
      %v450 = vld [vmem:[%s438 + $0x68] sm:$0xff]
      %v451 = vld [vmem:[%s438 + $0x70] sm:$0xff]
      %v452 = vld [vmem:[%s438 + $0x78] sm:$0xff]
      %v453 = vpack.c.bf16 %v446, %v445
      %v454 = vpack.c.bf16 %v448, %v447
      %v455 = vpack.c.bf16 %v450, %v449
      %v456 = vpack.c.bf16 %v452, %v451
      %v457 = vld [vmem:[%s1] sm:$0xf]
      %v458 = vld [vmem:[%s1 + $0x4] sm:$0xf]
      %v459 = vld [vmem:[%s1 + $0x8] sm:$0xf]
      %v460 = vld [vmem:[%s1 + $0xc] sm:$0xf]
      %v461 = vld [vmem:[%s438 + $0x20] sm:$0xff]
      %v462 = vld [vmem:[%s438 + $0x28] sm:$0xff]
      %v463 = vld [vmem:[%s438 + $0x30] sm:$0xff]
      %v464 = vld [vmem:[%s438 + $0x38] sm:$0xff]
      %v465 = vld [vmem:[%s438 + $0x80] sm:$0xff]
      %v466 = vld [vmem:[%s438 + $0x88] sm:$0xff]
      %v467 = vld [vmem:[%s438 + $0x90] sm:$0xff]
      %v468 = vld [vmem:[%s438 + $0x98] sm:$0xff]
      %v469 = vpack.c.bf16 %v462, %v461
      %v470 = vpack.c.bf16 %v464, %v463
      %v471 = vpack.c.bf16 %v466, %v465
      %v472 = vpack.c.bf16 %v468, %v467
      %s473 = scalar_lea.vmem %s1, 16
      %v474 = vld [vmem:[%s473] sm:$0xf]
      %v475 = vld [vmem:[%s473 + $0x4] sm:$0xf]
      %v476 = vld [vmem:[%s473 + $0x8] sm:$0xf]
      %v477 = vld [vmem:[%s473 + $0xc] sm:$0xf]
      %v482 = vunpack.c.l.b16 %v474
      %v483 = vunpack.c.l.b16 %v475
      %v484 = vunpack.c.l.b16 %v476
      %v485 = vunpack.c.l.b16 %v477
      %v486 = vpack.c.b16 %v483, %v482
      %v487 = vpack.c.b16 %v485, %v484
      %vm490 = vcmask 261120
      %v492 = vsel %vm490, %v469, 0
      %v495 = vsel %vm490, %v470, 0
      %v498 = vsel %vm490, %v471, 0
      %v501 = vsel %vm490, %v472, 0
      %503 = vmatprep.subr.bf16.mxu0 0
      %504 = vmatpush1.bf16.msra.mxu0 0
      %505 = vmatprep.subr.bf16.mxu0 0
      %506 = vmatpush1.bf16.msra.mxu0 0
      %507 = vmatprep.subr.bf16.mxu0 0
      %508 = vmatpush1.bf16.msra.mxu0 0
      %509 = vmatprep.subr.bf16.mxu0 0
      %510 = vmatpush1.bf16.msra.mxu0 0
      %511 = vmatprep.subr.bf16.mxu0 0
      %512 = vmatpush1.bf16.msra.mxu0 0
      %513 = vmatprep.subr.bf16.mxu0 0
      %514 = vmatpush1.bf16.msra.mxu0 0
      %515 = vmatprep.subr.bf16.mxu0 0
      %516 = vmatpush1.bf16.msra.mxu0 %v487
      %517 = vmatprep.subr.bf16.mxu0 0
      %518 = vmatpush1.bf16.msra.mxu0 %v486
      %519 = vmatprep.subr.bf16.mxu0 0
      %520 = vmatpush2.bf16.msra.mxu0 0
      %521 = vmatprep.subr.bf16.mxu0 0
      %522 = vmatpush2.bf16.msra.mxu0 0
      %523 = vmatprep.subr.bf16.mxu0 0
      %524 = vmatpush2.bf16.msra.mxu0 0
      %525 = vmatprep.subr.bf16.mxu0 0
      %526 = vmatpush2.bf16.msra.mxu0 0
      %527 = vmatprep.subr.bf16.mxu0 0
      %528 = vmatpush2.bf16.msra.mxu0 0
      %529 = vmatprep.subr.bf16.mxu0 0
      %530 = vmatpush2.bf16.msra.mxu0 0
      %531 = vmatprep.subr.bf16.mxu0 0
      %532 = vmatpush2.bf16.msra.mxu0 0
      %533 = vmatprep.subr.bf16.mxu0 0
      %534 = vmatpush2.bf16.msra.mxu0 0
      %535 = vmatprep.mubr.bf16.mxu0 0
      %536 = vmatmul.mubr.bf16.gmra.mxu0 %v492
      %v537 = vpop.f32.mrf.mxu0
      %v538 = vadd.f32 0.0, %v537
      %v539 = vpop.f32.mrf.mxu0
      %v540 = vpop.f32.mrf.mxu0
      %v541 = vadd.f32 0.0, %v540
      %v542 = vpop.f32.mrf.mxu0
      %543 = vmatprep.mubr.bf16.mxu0 0
      %544 = vmatmul.mubr.bf16.gmra.mxu0 %v495
      %v545 = vpop.f32.mrf.mxu0
      %v546 = vadd.f32 0.0, %v545
      %v547 = vpop.f32.mrf.mxu0
      %v548 = vpop.f32.mrf.mxu0
      %v549 = vadd.f32 0.0, %v548
      %v550 = vpop.f32.mrf.mxu0
      %551 = vmatprep.mubr.bf16.mxu0 0
      %552 = vmatmul.mubr.bf16.gmra.mxu0 %v498
      %v553 = vpop.f32.mrf.mxu0
      %v554 = vadd.f32 0.0, %v553
      %v555 = vpop.f32.mrf.mxu0
      %v556 = vpop.f32.mrf.mxu0
      %v557 = vadd.f32 0.0, %v556
      %v558 = vpop.f32.mrf.mxu0
      %559 = vmatprep.mubr.bf16.mxu0 0
      %560 = vmatmul.mubr.bf16.gmra.mxu0 %v501
      %v561 = vpop.f32.mrf.mxu0
      %v562 = vadd.f32 0.0, %v561
      %v563 = vpop.f32.mrf.mxu0
      %v564 = vpop.f32.mrf.mxu0
      %v565 = vadd.f32 0.0, %v564
      %v566 = vpop.f32.mrf.mxu0
      %567 = vdwg.mxu0
      %v572 = vunpack.c.l.b16 %v457
      %v573 = vunpack.c.l.b16 %v458
      %v574 = vunpack.c.l.b16 %v459
      %v575 = vunpack.c.l.b16 %v460
      %v576 = vpack.c.b16 %v573, %v572
      %v577 = vpack.c.b16 %v575, %v574
      %v581 = vsel %vm490, %v453, 0
      %v584 = vsel %vm490, %v454, 0
      %v587 = vsel %vm490, %v455, 0
      %v590 = vsel %vm490, %v456, 0
      %592 = vmatprep.subr.bf16.mxu0 0
      %593 = vmatpush1.bf16.msra.mxu0 0
      %594 = vmatprep.subr.bf16.mxu0 0
      %595 = vmatpush1.bf16.msra.mxu0 0
      %596 = vmatprep.subr.bf16.mxu0 0
      %597 = vmatpush1.bf16.msra.mxu0 0
      %598 = vmatprep.subr.bf16.mxu0 0
      %599 = vmatpush1.bf16.msra.mxu0 0
      %600 = vmatprep.subr.bf16.mxu0 0
      %601 = vmatpush1.bf16.msra.mxu0 0
      %602 = vmatprep.subr.bf16.mxu0 0
      %603 = vmatpush1.bf16.msra.mxu0 0
      %604 = vmatprep.subr.bf16.mxu0 0
      %605 = vmatpush1.bf16.msra.mxu0 %v577
      %606 = vmatprep.subr.bf16.mxu0 0
      %607 = vmatpush1.bf16.msra.mxu0 %v576
      %608 = vmatprep.subr.bf16.mxu0 0
      %609 = vmatpush2.bf16.msra.mxu0 0
      %610 = vmatprep.subr.bf16.mxu0 0
      %611 = vmatpush2.bf16.msra.mxu0 0
      %612 = vmatprep.subr.bf16.mxu0 0
      %613 = vmatpush2.bf16.msra.mxu0 0
      %614 = vmatprep.subr.bf16.mxu0 0
      %615 = vmatpush2.bf16.msra.mxu0 0
      %616 = vmatprep.subr.bf16.mxu0 0
      %617 = vmatpush2.bf16.msra.mxu0 0
      %618 = vmatprep.subr.bf16.mxu0 0
      %619 = vmatpush2.bf16.msra.mxu0 0
      %620 = vmatprep.subr.bf16.mxu0 0
      %621 = vmatpush2.bf16.msra.mxu0 0
      %622 = vmatprep.subr.bf16.mxu0 0
      %623 = vmatpush2.bf16.msra.mxu0 0
      %624 = vmatprep.mubr.bf16.mxu0 0
      %625 = vmatmul.mubr.bf16.gmra.mxu0 %v581
      %v626 = vpop.f32.mrf.mxu0
      %v627 = vadd.f32 %v538, %v626
      %v628 = vpop.f32.mrf.mxu0
      %v629 = vpop.f32.mrf.mxu0
      %v630 = vadd.f32 %v541, %v629
      %v631 = vpop.f32.mrf.mxu0
      %632 = vmatprep.mubr.bf16.mxu0 0
      %633 = vmatmul.mubr.bf16.gmra.mxu0 %v584
      %v634 = vpop.f32.mrf.mxu0
      %v635 = vadd.f32 %v546, %v634
      %v636 = vpop.f32.mrf.mxu0
      %v637 = vpop.f32.mrf.mxu0
      %v638 = vadd.f32 %v549, %v637
      %v639 = vpop.f32.mrf.mxu0
      %640 = vmatprep.mubr.bf16.mxu0 0
      %641 = vmatmul.mubr.bf16.gmra.mxu0 %v587
      %v642 = vpop.f32.mrf.mxu0
      %v643 = vadd.f32 %v554, %v642
      %v644 = vpop.f32.mrf.mxu0
      %v645 = vpop.f32.mrf.mxu0
      %v646 = vadd.f32 %v557, %v645
      %v647 = vpop.f32.mrf.mxu0
      %648 = vmatprep.mubr.bf16.mxu0 0
      %649 = vmatmul.mubr.bf16.gmra.mxu0 %v590
      %v650 = vpop.f32.mrf.mxu0
      %v651 = vadd.f32 %v562, %v650
      %v652 = vpop.f32.mrf.mxu0
      %v653 = vpop.f32.mrf.mxu0
      %v654 = vadd.f32 %v565, %v653
      %v655 = vpop.f32.mrf.mxu0
      %656 = vdwg.mxu0
      %v657 = vld [vmem:[%s438 + $0x40] sm:$0xff]
      %v658 = vld [vmem:[%s438 + $0x48] sm:$0xff]
      %v659 = vld [vmem:[%s438 + $0x50] sm:$0xff]
      %v660 = vld [vmem:[%s438 + $0x58] sm:$0xff]
      %v661 = vld [vmem:[%s438 + $0xa0] sm:$0xff]
      %v662 = vld [vmem:[%s438 + $0xa8] sm:$0xff]
      %v663 = vld [vmem:[%s438 + $0xb0] sm:$0xff]
      %v664 = vld [vmem:[%s438 + $0xb8] sm:$0xff]
      %v665 = vpack.c.bf16 %v658, %v657
      %v666 = vpack.c.bf16 %v660, %v659
      %v667 = vpack.c.bf16 %v662, %v661
      %v668 = vpack.c.bf16 %v664, %v663
      %s669 = scalar_lea.vmem %s1, 32
      %v670 = vld [vmem:[%s669] sm:$0xf]
      %v671 = vld [vmem:[%s669 + $0x4] sm:$0xf]
      %v672 = vld [vmem:[%s669 + $0x8] sm:$0xf]
      %v673 = vld [vmem:[%s669 + $0xc] sm:$0xf]
      %v678 = vunpack.c.l.b16 %v670
      %v679 = vunpack.c.l.b16 %v671
      %v680 = vunpack.c.l.b16 %v672
      %v681 = vunpack.c.l.b16 %v673
      %v682 = vpack.c.b16 %v679, %v678
      %v683 = vpack.c.b16 %v681, %v680
      %v687 = vsel %vm490, %v665, 0
      %v690 = vsel %vm490, %v666, 0
      %v693 = vsel %vm490, %v667, 0
      %v696 = vsel %vm490, %v668, 0
      %698 = vmatprep.subr.bf16.mxu0 0
      %699 = vmatpush1.bf16.msra.mxu0 0
      %700 = vmatprep.subr.bf16.mxu0 0
      %701 = vmatpush1.bf16.msra.mxu0 0
      %702 = vmatprep.subr.bf16.mxu0 0
      %703 = vmatpush1.bf16.msra.mxu0 0
      %704 = vmatprep.subr.bf16.mxu0 0
      %705 = vmatpush1.bf16.msra.mxu0 0
      %706 = vmatprep.subr.bf16.mxu0 0
      %707 = vmatpush1.bf16.msra.mxu0 0
      %708 = vmatprep.subr.bf16.mxu0 0
      %709 = vmatpush1.bf16.msra.mxu0 0
      %710 = vmatprep.subr.bf16.mxu0 0
      %711 = vmatpush1.bf16.msra.mxu0 %v683
      %712 = vmatprep.subr.bf16.mxu0 0
      %713 = vmatpush1.bf16.msra.mxu0 %v682
      %714 = vmatprep.subr.bf16.mxu0 0
      %715 = vmatpush2.bf16.msra.mxu0 0
      %716 = vmatprep.subr.bf16.mxu0 0
      %717 = vmatpush2.bf16.msra.mxu0 0
      %718 = vmatprep.subr.bf16.mxu0 0
      %719 = vmatpush2.bf16.msra.mxu0 0
      %720 = vmatprep.subr.bf16.mxu0 0
      %721 = vmatpush2.bf16.msra.mxu0 0
      %722 = vmatprep.subr.bf16.mxu0 0
      %723 = vmatpush2.bf16.msra.mxu0 0
      %724 = vmatprep.subr.bf16.mxu0 0
      %725 = vmatpush2.bf16.msra.mxu0 0
      %726 = vmatprep.subr.bf16.mxu0 0
      %727 = vmatpush2.bf16.msra.mxu0 0
      %728 = vmatprep.subr.bf16.mxu0 0
      %729 = vmatpush2.bf16.msra.mxu0 0
      %730 = vmatprep.mubr.bf16.mxu0 0
      %731 = vmatmul.mubr.bf16.gmra.mxu0 %v687
      %v732 = vpop.f32.mrf.mxu0
      %v733 = vadd.f32 0.0, %v732
      %v734 = vpop.f32.mrf.mxu0
      %v735 = vpop.f32.mrf.mxu0
      %v736 = vadd.f32 0.0, %v735
      %v737 = vpop.f32.mrf.mxu0
      %738 = vmatprep.mubr.bf16.mxu0 0
      %739 = vmatmul.mubr.bf16.gmra.mxu0 %v690
      %v740 = vpop.f32.mrf.mxu0
      %v741 = vadd.f32 0.0, %v740
      %v742 = vpop.f32.mrf.mxu0
      %v743 = vpop.f32.mrf.mxu0
      %v744 = vadd.f32 0.0, %v743
      %v745 = vpop.f32.mrf.mxu0
      %746 = vmatprep.mubr.bf16.mxu0 0
      %747 = vmatmul.mubr.bf16.gmra.mxu0 %v693
      %v748 = vpop.f32.mrf.mxu0
      %v749 = vadd.f32 0.0, %v748
      %v750 = vpop.f32.mrf.mxu0
      %v751 = vpop.f32.mrf.mxu0
      %v752 = vadd.f32 0.0, %v751
      %v753 = vpop.f32.mrf.mxu0
      %754 = vmatprep.mubr.bf16.mxu0 0
      %755 = vmatmul.mubr.bf16.gmra.mxu0 %v696
      %v756 = vpop.f32.mrf.mxu0
      %v757 = vadd.f32 0.0, %v756
      %v758 = vpop.f32.mrf.mxu0
      %v759 = vpop.f32.mrf.mxu0
      %v760 = vadd.f32 0.0, %v759
      %v761 = vpop.f32.mrf.mxu0
      %762 = vdwg.mxu0
      %v763 = vadd.f32 %v627, %v733
      %v764 = vadd.f32 %v630, %v736
      %v765 = vadd.f32 %v635, %v741
      %v766 = vadd.f32 %v638, %v744
      %v767 = vadd.f32 %v643, %v749
      %v768 = vadd.f32 %v646, %v752
      %v769 = vadd.f32 %v651, %v757
      %v770 = vadd.f32 %v654, %v760
      %v771 = vpack.c.bf16 %v764, %v763
      %v772 = vpack.c.bf16 %v766, %v765
      %v773 = vpack.c.bf16 %v768, %v767
      %v774 = vpack.c.bf16 %v770, %v769
      %v775 = vld [vmem:[%s2] sm:$0xff]
      %v776 = vld [vmem:[%s2 + $0x8] sm:$0xff]
      %v777 = vld [vmem:[%s2 + $0x10] sm:$0xff]
      %v778 = vld [vmem:[%s2 + $0x18] sm:$0xff]
      %v779 = vld [vmem:[%s2 + $0x20] sm:$0xff]
      %v780 = vld [vmem:[%s2 + $0x28] sm:$0xff]
      %v781 = vld [vmem:[%s2 + $0x30] sm:$0xff]
      %v782 = vld [vmem:[%s2 + $0x38] sm:$0xff]
      %v783 = vld [vmem:[%s2 + $0x40] sm:$0xff]
      %v784 = vld [vmem:[%s2 + $0x48] sm:$0xff]
      %v785 = vld [vmem:[%s2 + $0x50] sm:$0xff]
      %v786 = vld [vmem:[%s2 + $0x58] sm:$0xff]
      %s787 = scalar_lea.vmem %s2, 96
      %v788 = vld [vmem:[%s787] sm:$0xff]
      %v789 = vld [vmem:[%s787 + $0x8] sm:$0xff]
      %v790 = vld [vmem:[%s787 + $0x10] sm:$0xff]
      %v791 = vld [vmem:[%s787 + $0x18] sm:$0xff]
      %v792 = vld [vmem:[%s787 + $0x20] sm:$0xff]
      %v793 = vld [vmem:[%s787 + $0x28] sm:$0xff]
      %v794 = vld [vmem:[%s787 + $0x30] sm:$0xff]
      %v795 = vld [vmem:[%s787 + $0x38] sm:$0xff]
      %v796 = vld [vmem:[%s787 + $0x40] sm:$0xff]
      %v797 = vld [vmem:[%s787 + $0x48] sm:$0xff]
      %v798 = vld [vmem:[%s787 + $0x50] sm:$0xff]
      %v799 = vld [vmem:[%s787 + $0x58] sm:$0xff]
      %vm800 = vsmask.f32 7424
      %v802 = vshrl.u32 %v771, 16
      %v804 = vshll.u32 %v771, 16
      %v806 = vrot.slane %v804, 1
      %v807 = vor.u32 %v802, %v806
      %v809 = vshll.u32 %v772, 16
      %v811 = vrot.slane %v809, 1
      %v812 = vsel %vm800, %v807, %v811
      %v813 = vshrl.u32 %v772, 16
      %v815 = vor.u32 %v813, %v811
      %v817 = vshll.u32 %v773, 16
      %v819 = vrot.slane %v817, 1
      %v820 = vsel %vm800, %v815, %v819
      %v821 = vshrl.u32 %v773, 16
      %v823 = vor.u32 %v821, %v819
      %v825 = vshll.u32 %v774, 16
      %v827 = vrot.slane %v825, 1
      %v828 = vsel %vm800, %v823, %v827
      %v829 = vshrl.u32 %v774, 16
      %v831 = vor.u32 %v829, %v827
      %v833 = vshll.u32 0, 16
      %v835 = vrot.slane %v833, 1
      %v836 = vsel %vm800, %v831, %v835
      %v849 = vunpack.c.l.b16 %v788
      %v850 = vunpack.c.h.b16 %v788
      %v851 = vunpack.c.l.b16 %v789
      %v852 = vunpack.c.h.b16 %v789
      %v853 = vunpack.c.l.b16 %v790
      %v854 = vunpack.c.h.b16 %v790
      %v855 = vunpack.c.l.b16 %v791
      %v856 = vunpack.c.h.b16 %v791
      %v857 = vunpack.c.l.b16 %v792
      %v858 = vunpack.c.h.b16 %v792
      %v859 = vunpack.c.l.b16 %v793
      %v860 = vunpack.c.h.b16 %v793
      %v861 = vunpack.c.l.b16 %v794
      %v862 = vunpack.c.h.b16 %v794
      %v863 = vunpack.c.l.b16 %v795
      %v864 = vunpack.c.h.b16 %v795
      %v865 = vunpack.c.l.b16 %v796
      %v866 = vunpack.c.h.b16 %v796
      %v867 = vunpack.c.l.b16 %v797
      %v868 = vunpack.c.h.b16 %v797
      %v869 = vunpack.c.l.b16 %v798
      %v870 = vunpack.c.h.b16 %v798
      %v871 = vunpack.c.l.b16 %v799
      %v872 = vunpack.c.h.b16 %v799
      %v873 = vpack.c.b16 %v851, %v849
      %v874 = vpack.c.b16 %v852, %v850
      %v875 = vpack.c.b16 %v855, %v853
      %v876 = vpack.c.b16 %v856, %v854
      %v877 = vpack.c.b16 %v859, %v857
      %v878 = vpack.c.b16 %v860, %v858
      %v879 = vpack.c.b16 %v863, %v861
      %v880 = vpack.c.b16 %v864, %v862
      %v881 = vpack.c.b16 %v867, %v865
      %v882 = vpack.c.b16 %v868, %v866
      %v883 = vpack.c.b16 %v871, %v869
      %v884 = vpack.c.b16 %v872, %v870
      %vm897 = vcmask 785408
      %v899 = vsel %vm897, %v812, 0
      %v902 = vsel %vm897, %v820, 0
      %v905 = vsel %vm897, %v828, 0
      %v908 = vsel %vm897, %v836, 0
      %910 = vmatprep.subr.bf16.mxu0 0
      %911 = vmatpush1.bf16.msra.mxu0 0
      %912 = vmatprep.subr.bf16.mxu0 0
      %913 = vmatpush1.bf16.msra.mxu0 0
      %914 = vmatprep.subr.bf16.mxu0 %v884
      %915 = vmatpush1.bf16.msra.mxu0 %v883
      %916 = vmatprep.subr.bf16.mxu0 %v882
      %917 = vmatpush1.bf16.msra.mxu0 %v881
      %918 = vmatprep.subr.bf16.mxu0 %v880
      %919 = vmatpush1.bf16.msra.mxu0 %v879
      %920 = vmatprep.subr.bf16.mxu0 %v878
      %921 = vmatpush1.bf16.msra.mxu0 %v877
      %922 = vmatprep.subr.bf16.mxu0 %v876
      %923 = vmatpush1.bf16.msra.mxu0 %v875
      %924 = vmatprep.subr.bf16.mxu0 %v874
      %925 = vmatpush1.bf16.msra.mxu0 %v873
      %926 = vmatprep.subr.bf16.mxu0 0
      %927 = vmatpush2.bf16.msra.mxu0 0
      %928 = vmatprep.subr.bf16.mxu0 0
      %929 = vmatpush2.bf16.msra.mxu0 0
      %930 = vmatprep.subr.bf16.mxu0 0
      %931 = vmatpush2.bf16.msra.mxu0 0
      %932 = vmatprep.subr.bf16.mxu0 0
      %933 = vmatpush2.bf16.msra.mxu0 0
      %934 = vmatprep.subr.bf16.mxu0 0
      %935 = vmatpush2.bf16.msra.mxu0 0
      %936 = vmatprep.subr.bf16.mxu0 0
      %937 = vmatpush2.bf16.msra.mxu0 0
      %938 = vmatprep.subr.bf16.mxu0 0
      %939 = vmatpush2.bf16.msra.mxu0 0
      %940 = vmatprep.subr.bf16.mxu0 0
      %941 = vmatpush2.bf16.msra.mxu0 0
      %942 = vmatprep.mubr.bf16.mxu0 0
      %943 = vmatmul.mubr.bf16.gmra.mxu0 %v899
      %v944 = vpop.f32.mrf.mxu0
      %v945 = vadd.f32 0.0, %v944
      %v946 = vpop.f32.mrf.mxu0
      %v947 = vadd.f32 0.0, %v946
      %v948 = vpop.f32.mrf.mxu0
      %v949 = vadd.f32 0.0, %v948
      %v950 = vpop.f32.mrf.mxu0
      %v951 = vadd.f32 0.0, %v950
      %952 = vmatprep.mubr.bf16.mxu0 0
      %953 = vmatmul.mubr.bf16.gmra.mxu0 %v902
      %v954 = vpop.f32.mrf.mxu0
      %v955 = vadd.f32 0.0, %v954
      %v956 = vpop.f32.mrf.mxu0
      %v957 = vadd.f32 0.0, %v956
      %v958 = vpop.f32.mrf.mxu0
      %v959 = vadd.f32 0.0, %v958
      %v960 = vpop.f32.mrf.mxu0
      %v961 = vadd.f32 0.0, %v960
      %962 = vmatprep.mubr.bf16.mxu0 0
      %963 = vmatmul.mubr.bf16.gmra.mxu0 %v905
      %v964 = vpop.f32.mrf.mxu0
      %v965 = vadd.f32 0.0, %v964
      %v966 = vpop.f32.mrf.mxu0
      %v967 = vadd.f32 0.0, %v966
      %v968 = vpop.f32.mrf.mxu0
      %v969 = vadd.f32 0.0, %v968
      %v970 = vpop.f32.mrf.mxu0
      %v971 = vadd.f32 0.0, %v970
      %972 = vmatprep.mubr.bf16.mxu0 0
      %973 = vmatmul.mubr.bf16.gmra.mxu0 %v908
      %v974 = vpop.f32.mrf.mxu0
      %v975 = vadd.f32 0.0, %v974
      %v976 = vpop.f32.mrf.mxu0
      %v977 = vadd.f32 0.0, %v976
      %v978 = vpop.f32.mrf.mxu0
      %v979 = vadd.f32 0.0, %v978
      %v980 = vpop.f32.mrf.mxu0
      %v981 = vadd.f32 0.0, %v980
      %982 = vdwg.mxu0
      %v995 = vunpack.c.l.b16 %v775
      %v996 = vunpack.c.h.b16 %v775
      %v997 = vunpack.c.l.b16 %v776
      %v998 = vunpack.c.h.b16 %v776
      %v999 = vunpack.c.l.b16 %v777
      %v1000 = vunpack.c.h.b16 %v777
      %v1001 = vunpack.c.l.b16 %v778
      %v1002 = vunpack.c.h.b16 %v778
      %v1003 = vunpack.c.l.b16 %v779
      %v1004 = vunpack.c.h.b16 %v779
      %v1005 = vunpack.c.l.b16 %v780
      %v1006 = vunpack.c.h.b16 %v780
      %v1007 = vunpack.c.l.b16 %v781
      %v1008 = vunpack.c.h.b16 %v781
      %v1009 = vunpack.c.l.b16 %v782
      %v1010 = vunpack.c.h.b16 %v782
      %v1011 = vunpack.c.l.b16 %v783
      %v1012 = vunpack.c.h.b16 %v783
      %v1013 = vunpack.c.l.b16 %v784
      %v1014 = vunpack.c.h.b16 %v784
      %v1015 = vunpack.c.l.b16 %v785
      %v1016 = vunpack.c.h.b16 %v785
      %v1017 = vunpack.c.l.b16 %v786
      %v1018 = vunpack.c.h.b16 %v786
      %v1019 = vpack.c.b16 %v997, %v995
      %v1020 = vpack.c.b16 %v998, %v996
      %v1021 = vpack.c.b16 %v1001, %v999
      %v1022 = vpack.c.b16 %v1002, %v1000
      %v1023 = vpack.c.b16 %v1005, %v1003
      %v1024 = vpack.c.b16 %v1006, %v1004
      %v1025 = vpack.c.b16 %v1009, %v1007
      %v1026 = vpack.c.b16 %v1010, %v1008
      %v1027 = vpack.c.b16 %v1013, %v1011
      %v1028 = vpack.c.b16 %v1014, %v1012
      %v1029 = vpack.c.b16 %v1017, %v1015
      %v1030 = vpack.c.b16 %v1018, %v1016
      %v1043 = vsel %vm897, %v771, 0
      %v1045 = vsel %vm897, %v772, 0
      %v1047 = vsel %vm897, %v773, 0
      %v1049 = vsel %vm897, %v774, 0
      %1051 = vmatprep.subr.bf16.mxu0 0
      %1052 = vmatpush1.bf16.msra.mxu0 0
      %1053 = vmatprep.subr.bf16.mxu0 0
      %1054 = vmatpush1.bf16.msra.mxu0 0
      %1055 = vmatprep.subr.bf16.mxu0 %v1030
      %1056 = vmatpush1.bf16.msra.mxu0 %v1029
      %1057 = vmatprep.subr.bf16.mxu0 %v1028
      %1058 = vmatpush1.bf16.msra.mxu0 %v1027
      %1059 = vmatprep.subr.bf16.mxu0 %v1026
      %1060 = vmatpush1.bf16.msra.mxu0 %v1025
      %1061 = vmatprep.subr.bf16.mxu0 %v1024
      %1062 = vmatpush1.bf16.msra.mxu0 %v1023
      %1063 = vmatprep.subr.bf16.mxu0 %v1022
      %1064 = vmatpush1.bf16.msra.mxu0 %v1021
      %1065 = vmatprep.subr.bf16.mxu0 %v1020
      %1066 = vmatpush1.bf16.msra.mxu0 %v1019
      %1067 = vmatprep.subr.bf16.mxu0 0
      %1068 = vmatpush2.bf16.msra.mxu0 0
      %1069 = vmatprep.subr.bf16.mxu0 0
      %1070 = vmatpush2.bf16.msra.mxu0 0
      %1071 = vmatprep.subr.bf16.mxu0 0
      %1072 = vmatpush2.bf16.msra.mxu0 0
      %1073 = vmatprep.subr.bf16.mxu0 0
      %1074 = vmatpush2.bf16.msra.mxu0 0
      %1075 = vmatprep.subr.bf16.mxu0 0
      %1076 = vmatpush2.bf16.msra.mxu0 0
      %1077 = vmatprep.subr.bf16.mxu0 0
      %1078 = vmatpush2.bf16.msra.mxu0 0
      %1079 = vmatprep.subr.bf16.mxu0 0
      %1080 = vmatpush2.bf16.msra.mxu0 0
      %1081 = vmatprep.subr.bf16.mxu0 0
      %1082 = vmatpush2.bf16.msra.mxu0 0
      %1083 = vmatprep.mubr.bf16.mxu0 0
      %1084 = vmatmul.mubr.bf16.gmra.mxu0 %v1043
      %v1085 = vpop.f32.mrf.mxu0
      %v1086 = vadd.f32 %v945, %v1085
      %v1087 = vpop.f32.mrf.mxu0
      %v1088 = vadd.f32 %v947, %v1087
      %v1089 = vpop.f32.mrf.mxu0
      %v1090 = vadd.f32 %v949, %v1089
      %v1091 = vpop.f32.mrf.mxu0
      %v1092 = vadd.f32 %v951, %v1091
      %1093 = vmatprep.mubr.bf16.mxu0 0
      %1094 = vmatmul.mubr.bf16.gmra.mxu0 %v1045
      %v1095 = vpop.f32.mrf.mxu0
      %v1096 = vadd.f32 %v955, %v1095
      %v1097 = vpop.f32.mrf.mxu0
      %v1098 = vadd.f32 %v957, %v1097
      %v1099 = vpop.f32.mrf.mxu0
      %v1100 = vadd.f32 %v959, %v1099
      %v1101 = vpop.f32.mrf.mxu0
      %v1102 = vadd.f32 %v961, %v1101
      %1103 = vmatprep.mubr.bf16.mxu0 0
      %1104 = vmatmul.mubr.bf16.gmra.mxu0 %v1047
      %v1105 = vpop.f32.mrf.mxu0
      %v1106 = vadd.f32 %v965, %v1105
      %v1107 = vpop.f32.mrf.mxu0
      %v1108 = vadd.f32 %v967, %v1107
      %v1109 = vpop.f32.mrf.mxu0
      %v1110 = vadd.f32 %v969, %v1109
      %v1111 = vpop.f32.mrf.mxu0
      %v1112 = vadd.f32 %v971, %v1111
      %1113 = vmatprep.mubr.bf16.mxu0 0
      %1114 = vmatmul.mubr.bf16.gmra.mxu0 %v1049
      %v1115 = vpop.f32.mrf.mxu0
      %v1116 = vadd.f32 %v975, %v1115
      %v1117 = vpop.f32.mrf.mxu0
      %v1118 = vadd.f32 %v977, %v1117
      %v1119 = vpop.f32.mrf.mxu0
      %v1120 = vadd.f32 %v979, %v1119
      %v1121 = vpop.f32.mrf.mxu0
      %v1122 = vadd.f32 %v981, %v1121
      %1123 = vdwg.mxu0
      %s1124 = scalar_lea.vmem %s2, 192
      %v1125 = vld [vmem:[%s1124] sm:$0xff]
      %v1126 = vld [vmem:[%s1124 + $0x8] sm:$0xff]
      %v1127 = vld [vmem:[%s1124 + $0x10] sm:$0xff]
      %v1128 = vld [vmem:[%s1124 + $0x18] sm:$0xff]
      %v1129 = vld [vmem:[%s1124 + $0x20] sm:$0xff]
      %v1130 = vld [vmem:[%s1124 + $0x28] sm:$0xff]
      %v1131 = vld [vmem:[%s1124 + $0x30] sm:$0xff]
      %v1132 = vld [vmem:[%s1124 + $0x38] sm:$0xff]
      %v1133 = vld [vmem:[%s1124 + $0x40] sm:$0xff]
      %v1134 = vld [vmem:[%s1124 + $0x48] sm:$0xff]
      %v1135 = vld [vmem:[%s1124 + $0x50] sm:$0xff]
      %v1136 = vld [vmem:[%s1124 + $0x58] sm:$0xff]
      %vm1142 = vcmask 1046528
      %v1143 = vrot.slane %v771, 1
      %v1144 = vrot.slane %v772, 1
      %v1145 = vsel %vm1142, %v1143, %v1144
      %v1146 = vrot.slane %v773, 1
      %v1147 = vsel %vm1142, %v1144, %v1146
      %v1148 = vrot.slane %v774, 1
      %v1149 = vsel %vm1142, %v1146, %v1148
      %v1150 = vrot.slane 0, 1
      %v1151 = vsel %vm1142, %v1148, %v1150
      %v1164 = vunpack.c.l.b16 %v1125
      %v1165 = vunpack.c.h.b16 %v1125
      %v1166 = vunpack.c.l.b16 %v1126
      %v1167 = vunpack.c.h.b16 %v1126
      %v1168 = vunpack.c.l.b16 %v1127
      %v1169 = vunpack.c.h.b16 %v1127
      %v1170 = vunpack.c.l.b16 %v1128
      %v1171 = vunpack.c.h.b16 %v1128
      %v1172 = vunpack.c.l.b16 %v1129
      %v1173 = vunpack.c.h.b16 %v1129
      %v1174 = vunpack.c.l.b16 %v1130
      %v1175 = vunpack.c.h.b16 %v1130
      %v1176 = vunpack.c.l.b16 %v1131
      %v1177 = vunpack.c.h.b16 %v1131
      %v1178 = vunpack.c.l.b16 %v1132
      %v1179 = vunpack.c.h.b16 %v1132
      %v1180 = vunpack.c.l.b16 %v1133
      %v1181 = vunpack.c.h.b16 %v1133
      %v1182 = vunpack.c.l.b16 %v1134
      %v1183 = vunpack.c.h.b16 %v1134
      %v1184 = vunpack.c.l.b16 %v1135
      %v1185 = vunpack.c.h.b16 %v1135
      %v1186 = vunpack.c.l.b16 %v1136
      %v1187 = vunpack.c.h.b16 %v1136
      %v1188 = vpack.c.b16 %v1166, %v1164
      %v1189 = vpack.c.b16 %v1167, %v1165
      %v1190 = vpack.c.b16 %v1170, %v1168
      %v1191 = vpack.c.b16 %v1171, %v1169
      %v1192 = vpack.c.b16 %v1174, %v1172
      %v1193 = vpack.c.b16 %v1175, %v1173
      %v1194 = vpack.c.b16 %v1178, %v1176
      %v1195 = vpack.c.b16 %v1179, %v1177
      %v1196 = vpack.c.b16 %v1182, %v1180
      %v1197 = vpack.c.b16 %v1183, %v1181
      %v1198 = vpack.c.b16 %v1186, %v1184
      %v1199 = vpack.c.b16 %v1187, %v1185
      %v1213 = vsel %vm897, %v1145, 0
      %v1216 = vsel %vm897, %v1147, 0
      %v1219 = vsel %vm897, %v1149, 0
      %v1222 = vsel %vm897, %v1151, 0
      %1224 = vmatprep.subr.bf16.mxu0 0
      %1225 = vmatpush1.bf16.msra.mxu0 0
      %1226 = vmatprep.subr.bf16.mxu0 0
      %1227 = vmatpush1.bf16.msra.mxu0 0
      %1228 = vmatprep.subr.bf16.mxu0 %v1199
      %1229 = vmatpush1.bf16.msra.mxu0 %v1198
      %1230 = vmatprep.subr.bf16.mxu0 %v1197
      %1231 = vmatpush1.bf16.msra.mxu0 %v1196
      %1232 = vmatprep.subr.bf16.mxu0 %v1195
      %1233 = vmatpush1.bf16.msra.mxu0 %v1194
      %1234 = vmatprep.subr.bf16.mxu0 %v1193
      %1235 = vmatpush1.bf16.msra.mxu0 %v1192
      %1236 = vmatprep.subr.bf16.mxu0 %v1191
      %1237 = vmatpush1.bf16.msra.mxu0 %v1190
      %1238 = vmatprep.subr.bf16.mxu0 %v1189
      %1239 = vmatpush1.bf16.msra.mxu0 %v1188
      %1240 = vmatprep.subr.bf16.mxu0 0
      %1241 = vmatpush2.bf16.msra.mxu0 0
      %1242 = vmatprep.subr.bf16.mxu0 0
      %1243 = vmatpush2.bf16.msra.mxu0 0
      %1244 = vmatprep.subr.bf16.mxu0 0
      %1245 = vmatpush2.bf16.msra.mxu0 0
      %1246 = vmatprep.subr.bf16.mxu0 0
      %1247 = vmatpush2.bf16.msra.mxu0 0
      %1248 = vmatprep.subr.bf16.mxu0 0
      %1249 = vmatpush2.bf16.msra.mxu0 0
      %1250 = vmatprep.subr.bf16.mxu0 0
      %1251 = vmatpush2.bf16.msra.mxu0 0
      %1252 = vmatprep.subr.bf16.mxu0 0
      %1253 = vmatpush2.bf16.msra.mxu0 0
      %1254 = vmatprep.subr.bf16.mxu0 0
      %1255 = vmatpush2.bf16.msra.mxu0 0
      %1256 = vmatprep.mubr.bf16.mxu0 0
      %1257 = vmatmul.mubr.bf16.gmra.mxu0 %v1213
      %v1258 = vpop.f32.mrf.mxu0
      %v1259 = vadd.f32 0.0, %v1258
      %v1260 = vpop.f32.mrf.mxu0
      %v1261 = vadd.f32 0.0, %v1260
      %v1262 = vpop.f32.mrf.mxu0
      %v1263 = vadd.f32 0.0, %v1262
      %v1264 = vpop.f32.mrf.mxu0
      %v1265 = vadd.f32 0.0, %v1264
      %1266 = vmatprep.mubr.bf16.mxu0 0
      %1267 = vmatmul.mubr.bf16.gmra.mxu0 %v1216
      %v1268 = vpop.f32.mrf.mxu0
      %v1269 = vadd.f32 0.0, %v1268
      %v1270 = vpop.f32.mrf.mxu0
      %v1271 = vadd.f32 0.0, %v1270
      %v1272 = vpop.f32.mrf.mxu0
      %v1273 = vadd.f32 0.0, %v1272
      %v1274 = vpop.f32.mrf.mxu0
      %v1275 = vadd.f32 0.0, %v1274
      %1276 = vmatprep.mubr.bf16.mxu0 0
      %1277 = vmatmul.mubr.bf16.gmra.mxu0 %v1219
      %v1278 = vpop.f32.mrf.mxu0
      %v1279 = vadd.f32 0.0, %v1278
      %v1280 = vpop.f32.mrf.mxu0
      %v1281 = vadd.f32 0.0, %v1280
      %v1282 = vpop.f32.mrf.mxu0
      %v1283 = vadd.f32 0.0, %v1282
      %v1284 = vpop.f32.mrf.mxu0
      %v1285 = vadd.f32 0.0, %v1284
      %1286 = vmatprep.mubr.bf16.mxu0 0
      %1287 = vmatmul.mubr.bf16.gmra.mxu0 %v1222
      %v1288 = vpop.f32.mrf.mxu0
      %v1289 = vadd.f32 0.0, %v1288
      %v1290 = vpop.f32.mrf.mxu0
      %v1291 = vadd.f32 0.0, %v1290
      %v1292 = vpop.f32.mrf.mxu0
      %v1293 = vadd.f32 0.0, %v1292
      %v1294 = vpop.f32.mrf.mxu0
      %v1295 = vadd.f32 0.0, %v1294
      %1296 = vdwg.mxu0
      %v1297 = vadd.f32 %v1086, %v1259
      %v1298 = vadd.f32 %v1088, %v1261
      %v1299 = vadd.f32 %v1090, %v1263
      %v1300 = vadd.f32 %v1092, %v1265
      %v1301 = vadd.f32 %v1096, %v1269
      %v1302 = vadd.f32 %v1098, %v1271
      %v1303 = vadd.f32 %v1100, %v1273
      %v1304 = vadd.f32 %v1102, %v1275
      %v1305 = vadd.f32 %v1106, %v1279
      %v1306 = vadd.f32 %v1108, %v1281
      %v1307 = vadd.f32 %v1110, %v1283
      %v1308 = vadd.f32 %v1112, %v1285
      %v1309 = vadd.f32 %v1116, %v1289
      %v1310 = vadd.f32 %v1118, %v1291
      %v1311 = vadd.f32 %v1120, %v1293
      %v1312 = vadd.f32 %v1122, %v1295
      %s1313 = scalar_lea.vmem %s2, 288
      %v1314 = vld [vmem:[%s1313] sm:$0xff]
      %v1315 = vld [vmem:[%s1313 + $0x8] sm:$0xff]
      %v1316 = vld [vmem:[%s1313 + $0x10] sm:$0xff]
      %v1317 = vld [vmem:[%s1313 + $0x18] sm:$0xff]
      %v1318 = vld [vmem:[%s1313 + $0x20] sm:$0xff]
      %v1319 = vld [vmem:[%s1313 + $0x28] sm:$0xff]
      %v1320 = vld [vmem:[%s1313 + $0x30] sm:$0xff]
      %v1321 = vld [vmem:[%s1313 + $0x38] sm:$0xff]
      %v1322 = vld [vmem:[%s1313 + $0x40] sm:$0xff]
      %v1323 = vld [vmem:[%s1313 + $0x48] sm:$0xff]
      %v1324 = vld [vmem:[%s1313 + $0x50] sm:$0xff]
      %v1325 = vld [vmem:[%s1313 + $0x58] sm:$0xff]
      %vm1326 = vsmask.f32 6400
      %v1327 = vrot.slane %v802, 1
      %v1328 = vrot.slane %v804, 2
      %v1329 = vor.u32 %v1327, %v1328
      %v1330 = vrot.slane %v813, 1
      %v1331 = vrot.slane %v809, 2
      %v1332 = vor.u32 %v1330, %v1331
      %v1333 = vsel %vm1326, %v1329, %v1332
      %v1334 = vrot.slane %v821, 1
      %v1335 = vrot.slane %v817, 2
      %v1336 = vor.u32 %v1334, %v1335
      %v1337 = vsel %vm1326, %v1332, %v1336
      %v1338 = vrot.slane %v829, 1
      %v1339 = vrot.slane %v825, 2
      %v1340 = vor.u32 %v1338, %v1339
      %v1341 = vsel %vm1326, %v1336, %v1340
      %v1342 = vshrl.u32 0, 16
      %v1344 = vrot.slane %v1342, 1
      %v1345 = vrot.slane %v833, 2
      %v1346 = vor.u32 %v1344, %v1345
      %v1347 = vsel %vm1326, %v1340, %v1346
      %v1360 = vunpack.c.l.b16 %v1314
      %v1361 = vunpack.c.h.b16 %v1314
      %v1362 = vunpack.c.l.b16 %v1315
      %v1363 = vunpack.c.h.b16 %v1315
      %v1364 = vunpack.c.l.b16 %v1316
      %v1365 = vunpack.c.h.b16 %v1316
      %v1366 = vunpack.c.l.b16 %v1317
      %v1367 = vunpack.c.h.b16 %v1317
      %v1368 = vunpack.c.l.b16 %v1318
      %v1369 = vunpack.c.h.b16 %v1318
      %v1370 = vunpack.c.l.b16 %v1319
      %v1371 = vunpack.c.h.b16 %v1319
      %v1372 = vunpack.c.l.b16 %v1320
      %v1373 = vunpack.c.h.b16 %v1320
      %v1374 = vunpack.c.l.b16 %v1321
      %v1375 = vunpack.c.h.b16 %v1321
      %v1376 = vunpack.c.l.b16 %v1322
      %v1377 = vunpack.c.h.b16 %v1322
      %v1378 = vunpack.c.l.b16 %v1323
      %v1379 = vunpack.c.h.b16 %v1323
      %v1380 = vunpack.c.l.b16 %v1324
      %v1381 = vunpack.c.h.b16 %v1324
      %v1382 = vunpack.c.l.b16 %v1325
      %v1383 = vunpack.c.h.b16 %v1325
      %v1384 = vpack.c.b16 %v1362, %v1360
      %v1385 = vpack.c.b16 %v1363, %v1361
      %v1386 = vpack.c.b16 %v1366, %v1364
      %v1387 = vpack.c.b16 %v1367, %v1365
      %v1388 = vpack.c.b16 %v1370, %v1368
      %v1389 = vpack.c.b16 %v1371, %v1369
      %v1390 = vpack.c.b16 %v1374, %v1372
      %v1391 = vpack.c.b16 %v1375, %v1373
      %v1392 = vpack.c.b16 %v1378, %v1376
      %v1393 = vpack.c.b16 %v1379, %v1377
      %v1394 = vpack.c.b16 %v1382, %v1380
      %v1395 = vpack.c.b16 %v1383, %v1381
      %v1409 = vsel %vm897, %v1333, 0
      %v1412 = vsel %vm897, %v1337, 0
      %v1415 = vsel %vm897, %v1341, 0
      %v1418 = vsel %vm897, %v1347, 0
      %1420 = vmatprep.subr.bf16.mxu0 0
      %1421 = vmatpush1.bf16.msra.mxu0 0
      %1422 = vmatprep.subr.bf16.mxu0 0
      %1423 = vmatpush1.bf16.msra.mxu0 0
      %1424 = vmatprep.subr.bf16.mxu0 %v1395
      %1425 = vmatpush1.bf16.msra.mxu0 %v1394
      %1426 = vmatprep.subr.bf16.mxu0 %v1393
      %1427 = vmatpush1.bf16.msra.mxu0 %v1392
      %1428 = vmatprep.subr.bf16.mxu0 %v1391
      %1429 = vmatpush1.bf16.msra.mxu0 %v1390
      %1430 = vmatprep.subr.bf16.mxu0 %v1389
      %1431 = vmatpush1.bf16.msra.mxu0 %v1388
      %1432 = vmatprep.subr.bf16.mxu0 %v1387
      %1433 = vmatpush1.bf16.msra.mxu0 %v1386
      %1434 = vmatprep.subr.bf16.mxu0 %v1385
      %1435 = vmatpush1.bf16.msra.mxu0 %v1384
      %1436 = vmatprep.subr.bf16.mxu0 0
      %1437 = vmatpush2.bf16.msra.mxu0 0
      %1438 = vmatprep.subr.bf16.mxu0 0
      %1439 = vmatpush2.bf16.msra.mxu0 0
      %1440 = vmatprep.subr.bf16.mxu0 0
      %1441 = vmatpush2.bf16.msra.mxu0 0
      %1442 = vmatprep.subr.bf16.mxu0 0
      %1443 = vmatpush2.bf16.msra.mxu0 0
      %1444 = vmatprep.subr.bf16.mxu0 0
      %1445 = vmatpush2.bf16.msra.mxu0 0
      %1446 = vmatprep.subr.bf16.mxu0 0
      %1447 = vmatpush2.bf16.msra.mxu0 0
      %1448 = vmatprep.subr.bf16.mxu0 0
      %1449 = vmatpush2.bf16.msra.mxu0 0
      %1450 = vmatprep.subr.bf16.mxu0 0
      %1451 = vmatpush2.bf16.msra.mxu0 0
      %1452 = vmatprep.mubr.bf16.mxu0 0
      %1453 = vmatmul.mubr.bf16.gmra.mxu0 %v1409
      %v1454 = vpop.f32.mrf.mxu0
      %v1455 = vadd.f32 0.0, %v1454
      %v1456 = vpop.f32.mrf.mxu0
      %v1457 = vadd.f32 0.0, %v1456
      %v1458 = vpop.f32.mrf.mxu0
      %v1459 = vadd.f32 0.0, %v1458
      %v1460 = vpop.f32.mrf.mxu0
      %v1461 = vadd.f32 0.0, %v1460
      %1462 = vmatprep.mubr.bf16.mxu0 0
      %1463 = vmatmul.mubr.bf16.gmra.mxu0 %v1412
      %v1464 = vpop.f32.mrf.mxu0
      %v1465 = vadd.f32 0.0, %v1464
      %v1466 = vpop.f32.mrf.mxu0
      %v1467 = vadd.f32 0.0, %v1466
      %v1468 = vpop.f32.mrf.mxu0
      %v1469 = vadd.f32 0.0, %v1468
      %v1470 = vpop.f32.mrf.mxu0
      %v1471 = vadd.f32 0.0, %v1470
      %1472 = vmatprep.mubr.bf16.mxu0 0
      %1473 = vmatmul.mubr.bf16.gmra.mxu0 %v1415
      %v1474 = vpop.f32.mrf.mxu0
      %v1475 = vadd.f32 0.0, %v1474
      %v1476 = vpop.f32.mrf.mxu0
      %v1477 = vadd.f32 0.0, %v1476
      %v1478 = vpop.f32.mrf.mxu0
      %v1479 = vadd.f32 0.0, %v1478
      %v1480 = vpop.f32.mrf.mxu0
      %v1481 = vadd.f32 0.0, %v1480
      %1482 = vmatprep.mubr.bf16.mxu0 0
      %1483 = vmatmul.mubr.bf16.gmra.mxu0 %v1418
      %v1484 = vpop.f32.mrf.mxu0
      %v1485 = vadd.f32 0.0, %v1484
      %v1486 = vpop.f32.mrf.mxu0
      %v1487 = vadd.f32 0.0, %v1486
      %v1488 = vpop.f32.mrf.mxu0
      %v1489 = vadd.f32 0.0, %v1488
      %v1490 = vpop.f32.mrf.mxu0
      %v1491 = vadd.f32 0.0, %v1490
      %1492 = vdwg.mxu0
      %v1493 = vadd.f32 %v1297, %v1455
      %v1494 = vadd.f32 %v1298, %v1457
      %v1495 = vadd.f32 %v1299, %v1459
      %v1496 = vadd.f32 %v1300, %v1461
      %v1497 = vadd.f32 %v1301, %v1465
      %v1498 = vadd.f32 %v1302, %v1467
      %v1499 = vadd.f32 %v1303, %v1469
      %v1500 = vadd.f32 %v1304, %v1471
      %v1501 = vadd.f32 %v1305, %v1475
      %v1502 = vadd.f32 %v1306, %v1477
      %v1503 = vadd.f32 %v1307, %v1479
      %v1504 = vadd.f32 %v1308, %v1481
      %v1505 = vadd.f32 %v1309, %v1485
      %v1506 = vadd.f32 %v1310, %v1487
      %v1507 = vadd.f32 %v1311, %v1489
      %v1508 = vadd.f32 %v1312, %v1491
      %s1509 = scalar_lea.vmem %s2, 384
      %v1510 = vld [vmem:[%s1509] sm:$0xff]
      %v1511 = vld [vmem:[%s1509 + $0x8] sm:$0xff]
      %v1512 = vld [vmem:[%s1509 + $0x10] sm:$0xff]
      %v1513 = vld [vmem:[%s1509 + $0x18] sm:$0xff]
      %v1514 = vld [vmem:[%s1509 + $0x20] sm:$0xff]
      %v1515 = vld [vmem:[%s1509 + $0x28] sm:$0xff]
      %v1516 = vld [vmem:[%s1509 + $0x30] sm:$0xff]
      %v1517 = vld [vmem:[%s1509 + $0x38] sm:$0xff]
      %v1518 = vld [vmem:[%s1509 + $0x40] sm:$0xff]
      %v1519 = vld [vmem:[%s1509 + $0x48] sm:$0xff]
      %v1520 = vld [vmem:[%s1509 + $0x50] sm:$0xff]
      %v1521 = vld [vmem:[%s1509 + $0x58] sm:$0xff]
      %vm1522 = vcmask 1045504
      %v1523 = vrot.slane %v771, 2
      %v1524 = vrot.slane %v772, 2
      %v1525 = vsel %vm1522, %v1523, %v1524
      %v1526 = vrot.slane %v773, 2
      %v1527 = vsel %vm1522, %v1524, %v1526
      %v1528 = vrot.slane %v774, 2
      %v1529 = vsel %vm1522, %v1526, %v1528
      %v1530 = vrot.slane 0, 2
      %v1531 = vsel %vm1522, %v1528, %v1530
      %v1544 = vunpack.c.l.b16 %v1510
      %v1545 = vunpack.c.h.b16 %v1510
      %v1546 = vunpack.c.l.b16 %v1511
      %v1547 = vunpack.c.h.b16 %v1511
      %v1548 = vunpack.c.l.b16 %v1512
      %v1549 = vunpack.c.h.b16 %v1512
      %v1550 = vunpack.c.l.b16 %v1513
      %v1551 = vunpack.c.h.b16 %v1513
      %v1552 = vunpack.c.l.b16 %v1514
      %v1553 = vunpack.c.h.b16 %v1514
      %v1554 = vunpack.c.l.b16 %v1515
      %v1555 = vunpack.c.h.b16 %v1515
      %v1556 = vunpack.c.l.b16 %v1516
      %v1557 = vunpack.c.h.b16 %v1516
      %v1558 = vunpack.c.l.b16 %v1517
      %v1559 = vunpack.c.h.b16 %v1517
      %v1560 = vunpack.c.l.b16 %v1518
      %v1561 = vunpack.c.h.b16 %v1518
      %v1562 = vunpack.c.l.b16 %v1519
      %v1563 = vunpack.c.h.b16 %v1519
      %v1564 = vunpack.c.l.b16 %v1520
      %v1565 = vunpack.c.h.b16 %v1520
      %v1566 = vunpack.c.l.b16 %v1521
      %v1567 = vunpack.c.h.b16 %v1521
      %v1568 = vpack.c.b16 %v1546, %v1544
      %v1569 = vpack.c.b16 %v1547, %v1545
      %v1570 = vpack.c.b16 %v1550, %v1548
      %v1571 = vpack.c.b16 %v1551, %v1549
      %v1572 = vpack.c.b16 %v1554, %v1552
      %v1573 = vpack.c.b16 %v1555, %v1553
      %v1574 = vpack.c.b16 %v1558, %v1556
      %v1575 = vpack.c.b16 %v1559, %v1557
      %v1576 = vpack.c.b16 %v1562, %v1560
      %v1577 = vpack.c.b16 %v1563, %v1561
      %v1578 = vpack.c.b16 %v1566, %v1564
      %v1579 = vpack.c.b16 %v1567, %v1565
      %v1593 = vsel %vm897, %v1525, 0
      %v1596 = vsel %vm897, %v1527, 0
      %v1599 = vsel %vm897, %v1529, 0
      %v1602 = vsel %vm897, %v1531, 0
      %1604 = vmatprep.subr.bf16.mxu0 0
      %1605 = vmatpush1.bf16.msra.mxu0 0
      %1606 = vmatprep.subr.bf16.mxu0 0
      %1607 = vmatpush1.bf16.msra.mxu0 0
      %1608 = vmatprep.subr.bf16.mxu0 %v1579
      %1609 = vmatpush1.bf16.msra.mxu0 %v1578
      %1610 = vmatprep.subr.bf16.mxu0 %v1577
      %1611 = vmatpush1.bf16.msra.mxu0 %v1576
      %1612 = vmatprep.subr.bf16.mxu0 %v1575
      %1613 = vmatpush1.bf16.msra.mxu0 %v1574
      %1614 = vmatprep.subr.bf16.mxu0 %v1573
      %1615 = vmatpush1.bf16.msra.mxu0 %v1572
      %1616 = vmatprep.subr.bf16.mxu0 %v1571
      %1617 = vmatpush1.bf16.msra.mxu0 %v1570
      %1618 = vmatprep.subr.bf16.mxu0 %v1569
      %1619 = vmatpush1.bf16.msra.mxu0 %v1568
      %1620 = vmatprep.subr.bf16.mxu0 0
      %1621 = vmatpush2.bf16.msra.mxu0 0
      %1622 = vmatprep.subr.bf16.mxu0 0
      %1623 = vmatpush2.bf16.msra.mxu0 0
      %1624 = vmatprep.subr.bf16.mxu0 0
      %1625 = vmatpush2.bf16.msra.mxu0 0
      %1626 = vmatprep.subr.bf16.mxu0 0
      %1627 = vmatpush2.bf16.msra.mxu0 0
      %1628 = vmatprep.subr.bf16.mxu0 0
      %1629 = vmatpush2.bf16.msra.mxu0 0
      %1630 = vmatprep.subr.bf16.mxu0 0
      %1631 = vmatpush2.bf16.msra.mxu0 0
      %1632 = vmatprep.subr.bf16.mxu0 0
      %1633 = vmatpush2.bf16.msra.mxu0 0
      %1634 = vmatprep.subr.bf16.mxu0 0
      %1635 = vmatpush2.bf16.msra.mxu0 0
      %1636 = vmatprep.mubr.bf16.mxu0 0
      %1637 = vmatmul.mubr.bf16.gmra.mxu0 %v1593
      %v1638 = vpop.f32.mrf.mxu0
      %v1639 = vadd.f32 0.0, %v1638
      %v1640 = vpop.f32.mrf.mxu0
      %v1641 = vadd.f32 0.0, %v1640
      %v1642 = vpop.f32.mrf.mxu0
      %v1643 = vadd.f32 0.0, %v1642
      %v1644 = vpop.f32.mrf.mxu0
      %v1645 = vadd.f32 0.0, %v1644
      %1646 = vmatprep.mubr.bf16.mxu0 0
      %1647 = vmatmul.mubr.bf16.gmra.mxu0 %v1596
      %v1648 = vpop.f32.mrf.mxu0
      %v1649 = vadd.f32 0.0, %v1648
      %v1650 = vpop.f32.mrf.mxu0
      %v1651 = vadd.f32 0.0, %v1650
      %v1652 = vpop.f32.mrf.mxu0
      %v1653 = vadd.f32 0.0, %v1652
      %v1654 = vpop.f32.mrf.mxu0
      %v1655 = vadd.f32 0.0, %v1654
      %1656 = vmatprep.mubr.bf16.mxu0 0
      %1657 = vmatmul.mubr.bf16.gmra.mxu0 %v1599
      %v1658 = vpop.f32.mrf.mxu0
      %v1659 = vadd.f32 0.0, %v1658
      %v1660 = vpop.f32.mrf.mxu0
      %v1661 = vadd.f32 0.0, %v1660
      %v1662 = vpop.f32.mrf.mxu0
      %v1663 = vadd.f32 0.0, %v1662
      %v1664 = vpop.f32.mrf.mxu0
      %v1665 = vadd.f32 0.0, %v1664
      %1666 = vmatprep.mubr.bf16.mxu0 0
      %1667 = vmatmul.mubr.bf16.gmra.mxu0 %v1602
      %v1668 = vpop.f32.mrf.mxu0
      %v1669 = vadd.f32 0.0, %v1668
      %v1670 = vpop.f32.mrf.mxu0
      %v1671 = vadd.f32 0.0, %v1670
      %v1672 = vpop.f32.mrf.mxu0
      %v1673 = vadd.f32 0.0, %v1672
      %v1674 = vpop.f32.mrf.mxu0
      %v1675 = vadd.f32 0.0, %v1674
      %1676 = vdwg.mxu0
      %v1677 = vadd.f32 %v1493, %v1639
      %v1678 = vadd.f32 %v1494, %v1641
      %v1679 = vadd.f32 %v1495, %v1643
      %v1680 = vadd.f32 %v1496, %v1645
      %v1681 = vadd.f32 %v1497, %v1649
      %v1682 = vadd.f32 %v1498, %v1651
      %v1683 = vadd.f32 %v1499, %v1653
      %v1684 = vadd.f32 %v1500, %v1655
      %v1685 = vadd.f32 %v1501, %v1659
      %v1686 = vadd.f32 %v1502, %v1661
      %v1687 = vadd.f32 %v1503, %v1663
      %v1688 = vadd.f32 %v1504, %v1665
      %v1689 = vadd.f32 %v1505, %v1669
      %v1690 = vadd.f32 %v1506, %v1671
      %v1691 = vadd.f32 %v1507, %v1673
      %v1692 = vadd.f32 %v1508, %v1675
      %v1693 = vld [vmem:[%s3] sm:$0x3]
      %v1695 = vlaneseq
      %v1696 = vshrl.u32 %v1695, 7
      %v1697 = vsub.s32 0, %v1696
      %v1698 = vrot.slane %v1693, %v1697
      %v1699 = vlaneseq
      %v1700 = vshrl.u32 %v1699, 7
      %v1701 = vsub.s32 1, %v1700
      %v1702 = vrot.slane %v1693, %v1701
      %v1705 = vadd.f32 %v1677, %v1698
      %v1706 = vadd.f32 %v1678, %v1702
      %v1707 = vadd.f32 %v1679, %v1698
      %v1708 = vadd.f32 %v1680, %v1702
      %v1709 = vadd.f32 %v1681, %v1698
      %v1710 = vadd.f32 %v1682, %v1702
      %v1711 = vadd.f32 %v1683, %v1698
      %v1712 = vadd.f32 %v1684, %v1702
      %v1713 = vadd.f32 %v1685, %v1698
      %v1714 = vadd.f32 %v1686, %v1702
      %v1715 = vadd.f32 %v1687, %v1698
      %v1716 = vadd.f32 %v1688, %v1702
      %v1717 = vadd.f32 %v1689, %v1698
      %v1718 = vadd.f32 %v1690, %v1702
      %v1719 = vadd.f32 %v1691, %v1698
      %v1720 = vadd.f32 %v1692, %v1702
      %v1721 = vmax.f32 %v1705, 0.0
      %v1722 = vmax.f32 %v1706, 0.0
      %v1723 = vmax.f32 %v1707, 0.0
      %v1724 = vmax.f32 %v1708, 0.0
      %v1725 = vmax.f32 %v1709, 0.0
      %v1726 = vmax.f32 %v1710, 0.0
      %v1727 = vmax.f32 %v1711, 0.0
      %v1728 = vmax.f32 %v1712, 0.0
      %v1729 = vmax.f32 %v1713, 0.0
      %v1730 = vmax.f32 %v1714, 0.0
      %v1731 = vmax.f32 %v1715, 0.0
      %v1732 = vmax.f32 %v1716, 0.0
      %v1733 = vmax.f32 %v1717, 0.0
      %v1734 = vmax.f32 %v1718, 0.0
      %v1735 = vmax.f32 %v1719, 0.0
      %v1736 = vmax.f32 %v1720, 0.0
      %1753 = vrot.lane.b32.xlu0 %v1721, 122
      %v1754 = vpop.permute.xlu0 %1753
      %1755 = vrot.lane.b32.xlu0 %v1722, 122
      %v1756 = vpop.permute.xlu0 %1755
      %1757 = vrot.lane.b32.xlu0 %v1723, 122
      %v1758 = vpop.permute.xlu0 %1757
      %1759 = vrot.lane.b32.xlu0 %v1724, 122
      %v1760 = vpop.permute.xlu0 %1759
      %1761 = vrot.lane.b32.xlu0 %v1725, 122
      %v1762 = vpop.permute.xlu0 %1761
      %1763 = vrot.lane.b32.xlu0 %v1726, 122
      %v1764 = vpop.permute.xlu0 %1763
      %1765 = vrot.lane.b32.xlu0 %v1727, 122
      %v1766 = vpop.permute.xlu0 %1765
      %1767 = vrot.lane.b32.xlu0 %v1728, 122
      %v1768 = vpop.permute.xlu0 %1767
      %1769 = vrot.lane.b32.xlu0 %v1729, 122
      %v1770 = vpop.permute.xlu0 %1769
      %1771 = vrot.lane.b32.xlu0 %v1730, 122
      %v1772 = vpop.permute.xlu0 %1771
      %1773 = vrot.lane.b32.xlu0 %v1731, 122
      %v1774 = vpop.permute.xlu0 %1773
      %1775 = vrot.lane.b32.xlu0 %v1732, 122
      %v1776 = vpop.permute.xlu0 %1775
      %1777 = vrot.lane.b32.xlu0 %v1733, 122
      %v1778 = vpop.permute.xlu0 %1777
      %1779 = vrot.lane.b32.xlu0 %v1734, 122
      %v1780 = vpop.permute.xlu0 %1779
      %1781 = vrot.lane.b32.xlu0 %v1735, 122
      %v1782 = vpop.permute.xlu0 %1781
      %1783 = vrot.lane.b32.xlu0 %v1736, 122
      %v1784 = vpop.permute.xlu0 %1783
      %vm1785 = vcmask 998400
      %v1786 = vsel %vm1785, %v1754, %v1756
      %v1787 = vsel %vm1785, %v1758, %v1760
      %v1788 = vsel %vm1785, %v1762, %v1764
      %v1789 = vsel %vm1785, %v1766, %v1768
      %v1790 = vsel %vm1785, %v1770, %v1772
      %v1791 = vsel %vm1785, %v1774, %v1776
      %v1792 = vsel %vm1785, %v1778, %v1780
      %v1793 = vsel %vm1785, %v1782, %v1784
      %v1810 = vmax.f32 %v1721, %v1786
      %v1811 = vmax.f32 %v1722, %v1756
      %v1812 = vmax.f32 %v1723, %v1787
      %v1813 = vmax.f32 %v1724, %v1760
      %v1814 = vmax.f32 %v1725, %v1788
      %v1815 = vmax.f32 %v1726, %v1764
      %v1816 = vmax.f32 %v1727, %v1789
      %v1817 = vmax.f32 %v1728, %v1768
      %v1818 = vmax.f32 %v1729, %v1790
      %v1819 = vmax.f32 %v1730, %v1772
      %v1820 = vmax.f32 %v1731, %v1791
      %v1821 = vmax.f32 %v1732, %v1776
      %v1822 = vmax.f32 %v1733, %v1792
      %v1823 = vmax.f32 %v1734, %v1780
      %v1824 = vmax.f32 %v1735, %v1793
      %v1825 = vmax.f32 %v1736, %v1784
      %v1826 = vpack.c.bf16 %v1812, %v1810
      %v1827 = vpack.c.bf16 %v1813, %v1811
      %v1828 = vpack.c.bf16 %v1816, %v1814
      %v1829 = vpack.c.bf16 %v1817, %v1815
      %v1830 = vpack.c.bf16 %v1820, %v1818
      %v1831 = vpack.c.bf16 %v1821, %v1819
      %v1832 = vpack.c.bf16 %v1824, %v1822
      %v1833 = vpack.c.bf16 %v1825, %v1823
      %v1834 = vld [vmem:[%s4] sm:$0xf]
      %v1835 = vld [vmem:[%s4 + $0x4] sm:$0xf]
      %v1836 = vld [vmem:[%s4 + $0x8] sm:$0xf]
      %v1837 = vld [vmem:[%s4 + $0xc] sm:$0xf]
      %v1838 = vld [vmem:[%s4 + $0x10] sm:$0xf]
      %v1839 = vld [vmem:[%s4 + $0x14] sm:$0xf]
      %v1840 = vld [vmem:[%s4 + $0x18] sm:$0xf]
      %v1841 = vld [vmem:[%s4 + $0x1c] sm:$0xf]
      %v1842 = vld [vmem:[%s4 + $0x20] sm:$0xf]
      %v1843 = vld [vmem:[%s4 + $0x24] sm:$0xf]
      %v1844 = vld [vmem:[%s4 + $0x28] sm:$0xf]
      %v1845 = vld [vmem:[%s4 + $0x2c] sm:$0xf]
      %v1846 = vld [vmem:[%s4 + $0x30] sm:$0xf]
      %v1847 = vld [vmem:[%s4 + $0x34] sm:$0xf]
      %v1848 = vld [vmem:[%s4 + $0x38] sm:$0xf]
      %v1849 = vld [vmem:[%s4 + $0x3c] sm:$0xf]
      %v1850 = vld [vmem:[%s4 + $0x40] sm:$0xf]
      %v1851 = vld [vmem:[%s4 + $0x44] sm:$0xf]
      %v1852 = vld [vmem:[%s4 + $0x48] sm:$0xf]
      %v1853 = vld [vmem:[%s4 + $0x4c] sm:$0xf]
      %v1854 = vld [vmem:[%s4 + $0x50] sm:$0x1]
      %v1876 = vunpack.c.l.b16 %v1834
      %v1877 = vunpack.c.l.b16 %v1835
      %v1878 = vunpack.c.l.b16 %v1836
      %v1879 = vunpack.c.l.b16 %v1837
      %v1880 = vunpack.c.l.b16 %v1838
      %v1881 = vunpack.c.l.b16 %v1839
      %v1882 = vunpack.c.l.b16 %v1840
      %v1883 = vunpack.c.l.b16 %v1841
      %v1884 = vunpack.c.l.b16 %v1842
      %v1885 = vunpack.c.l.b16 %v1843
      %v1886 = vunpack.c.l.b16 %v1844
      %v1887 = vunpack.c.l.b16 %v1845
      %v1888 = vunpack.c.l.b16 %v1846
      %v1889 = vunpack.c.l.b16 %v1847
      %v1890 = vunpack.c.l.b16 %v1848
      %v1891 = vunpack.c.l.b16 %v1849
      %v1892 = vunpack.c.l.b16 %v1850
      %v1893 = vunpack.c.l.b16 %v1851
      %v1894 = vunpack.c.l.b16 %v1852
      %v1895 = vunpack.c.l.b16 %v1853
      %v1896 = vunpack.c.l.b16 %v1854
      %v1897 = vpack.c.b16 %v1877, %v1876
      %v1898 = vpack.c.b16 %v1879, %v1878
      %v1899 = vpack.c.b16 %v1881, %v1880
      %v1900 = vpack.c.b16 %v1883, %v1882
      %v1901 = vpack.c.b16 %v1885, %v1884
      %v1902 = vpack.c.b16 %v1887, %v1886
      %v1903 = vpack.c.b16 %v1889, %v1888
      %v1904 = vpack.c.b16 %v1891, %v1890
      %v1905 = vpack.c.b16 %v1893, %v1892
      %v1906 = vpack.c.b16 %v1895, %v1894
      %v1907 = vpack.c.b16 %v1896, %v1896
      %vm1918 = vcmask 277504
      %v1920 = vsel %vm1918, %v1827, 0
      %v1923 = vsel %vm1918, %v1829, 0
      %v1926 = vsel %vm1918, %v1831, 0
      %v1929 = vsel %vm1918, %v1833, 0
      %vm1931 = vcmask 1040384
      %v1933 = vsel %vm1931, %v1907, 0
      %1935 = vmatprep.subr.bf16.mxu0 0
      %1936 = vmatpush1.bf16.msra.mxu0 %v1904
      %1937 = vmatprep.subr.bf16.mxu0 0
      %1938 = vmatpush1.bf16.msra.mxu0 %v1903
      %1939 = vmatprep.subr.bf16.mxu0 0
      %1940 = vmatpush1.bf16.msra.mxu0 %v1902
      %1941 = vmatprep.subr.bf16.mxu0 0
      %1942 = vmatpush1.bf16.msra.mxu0 %v1901
      %1943 = vmatprep.subr.bf16.mxu0 0
      %1944 = vmatpush1.bf16.msra.mxu0 %v1900
      %1945 = vmatprep.subr.bf16.mxu0 0
      %1946 = vmatpush1.bf16.msra.mxu0 %v1899
      %1947 = vmatprep.subr.bf16.mxu0 0
      %1948 = vmatpush1.bf16.msra.mxu0 %v1898
      %1949 = vmatprep.subr.bf16.mxu0 0
      %1950 = vmatpush1.bf16.msra.mxu0 %v1897
      %1951 = vmatprep.subr.bf16.mxu0 0
      %1952 = vmatpush2.bf16.msra.mxu0 0
      %1953 = vmatprep.subr.bf16.mxu0 0
      %1954 = vmatpush2.bf16.msra.mxu0 0
      %1955 = vmatprep.subr.bf16.mxu0 0
      %1956 = vmatpush2.bf16.msra.mxu0 0
      %1957 = vmatprep.subr.bf16.mxu0 0
      %1958 = vmatpush2.bf16.msra.mxu0 0
      %1959 = vmatprep.subr.bf16.mxu0 0
      %1960 = vmatpush2.bf16.msra.mxu0 0
      %1961 = vmatprep.subr.bf16.mxu0 0
      %1962 = vmatpush2.bf16.msra.mxu0 %v1933
      %1963 = vmatprep.subr.bf16.mxu0 0
      %1964 = vmatpush2.bf16.msra.mxu0 %v1906
      %1965 = vmatprep.subr.bf16.mxu0 0
      %1966 = vmatpush2.bf16.msra.mxu0 %v1905
      %1967 = vmatprep.mubr.bf16.mxu0 %v1920
      %1968 = vmatmul.mubr.bf16.gmra.mxu0 %v1826
      %v1969 = vpop.f32.mrf.mxu0
      %v1970 = vadd.f32 0.0, %v1969
      %v1971 = vpop.f32.mrf.mxu0
      %v1972 = vpop.f32.mrf.mxu0
      %v1973 = vadd.f32 0.0, %v1972
      %v1974 = vpop.f32.mrf.mxu0
      %1975 = vmatprep.mubr.bf16.mxu0 %v1923
      %1976 = vmatmul.mubr.bf16.gmra.mxu0 %v1828
      %v1977 = vpop.f32.mrf.mxu0
      %v1978 = vadd.f32 0.0, %v1977
      %v1979 = vpop.f32.mrf.mxu0
      %v1980 = vpop.f32.mrf.mxu0
      %v1981 = vadd.f32 0.0, %v1980
      %v1982 = vpop.f32.mrf.mxu0
      %1983 = vmatprep.mubr.bf16.mxu0 %v1926
      %1984 = vmatmul.mubr.bf16.gmra.mxu0 %v1830
      %v1985 = vpop.f32.mrf.mxu0
      %v1986 = vadd.f32 0.0, %v1985
      %v1987 = vpop.f32.mrf.mxu0
      %v1988 = vpop.f32.mrf.mxu0
      %v1989 = vadd.f32 0.0, %v1988
      %v1990 = vpop.f32.mrf.mxu0
      %1991 = vmatprep.mubr.bf16.mxu0 %v1929
      %1992 = vmatmul.mubr.bf16.gmra.mxu0 %v1832
      %v1993 = vpop.f32.mrf.mxu0
      %v1994 = vadd.f32 0.0, %v1993
      %v1995 = vpop.f32.mrf.mxu0
      %v1996 = vpop.f32.mrf.mxu0
      %v1997 = vadd.f32 0.0, %v1996
      %v1998 = vpop.f32.mrf.mxu0
      %1999 = vdwg.mxu0
      %v2000 = vpack.c.bf16 %v1973, %v1970
      %v2001 = vpack.c.bf16 %v1981, %v1978
      %v2002 = vpack.c.bf16 %v1989, %v1986
      %v2003 = vpack.c.bf16 %v1997, %v1994
      %v2005 = vshrl.u32 %v2000, 16
      %v2007 = vshll.u32 %v2000, 16
      %v2009 = vrot.slane %v2007, 1
      %v2010 = vor.u32 %v2005, %v2009
      %v2012 = vshll.u32 %v2001, 16
      %v2014 = vrot.slane %v2012, 1
      %v2015 = vsel %vm800, %v2010, %v2014
      %v2016 = vshrl.u32 %v2001, 16
      %v2018 = vor.u32 %v2016, %v2014
      %v2020 = vshll.u32 %v2002, 16
      %v2022 = vrot.slane %v2020, 1
      %v2023 = vsel %vm800, %v2018, %v2022
      %v2024 = vshrl.u32 %v2002, 16
      %v2026 = vor.u32 %v2024, %v2022
      %v2028 = vshll.u32 %v2003, 16
      %v2030 = vrot.slane %v2028, 1
      %v2031 = vsel %vm800, %v2026, %v2030
      %v2032 = vshrl.u32 %v2003, 16
      %v2034 = vor.u32 %v2032, %v2030
      %v2035 = vsel %vm800, %v2034, %v835
      %v2040 = vmax.bf16 %v2000, %v2015
      %v2041 = vmax.bf16 %v2001, %v2023
      %v2042 = vmax.bf16 %v2002, %v2031
      %v2043 = vmax.bf16 %v2003, %v2035
      %v2048 = vunpack.c.l.b16 %v2040
      %v2049 = vunpack.c.h.b16 %v2040
      %v2050 = vunpack.c.l.b16 %v2041
      %v2051 = vunpack.c.l.b16 %v2042
      %v2052 = vunpack.c.h.b16 %v2042
      %v2053 = vunpack.c.l.b16 %v2043
      %v2054 = vld [vmem:[%s5] sm:$0xff]
      %v2055 = vld [vmem:[%s5 + $0x8] sm:$0xff]
      %v2056 = vld [vmem:[%s5 + $0x10] sm:$0xff]
      %v2057 = vld [vmem:[%s5 + $0x18] sm:$0xff]
      %v2058 = vld [vmem:[%s5 + $0x20] sm:$0xff]
      %v2059 = vld [vmem:[%s5 + $0x28] sm:$0xff]
      %v2060 = vld [vmem:[%s5 + $0x30] sm:$0xff]
      %v2061 = vld [vmem:[%s5 + $0x38] sm:$0xff]
      %v2062 = vld [vmem:[%s5 + $0x40] sm:$0xff]
      %v2063 = vld [vmem:[%s5 + $0x48] sm:$0xff]
      %v2064 = vld [vmem:[%s5 + $0x50] sm:$0x33]
      %v2065 = vunpack.c.h.b16 %v2041
      %v2066 = vunpack.c.h.b16 %v2043
      %v2067 = vpack.c.b16 %v2048, %v2048
      %v2068 = vpack.c.b16 %v2049, %v2049
      %v2069 = vpack.c.b16 %v2050, %v2050
      %v2070 = vpack.c.b16 %v2065, %v2065
      %v2071 = vpack.c.b16 %v2051, %v2051
      %v2072 = vpack.c.b16 %v2052, %v2052
      %v2073 = vpack.c.b16 %v2053, %v2053
      %v2074 = vpack.c.b16 %v2066, %v2066
      %vm2075 = vcmask 1042432
      %vm2076 = vcmask 1046532
      %vm2077 = vmor %vm2075, %vm2076
      %v2078 = vrot.slane %v2067, 5
      %v2079 = vrot.slane %v2078, 4
      %v2080 = vrot.slane %v2068, 5
      %v2081 = vsel %vm2077, %v2079, %v2080
      %v2082 = vrot.slane %v2080, 4
      %v2083 = vrot.slane %v2069, 5
      %v2084 = vsel %vm2077, %v2082, %v2083
      %v2085 = vrot.slane %v2083, 4
      %v2086 = vrot.slane %v2070, 5
      %v2087 = vsel %vm2077, %v2085, %v2086
      %v2088 = vrot.slane %v2071, 5
      %v2089 = vrot.slane %v2088, 4
      %v2090 = vrot.slane %v2072, 5
      %v2091 = vsel %vm2077, %v2089, %v2090
      %v2092 = vrot.slane %v2090, 4
      %v2093 = vrot.slane %v2073, 5
      %v2094 = vsel %vm2077, %v2092, %v2093
      %v2095 = vrot.slane %v2093, 4
      %v2096 = vrot.slane %v2074, 5
      %v2097 = vsel %vm2077, %v2095, %v2096
      %s2098 = scalar_lea.vmem %s5, 88
      %v2099 = vld [vmem:[%s2098] sm:$0xff]
      %v2100 = vld [vmem:[%s2098 + $0x8] sm:$0xff]
      %v2101 = vld [vmem:[%s2098 + $0x10] sm:$0xff]
      %v2102 = vld [vmem:[%s2098 + $0x18] sm:$0xff]
      %v2103 = vld [vmem:[%s2098 + $0x20] sm:$0xff]
      %v2104 = vld [vmem:[%s2098 + $0x28] sm:$0xff]
      %v2105 = vld [vmem:[%s2098 + $0x30] sm:$0xff]
      %v2106 = vld [vmem:[%s2098 + $0x38] sm:$0xff]
      %v2107 = vld [vmem:[%s2098 + $0x40] sm:$0xff]
      %v2108 = vld [vmem:[%s2098 + $0x48] sm:$0xff]
      %v2109 = vld [vmem:[%s2098 + $0x50] sm:$0x33]
      %v2110 = vunpack.c.l.b16 %v2081
      %v2111 = vunpack.c.l.b16 %v2084
      %v2112 = vunpack.c.l.b16 %v2087
      %v2113 = vunpack.c.l.b16 %v2091
      %v2114 = vunpack.c.l.b16 %v2094
      %v2115 = vunpack.c.l.b16 %v2097
      %v2116 = vpack.c.b16 %v2111, %v2110
      %v2117 = vpack.c.b16 %v2113, %v2112
      %v2118 = vpack.c.b16 %v2115, %v2114
      %v2130 = vunpack.c.l.b16 %v2099
      %v2131 = vunpack.c.h.b16 %v2099
      %v2132 = vunpack.c.l.b16 %v2100
      %v2133 = vunpack.c.h.b16 %v2100
      %v2134 = vunpack.c.l.b16 %v2101
      %v2135 = vunpack.c.h.b16 %v2101
      %v2136 = vunpack.c.l.b16 %v2102
      %v2137 = vunpack.c.h.b16 %v2102
      %v2138 = vunpack.c.l.b16 %v2103
      %v2139 = vunpack.c.h.b16 %v2103
      %v2140 = vunpack.c.l.b16 %v2104
      %v2141 = vunpack.c.h.b16 %v2104
      %v2142 = vunpack.c.l.b16 %v2105
      %v2143 = vunpack.c.h.b16 %v2105
      %v2144 = vunpack.c.l.b16 %v2106
      %v2145 = vunpack.c.h.b16 %v2106
      %v2146 = vunpack.c.l.b16 %v2107
      %v2147 = vunpack.c.h.b16 %v2107
      %v2148 = vunpack.c.l.b16 %v2108
      %v2149 = vunpack.c.h.b16 %v2108
      %v2150 = vunpack.c.l.b16 %v2109
      %v2151 = vunpack.c.h.b16 %v2109
      %v2152 = vpack.c.b16 %v2132, %v2130
      %v2153 = vpack.c.b16 %v2133, %v2131
      %v2154 = vpack.c.b16 %v2136, %v2134
      %v2155 = vpack.c.b16 %v2137, %v2135
      %v2156 = vpack.c.b16 %v2140, %v2138
      %v2157 = vpack.c.b16 %v2141, %v2139
      %v2158 = vpack.c.b16 %v2144, %v2142
      %v2159 = vpack.c.b16 %v2145, %v2143
      %v2160 = vpack.c.b16 %v2148, %v2146
      %v2161 = vpack.c.b16 %v2149, %v2147
      %v2162 = vpack.c.b16 %v2150, %v2150
      %v2163 = vpack.c.b16 %v2151, %v2151
      %vm2174 = vcmask 687104
      %v2176 = vsel %vm2174, %v2116, 0
      %v2179 = vsel %vm2174, %v2117, 0
      %v2182 = vsel %vm2174, %v2118, 0
      %vm2184 = vcmask 1041408
      %v2186 = vsel %vm2184, %v2162, 0
      %v2189 = vsel %vm2184, %v2163, 0
      %2191 = vmatprep.subr.bf16.mxu0 0
      %2192 = vmatpush1.bf16.msra.mxu0 0
      %2193 = vmatprep.subr.bf16.mxu0 0
      %2194 = vmatpush1.bf16.msra.mxu0 0
      %2195 = vmatprep.subr.bf16.mxu0 %v2189
      %2196 = vmatpush1.bf16.msra.mxu0 %v2186
      %2197 = vmatprep.subr.bf16.mxu0 %v2161
      %2198 = vmatpush1.bf16.msra.mxu0 %v2160
      %2199 = vmatprep.subr.bf16.mxu0 %v2159
      %2200 = vmatpush1.bf16.msra.mxu0 %v2158
      %2201 = vmatprep.subr.bf16.mxu0 %v2157
      %2202 = vmatpush1.bf16.msra.mxu0 %v2156
      %2203 = vmatprep.subr.bf16.mxu0 %v2155
      %2204 = vmatpush1.bf16.msra.mxu0 %v2154
      %2205 = vmatprep.subr.bf16.mxu0 %v2153
      %2206 = vmatpush1.bf16.msra.mxu0 %v2152
      %2207 = vmatprep.subr.bf16.mxu0 0
      %2208 = vmatpush2.bf16.msra.mxu0 0
      %2209 = vmatprep.subr.bf16.mxu0 0
      %2210 = vmatpush2.bf16.msra.mxu0 0
      %2211 = vmatprep.subr.bf16.mxu0 0
      %2212 = vmatpush2.bf16.msra.mxu0 0
      %2213 = vmatprep.subr.bf16.mxu0 0
      %2214 = vmatpush2.bf16.msra.mxu0 0
      %2215 = vmatprep.subr.bf16.mxu0 0
      %2216 = vmatpush2.bf16.msra.mxu0 0
      %2217 = vmatprep.subr.bf16.mxu0 0
      %2218 = vmatpush2.bf16.msra.mxu0 0
      %2219 = vmatprep.subr.bf16.mxu0 0
      %2220 = vmatpush2.bf16.msra.mxu0 0
      %2221 = vmatprep.subr.bf16.mxu0 0
      %2222 = vmatpush2.bf16.msra.mxu0 0
      %2223 = vmatprep.mubr.bf16.mxu0 0
      %2224 = vmatmul.mubr.bf16.gmra.mxu0 %v2176
      %v2225 = vpop.f32.mrf.mxu0
      %v2226 = vadd.f32 0.0, %v2225
      %v2227 = vpop.f32.mrf.mxu0
      %v2228 = vadd.f32 0.0, %v2227
      %v2229 = vpop.f32.mrf.mxu0
      %v2230 = vadd.f32 0.0, %v2229
      %v2231 = vpop.f32.mrf.mxu0
      %v2232 = vadd.f32 0.0, %v2231
      %2233 = vmatprep.mubr.bf16.mxu0 0
      %2234 = vmatmul.mubr.bf16.gmra.mxu0 %v2179
      %v2235 = vpop.f32.mrf.mxu0
      %v2236 = vadd.f32 0.0, %v2235
      %v2237 = vpop.f32.mrf.mxu0
      %v2238 = vadd.f32 0.0, %v2237
      %v2239 = vpop.f32.mrf.mxu0
      %v2240 = vadd.f32 0.0, %v2239
      %v2241 = vpop.f32.mrf.mxu0
      %v2242 = vadd.f32 0.0, %v2241
      %2243 = vmatprep.mubr.bf16.mxu0 0
      %2244 = vmatmul.mubr.bf16.gmra.mxu0 %v2182
      %v2245 = vpop.f32.mrf.mxu0
      %v2246 = vadd.f32 0.0, %v2245
      %v2247 = vpop.f32.mrf.mxu0
      %v2248 = vadd.f32 0.0, %v2247
      %v2249 = vpop.f32.mrf.mxu0
      %v2250 = vadd.f32 0.0, %v2249
      %v2251 = vpop.f32.mrf.mxu0
      %v2252 = vadd.f32 0.0, %v2251
      %2253 = vdwg.mxu0
      %v2254 = vpack.c.b16 %v2049, %v2048
      %v2255 = vpack.c.b16 %v2051, %v2050
      %v2256 = vpack.c.b16 %v2053, %v2052
      %v2268 = vunpack.c.l.b16 %v2054
      %v2269 = vunpack.c.h.b16 %v2054
      %v2270 = vunpack.c.l.b16 %v2055
      %v2271 = vunpack.c.h.b16 %v2055
      %v2272 = vunpack.c.l.b16 %v2056
      %v2273 = vunpack.c.h.b16 %v2056
      %v2274 = vunpack.c.l.b16 %v2057
      %v2275 = vunpack.c.h.b16 %v2057
      %v2276 = vunpack.c.l.b16 %v2058
      %v2277 = vunpack.c.h.b16 %v2058
      %v2278 = vunpack.c.l.b16 %v2059
      %v2279 = vunpack.c.h.b16 %v2059
      %v2280 = vunpack.c.l.b16 %v2060
      %v2281 = vunpack.c.h.b16 %v2060
      %v2282 = vunpack.c.l.b16 %v2061
      %v2283 = vunpack.c.h.b16 %v2061
      %v2284 = vunpack.c.l.b16 %v2062
      %v2285 = vunpack.c.h.b16 %v2062
      %v2286 = vunpack.c.l.b16 %v2063
      %v2287 = vunpack.c.h.b16 %v2063
      %v2288 = vunpack.c.l.b16 %v2064
      %v2289 = vunpack.c.h.b16 %v2064
      %v2290 = vpack.c.b16 %v2270, %v2268
      %v2291 = vpack.c.b16 %v2271, %v2269
      %v2292 = vpack.c.b16 %v2274, %v2272
      %v2293 = vpack.c.b16 %v2275, %v2273
      %v2294 = vpack.c.b16 %v2278, %v2276
      %v2295 = vpack.c.b16 %v2279, %v2277
      %v2296 = vpack.c.b16 %v2282, %v2280
      %v2297 = vpack.c.b16 %v2283, %v2281
      %v2298 = vpack.c.b16 %v2286, %v2284
      %v2299 = vpack.c.b16 %v2287, %v2285
      %v2300 = vpack.c.b16 %v2288, %v2288
      %v2301 = vpack.c.b16 %v2289, %v2289
      %v2313 = vsel %vm2174, %v2254, 0
      %v2316 = vsel %vm2174, %v2255, 0
      %v2319 = vsel %vm2174, %v2256, 0
      %v2322 = vsel %vm2184, %v2300, 0
      %v2325 = vsel %vm2184, %v2301, 0
      %2327 = vmatprep.subr.bf16.mxu0 0
      %2328 = vmatpush1.bf16.msra.mxu0 0
      %2329 = vmatprep.subr.bf16.mxu0 0
      %2330 = vmatpush1.bf16.msra.mxu0 0
      %2331 = vmatprep.subr.bf16.mxu0 %v2325
      %2332 = vmatpush1.bf16.msra.mxu0 %v2322
      %2333 = vmatprep.subr.bf16.mxu0 %v2299
      %2334 = vmatpush1.bf16.msra.mxu0 %v2298
      %2335 = vmatprep.subr.bf16.mxu0 %v2297
      %2336 = vmatpush1.bf16.msra.mxu0 %v2296
      %2337 = vmatprep.subr.bf16.mxu0 %v2295
      %2338 = vmatpush1.bf16.msra.mxu0 %v2294
      %2339 = vmatprep.subr.bf16.mxu0 %v2293
      %2340 = vmatpush1.bf16.msra.mxu0 %v2292
      %2341 = vmatprep.subr.bf16.mxu0 %v2291
      %2342 = vmatpush1.bf16.msra.mxu0 %v2290
      %2343 = vmatprep.subr.bf16.mxu0 0
      %2344 = vmatpush2.bf16.msra.mxu0 0
      %2345 = vmatprep.subr.bf16.mxu0 0
      %2346 = vmatpush2.bf16.msra.mxu0 0
      %2347 = vmatprep.subr.bf16.mxu0 0
      %2348 = vmatpush2.bf16.msra.mxu0 0
      %2349 = vmatprep.subr.bf16.mxu0 0
      %2350 = vmatpush2.bf16.msra.mxu0 0
      %2351 = vmatprep.subr.bf16.mxu0 0
      %2352 = vmatpush2.bf16.msra.mxu0 0
      %2353 = vmatprep.subr.bf16.mxu0 0
      %2354 = vmatpush2.bf16.msra.mxu0 0
      %2355 = vmatprep.subr.bf16.mxu0 0
      %2356 = vmatpush2.bf16.msra.mxu0 0
      %2357 = vmatprep.subr.bf16.mxu0 0
      %2358 = vmatpush2.bf16.msra.mxu0 0
      %2359 = vmatprep.mubr.bf16.mxu0 0
      %2360 = vmatmul.mubr.bf16.gmra.mxu0 %v2313
      %v2361 = vpop.f32.mrf.mxu0
      %v2362 = vadd.f32 %v2226, %v2361
      %v2363 = vpop.f32.mrf.mxu0
      %v2364 = vadd.f32 %v2228, %v2363
      %v2365 = vpop.f32.mrf.mxu0
      %v2366 = vadd.f32 %v2230, %v2365
      %v2367 = vpop.f32.mrf.mxu0
      %v2368 = vadd.f32 %v2232, %v2367
      %2369 = vmatprep.mubr.bf16.mxu0 0
      %2370 = vmatmul.mubr.bf16.gmra.mxu0 %v2316
      %v2371 = vpop.f32.mrf.mxu0
      %v2372 = vadd.f32 %v2236, %v2371
      %v2373 = vpop.f32.mrf.mxu0
      %v2374 = vadd.f32 %v2238, %v2373
      %v2375 = vpop.f32.mrf.mxu0
      %v2376 = vadd.f32 %v2240, %v2375
      %v2377 = vpop.f32.mrf.mxu0
      %v2378 = vadd.f32 %v2242, %v2377
      %2379 = vmatprep.mubr.bf16.mxu0 0
      %2380 = vmatmul.mubr.bf16.gmra.mxu0 %v2319
      %v2381 = vpop.f32.mrf.mxu0
      %v2382 = vadd.f32 %v2246, %v2381
      %v2383 = vpop.f32.mrf.mxu0
      %v2384 = vadd.f32 %v2248, %v2383
      %v2385 = vpop.f32.mrf.mxu0
      %v2386 = vadd.f32 %v2250, %v2385
      %v2387 = vpop.f32.mrf.mxu0
      %v2388 = vadd.f32 %v2252, %v2387
      %2389 = vdwg.mxu0
      %vm2390 = vcmask 1041408
      %vm2391 = vcmask 1045508
      %vm2392 = vmor %vm2390, %vm2391
      %v2393 = vrot.slane %v2067, 6
      %v2394 = vrot.slane %v2393, 4
      %v2395 = vrot.slane %v2068, 6
      %v2396 = vsel %vm2392, %v2394, %v2395
      %v2397 = vrot.slane %v2395, 4
      %v2398 = vrot.slane %v2069, 6
      %v2399 = vsel %vm2392, %v2397, %v2398
      %v2400 = vrot.slane %v2398, 4
      %v2401 = vrot.slane %v2070, 6
      %v2402 = vsel %vm2392, %v2400, %v2401
      %v2403 = vrot.slane %v2071, 6
      %v2404 = vrot.slane %v2403, 4
      %v2405 = vrot.slane %v2072, 6
      %v2406 = vsel %vm2392, %v2404, %v2405
      %v2407 = vrot.slane %v2405, 4
      %v2408 = vrot.slane %v2073, 6
      %v2409 = vsel %vm2392, %v2407, %v2408
      %v2410 = vrot.slane %v2408, 4
      %v2411 = vrot.slane %v2074, 6
      %v2412 = vsel %vm2392, %v2410, %v2411
      %s2413 = scalar_lea.vmem %s5, 176
      %v2414 = vld [vmem:[%s2413] sm:$0xff]
      %v2415 = vld [vmem:[%s2413 + $0x8] sm:$0xff]
      %v2416 = vld [vmem:[%s2413 + $0x10] sm:$0xff]
      %v2417 = vld [vmem:[%s2413 + $0x18] sm:$0xff]
      %v2418 = vld [vmem:[%s2413 + $0x20] sm:$0xff]
      %v2419 = vld [vmem:[%s2413 + $0x28] sm:$0xff]
      %v2420 = vld [vmem:[%s2413 + $0x30] sm:$0xff]
      %v2421 = vld [vmem:[%s2413 + $0x38] sm:$0xff]
      %v2422 = vld [vmem:[%s2413 + $0x40] sm:$0xff]
      %v2423 = vld [vmem:[%s2413 + $0x48] sm:$0xff]
      %v2424 = vld [vmem:[%s2413 + $0x50] sm:$0x33]
      %v2425 = vunpack.c.l.b16 %v2396
      %v2426 = vunpack.c.l.b16 %v2399
      %v2427 = vunpack.c.l.b16 %v2402
      %v2428 = vunpack.c.l.b16 %v2406
      %v2429 = vunpack.c.l.b16 %v2409
      %v2430 = vunpack.c.l.b16 %v2412
      %v2431 = vpack.c.b16 %v2426, %v2425
      %v2432 = vpack.c.b16 %v2428, %v2427
      %v2433 = vpack.c.b16 %v2430, %v2429
      %v2445 = vunpack.c.l.b16 %v2414
      %v2446 = vunpack.c.h.b16 %v2414
      %v2447 = vunpack.c.l.b16 %v2415
      %v2448 = vunpack.c.h.b16 %v2415
      %v2449 = vunpack.c.l.b16 %v2416
      %v2450 = vunpack.c.h.b16 %v2416
      %v2451 = vunpack.c.l.b16 %v2417
      %v2452 = vunpack.c.h.b16 %v2417
      %v2453 = vunpack.c.l.b16 %v2418
      %v2454 = vunpack.c.h.b16 %v2418
      %v2455 = vunpack.c.l.b16 %v2419
      %v2456 = vunpack.c.h.b16 %v2419
      %v2457 = vunpack.c.l.b16 %v2420
      %v2458 = vunpack.c.h.b16 %v2420
      %v2459 = vunpack.c.l.b16 %v2421
      %v2460 = vunpack.c.h.b16 %v2421
      %v2461 = vunpack.c.l.b16 %v2422
      %v2462 = vunpack.c.h.b16 %v2422
      %v2463 = vunpack.c.l.b16 %v2423
      %v2464 = vunpack.c.h.b16 %v2423
      %v2465 = vunpack.c.l.b16 %v2424
      %v2466 = vunpack.c.h.b16 %v2424
      %v2467 = vpack.c.b16 %v2447, %v2445
      %v2468 = vpack.c.b16 %v2448, %v2446
      %v2469 = vpack.c.b16 %v2451, %v2449
      %v2470 = vpack.c.b16 %v2452, %v2450
      %v2471 = vpack.c.b16 %v2455, %v2453
      %v2472 = vpack.c.b16 %v2456, %v2454
      %v2473 = vpack.c.b16 %v2459, %v2457
      %v2474 = vpack.c.b16 %v2460, %v2458
      %v2475 = vpack.c.b16 %v2463, %v2461
      %v2476 = vpack.c.b16 %v2464, %v2462
      %v2477 = vpack.c.b16 %v2465, %v2465
      %v2478 = vpack.c.b16 %v2466, %v2466
      %v2490 = vsel %vm2174, %v2431, 0
      %v2493 = vsel %vm2174, %v2432, 0
      %v2496 = vsel %vm2174, %v2433, 0
      %v2499 = vsel %vm2184, %v2477, 0
      %v2502 = vsel %vm2184, %v2478, 0
      %2504 = vmatprep.subr.bf16.mxu0 0
      %2505 = vmatpush1.bf16.msra.mxu0 0
      %2506 = vmatprep.subr.bf16.mxu0 0
      %2507 = vmatpush1.bf16.msra.mxu0 0
      %2508 = vmatprep.subr.bf16.mxu0 %v2502
      %2509 = vmatpush1.bf16.msra.mxu0 %v2499
      %2510 = vmatprep.subr.bf16.mxu0 %v2476
      %2511 = vmatpush1.bf16.msra.mxu0 %v2475
      %2512 = vmatprep.subr.bf16.mxu0 %v2474
      %2513 = vmatpush1.bf16.msra.mxu0 %v2473
      %2514 = vmatprep.subr.bf16.mxu0 %v2472
      %2515 = vmatpush1.bf16.msra.mxu0 %v2471
      %2516 = vmatprep.subr.bf16.mxu0 %v2470
      %2517 = vmatpush1.bf16.msra.mxu0 %v2469
      %2518 = vmatprep.subr.bf16.mxu0 %v2468
      %2519 = vmatpush1.bf16.msra.mxu0 %v2467
      %2520 = vmatprep.subr.bf16.mxu0 0
      %2521 = vmatpush2.bf16.msra.mxu0 0
      %2522 = vmatprep.subr.bf16.mxu0 0
      %2523 = vmatpush2.bf16.msra.mxu0 0
      %2524 = vmatprep.subr.bf16.mxu0 0
      %2525 = vmatpush2.bf16.msra.mxu0 0
      %2526 = vmatprep.subr.bf16.mxu0 0
      %2527 = vmatpush2.bf16.msra.mxu0 0
      %2528 = vmatprep.subr.bf16.mxu0 0
      %2529 = vmatpush2.bf16.msra.mxu0 0
      %2530 = vmatprep.subr.bf16.mxu0 0
      %2531 = vmatpush2.bf16.msra.mxu0 0
      %2532 = vmatprep.subr.bf16.mxu0 0
      %2533 = vmatpush2.bf16.msra.mxu0 0
      %2534 = vmatprep.subr.bf16.mxu0 0
      %2535 = vmatpush2.bf16.msra.mxu0 0
      %2536 = vmatprep.mubr.bf16.mxu0 0
      %2537 = vmatmul.mubr.bf16.gmra.mxu0 %v2490
      %v2538 = vpop.f32.mrf.mxu0
      %v2539 = vadd.f32 0.0, %v2538
      %v2540 = vpop.f32.mrf.mxu0
      %v2541 = vadd.f32 0.0, %v2540
      %v2542 = vpop.f32.mrf.mxu0
      %v2543 = vadd.f32 0.0, %v2542
      %v2544 = vpop.f32.mrf.mxu0
      %v2545 = vadd.f32 0.0, %v2544
      %2546 = vmatprep.mubr.bf16.mxu0 0
      %2547 = vmatmul.mubr.bf16.gmra.mxu0 %v2493
      %v2548 = vpop.f32.mrf.mxu0
      %v2549 = vadd.f32 0.0, %v2548
      %v2550 = vpop.f32.mrf.mxu0
      %v2551 = vadd.f32 0.0, %v2550
      %v2552 = vpop.f32.mrf.mxu0
      %v2553 = vadd.f32 0.0, %v2552
      %v2554 = vpop.f32.mrf.mxu0
      %v2555 = vadd.f32 0.0, %v2554
      %2556 = vmatprep.mubr.bf16.mxu0 0
      %2557 = vmatmul.mubr.bf16.gmra.mxu0 %v2496
      %v2558 = vpop.f32.mrf.mxu0
      %v2559 = vadd.f32 0.0, %v2558
      %v2560 = vpop.f32.mrf.mxu0
      %v2561 = vadd.f32 0.0, %v2560
      %v2562 = vpop.f32.mrf.mxu0
      %v2563 = vadd.f32 0.0, %v2562
      %v2564 = vpop.f32.mrf.mxu0
      %v2565 = vadd.f32 0.0, %v2564
      %2566 = vdwg.mxu0
      %v2567 = vadd.f32 %v2362, %v2539
      %v2568 = vadd.f32 %v2364, %v2541
      %v2569 = vadd.f32 %v2366, %v2543
      %v2570 = vadd.f32 %v2368, %v2545
      %v2571 = vadd.f32 %v2372, %v2549
      %v2572 = vadd.f32 %v2374, %v2551
      %v2573 = vadd.f32 %v2376, %v2553
      %v2574 = vadd.f32 %v2378, %v2555
      %v2575 = vadd.f32 %v2382, %v2559
      %v2576 = vadd.f32 %v2384, %v2561
      %v2577 = vadd.f32 %v2386, %v2563
      %v2578 = vadd.f32 %v2388, %v2565
      %vm2579 = vcmask 1040384
      %vm2580 = vcmask 1044484
      %vm2581 = vmor %vm2579, %vm2580
      %v2582 = vrot.slane %v2067, 7
      %v2583 = vrot.slane %v2582, 4
      %v2584 = vrot.slane %v2068, 7
      %v2585 = vsel %vm2581, %v2583, %v2584
      %v2586 = vrot.slane %v2584, 4
      %v2587 = vrot.slane %v2069, 7
      %v2588 = vsel %vm2581, %v2586, %v2587
      %v2589 = vrot.slane %v2587, 4
      %v2590 = vrot.slane %v2070, 7
      %v2591 = vsel %vm2581, %v2589, %v2590
      %v2592 = vrot.slane %v2071, 7
      %v2593 = vrot.slane %v2592, 4
      %v2594 = vrot.slane %v2072, 7
      %v2595 = vsel %vm2581, %v2593, %v2594
      %v2596 = vrot.slane %v2594, 4
      %v2597 = vrot.slane %v2073, 7
      %v2598 = vsel %vm2581, %v2596, %v2597
      %v2599 = vrot.slane %v2597, 4
      %v2600 = vrot.slane %v2074, 7
      %v2601 = vsel %vm2581, %v2599, %v2600
      %s2602 = scalar_lea.vmem %s5, 264
      %v2603 = vld [vmem:[%s2602] sm:$0xff]
      %v2604 = vld [vmem:[%s2602 + $0x8] sm:$0xff]
      %v2605 = vld [vmem:[%s2602 + $0x10] sm:$0xff]
      %v2606 = vld [vmem:[%s2602 + $0x18] sm:$0xff]
      %v2607 = vld [vmem:[%s2602 + $0x20] sm:$0xff]
      %v2608 = vld [vmem:[%s2602 + $0x28] sm:$0xff]
      %v2609 = vld [vmem:[%s2602 + $0x30] sm:$0xff]
      %v2610 = vld [vmem:[%s2602 + $0x38] sm:$0xff]
      %v2611 = vld [vmem:[%s2602 + $0x40] sm:$0xff]
      %v2612 = vld [vmem:[%s2602 + $0x48] sm:$0xff]
      %v2613 = vld [vmem:[%s2602 + $0x50] sm:$0x33]
      %v2614 = vunpack.c.l.b16 %v2585
      %v2615 = vunpack.c.l.b16 %v2588
      %v2616 = vunpack.c.l.b16 %v2591
      %v2617 = vunpack.c.l.b16 %v2595
      %v2618 = vunpack.c.l.b16 %v2598
      %v2619 = vunpack.c.l.b16 %v2601
      %v2620 = vpack.c.b16 %v2615, %v2614
      %v2621 = vpack.c.b16 %v2617, %v2616
      %v2622 = vpack.c.b16 %v2619, %v2618
      %v2634 = vunpack.c.l.b16 %v2603
      %v2635 = vunpack.c.h.b16 %v2603
      %v2636 = vunpack.c.l.b16 %v2604
      %v2637 = vunpack.c.h.b16 %v2604
      %v2638 = vunpack.c.l.b16 %v2605
      %v2639 = vunpack.c.h.b16 %v2605
      %v2640 = vunpack.c.l.b16 %v2606
      %v2641 = vunpack.c.h.b16 %v2606
      %v2642 = vunpack.c.l.b16 %v2607
      %v2643 = vunpack.c.h.b16 %v2607
      %v2644 = vunpack.c.l.b16 %v2608
      %v2645 = vunpack.c.h.b16 %v2608
      %v2646 = vunpack.c.l.b16 %v2609
      %v2647 = vunpack.c.h.b16 %v2609
      %v2648 = vunpack.c.l.b16 %v2610
      %v2649 = vunpack.c.h.b16 %v2610
      %v2650 = vunpack.c.l.b16 %v2611
      %v2651 = vunpack.c.h.b16 %v2611
      %v2652 = vunpack.c.l.b16 %v2612
      %v2653 = vunpack.c.h.b16 %v2612
      %v2654 = vunpack.c.l.b16 %v2613
      %v2655 = vunpack.c.h.b16 %v2613
      %v2656 = vpack.c.b16 %v2636, %v2634
      %v2657 = vpack.c.b16 %v2637, %v2635
      %v2658 = vpack.c.b16 %v2640, %v2638
      %v2659 = vpack.c.b16 %v2641, %v2639
      %v2660 = vpack.c.b16 %v2644, %v2642
      %v2661 = vpack.c.b16 %v2645, %v2643
      %v2662 = vpack.c.b16 %v2648, %v2646
      %v2663 = vpack.c.b16 %v2649, %v2647
      %v2664 = vpack.c.b16 %v2652, %v2650
      %v2665 = vpack.c.b16 %v2653, %v2651
      %v2666 = vpack.c.b16 %v2654, %v2654
      %v2667 = vpack.c.b16 %v2655, %v2655
      %v2679 = vsel %vm2174, %v2620, 0
      %v2682 = vsel %vm2174, %v2621, 0
      %v2685 = vsel %vm2174, %v2622, 0
      %v2688 = vsel %vm2184, %v2666, 0
      %v2691 = vsel %vm2184, %v2667, 0
      %2693 = vmatprep.subr.bf16.mxu0 0
      %2694 = vmatpush1.bf16.msra.mxu0 0
      %2695 = vmatprep.subr.bf16.mxu0 0
      %2696 = vmatpush1.bf16.msra.mxu0 0
      %2697 = vmatprep.subr.bf16.mxu0 %v2691
      %2698 = vmatpush1.bf16.msra.mxu0 %v2688
      %2699 = vmatprep.subr.bf16.mxu0 %v2665
      %2700 = vmatpush1.bf16.msra.mxu0 %v2664
      %2701 = vmatprep.subr.bf16.mxu0 %v2663
      %2702 = vmatpush1.bf16.msra.mxu0 %v2662
      %2703 = vmatprep.subr.bf16.mxu0 %v2661
      %2704 = vmatpush1.bf16.msra.mxu0 %v2660
      %2705 = vmatprep.subr.bf16.mxu0 %v2659
      %2706 = vmatpush1.bf16.msra.mxu0 %v2658
      %2707 = vmatprep.subr.bf16.mxu0 %v2657
      %2708 = vmatpush1.bf16.msra.mxu0 %v2656
      %2709 = vmatprep.subr.bf16.mxu0 0
      %2710 = vmatpush2.bf16.msra.mxu0 0
      %2711 = vmatprep.subr.bf16.mxu0 0
      %2712 = vmatpush2.bf16.msra.mxu0 0
      %2713 = vmatprep.subr.bf16.mxu0 0
      %2714 = vmatpush2.bf16.msra.mxu0 0
      %2715 = vmatprep.subr.bf16.mxu0 0
      %2716 = vmatpush2.bf16.msra.mxu0 0
      %2717 = vmatprep.subr.bf16.mxu0 0
      %2718 = vmatpush2.bf16.msra.mxu0 0
      %2719 = vmatprep.subr.bf16.mxu0 0
      %2720 = vmatpush2.bf16.msra.mxu0 0
      %2721 = vmatprep.subr.bf16.mxu0 0
      %2722 = vmatpush2.bf16.msra.mxu0 0
      %2723 = vmatprep.subr.bf16.mxu0 0
      %2724 = vmatpush2.bf16.msra.mxu0 0
      %2725 = vmatprep.mubr.bf16.mxu0 0
      %2726 = vmatmul.mubr.bf16.gmra.mxu0 %v2679
      %v2727 = vpop.f32.mrf.mxu0
      %v2728 = vadd.f32 0.0, %v2727
      %v2729 = vpop.f32.mrf.mxu0
      %v2730 = vadd.f32 0.0, %v2729
      %v2731 = vpop.f32.mrf.mxu0
      %v2732 = vadd.f32 0.0, %v2731
      %v2733 = vpop.f32.mrf.mxu0
      %v2734 = vadd.f32 0.0, %v2733
      %2735 = vmatprep.mubr.bf16.mxu0 0
      %2736 = vmatmul.mubr.bf16.gmra.mxu0 %v2682
      %v2737 = vpop.f32.mrf.mxu0
      %v2738 = vadd.f32 0.0, %v2737
      %v2739 = vpop.f32.mrf.mxu0
      %v2740 = vadd.f32 0.0, %v2739
      %v2741 = vpop.f32.mrf.mxu0
      %v2742 = vadd.f32 0.0, %v2741
      %v2743 = vpop.f32.mrf.mxu0
      %v2744 = vadd.f32 0.0, %v2743
      %2745 = vmatprep.mubr.bf16.mxu0 0
      %2746 = vmatmul.mubr.bf16.gmra.mxu0 %v2685
      %v2747 = vpop.f32.mrf.mxu0
      %v2748 = vadd.f32 0.0, %v2747
      %v2749 = vpop.f32.mrf.mxu0
      %v2750 = vadd.f32 0.0, %v2749
      %v2751 = vpop.f32.mrf.mxu0
      %v2752 = vadd.f32 0.0, %v2751
      %v2753 = vpop.f32.mrf.mxu0
      %v2754 = vadd.f32 0.0, %v2753
      %2755 = vdwg.mxu0
      %v2756 = vadd.f32 %v2567, %v2728
      %v2757 = vadd.f32 %v2568, %v2730
      %v2758 = vadd.f32 %v2569, %v2732
      %v2759 = vadd.f32 %v2570, %v2734
      %v2760 = vadd.f32 %v2571, %v2738
      %v2761 = vadd.f32 %v2572, %v2740
      %v2762 = vadd.f32 %v2573, %v2742
      %v2763 = vadd.f32 %v2574, %v2744
      %v2764 = vadd.f32 %v2575, %v2748
      %v2765 = vadd.f32 %v2576, %v2750
      %v2766 = vadd.f32 %v2577, %v2752
      %v2767 = vadd.f32 %v2578, %v2754
      %s2768 = scalar_lea.vmem %s5, 352
      %v2769 = vld [vmem:[%s2768] sm:$0xff]
      %v2770 = vld [vmem:[%s2768 + $0x8] sm:$0xff]
      %v2771 = vld [vmem:[%s2768 + $0x10] sm:$0xff]
      %v2772 = vld [vmem:[%s2768 + $0x18] sm:$0xff]
      %v2773 = vld [vmem:[%s2768 + $0x20] sm:$0xff]
      %v2774 = vld [vmem:[%s2768 + $0x28] sm:$0xff]
      %v2775 = vld [vmem:[%s2768 + $0x30] sm:$0xff]
      %v2776 = vld [vmem:[%s2768 + $0x38] sm:$0xff]
      %v2777 = vld [vmem:[%s2768 + $0x40] sm:$0xff]
      %v2778 = vld [vmem:[%s2768 + $0x48] sm:$0xff]
      %v2779 = vld [vmem:[%s2768 + $0x50] sm:$0x33]
      %v2780 = vpack.c.b16 %v2050, %v2049
      %v2781 = vpack.c.b16 %v2052, %v2065
      %v2782 = vpack.c.b16 %v2066, %v2053
      %v2794 = vunpack.c.l.b16 %v2769
      %v2795 = vunpack.c.h.b16 %v2769
      %v2796 = vunpack.c.l.b16 %v2770
      %v2797 = vunpack.c.h.b16 %v2770
      %v2798 = vunpack.c.l.b16 %v2771
      %v2799 = vunpack.c.h.b16 %v2771
      %v2800 = vunpack.c.l.b16 %v2772
      %v2801 = vunpack.c.h.b16 %v2772
      %v2802 = vunpack.c.l.b16 %v2773
      %v2803 = vunpack.c.h.b16 %v2773
      %v2804 = vunpack.c.l.b16 %v2774
      %v2805 = vunpack.c.h.b16 %v2774
      %v2806 = vunpack.c.l.b16 %v2775
      %v2807 = vunpack.c.h.b16 %v2775
      %v2808 = vunpack.c.l.b16 %v2776
      %v2809 = vunpack.c.h.b16 %v2776
      %v2810 = vunpack.c.l.b16 %v2777
      %v2811 = vunpack.c.h.b16 %v2777
      %v2812 = vunpack.c.l.b16 %v2778
      %v2813 = vunpack.c.h.b16 %v2778
      %v2814 = vunpack.c.l.b16 %v2779
      %v2815 = vunpack.c.h.b16 %v2779
      %v2816 = vpack.c.b16 %v2796, %v2794
      %v2817 = vpack.c.b16 %v2797, %v2795
      %v2818 = vpack.c.b16 %v2800, %v2798
      %v2819 = vpack.c.b16 %v2801, %v2799
      %v2820 = vpack.c.b16 %v2804, %v2802
      %v2821 = vpack.c.b16 %v2805, %v2803
      %v2822 = vpack.c.b16 %v2808, %v2806
      %v2823 = vpack.c.b16 %v2809, %v2807
      %v2824 = vpack.c.b16 %v2812, %v2810
      %v2825 = vpack.c.b16 %v2813, %v2811
      %v2826 = vpack.c.b16 %v2814, %v2814
      %v2827 = vpack.c.b16 %v2815, %v2815
      %v2839 = vsel %vm2174, %v2780, 0
      %v2842 = vsel %vm2174, %v2781, 0
      %v2845 = vsel %vm2174, %v2782, 0
      %v2848 = vsel %vm2184, %v2826, 0
      %v2851 = vsel %vm2184, %v2827, 0
      %2853 = vmatprep.subr.bf16.mxu0 0
      %2854 = vmatpush1.bf16.msra.mxu0 0
      %2855 = vmatprep.subr.bf16.mxu0 0
      %2856 = vmatpush1.bf16.msra.mxu0 0
      %2857 = vmatprep.subr.bf16.mxu0 %v2851
      %2858 = vmatpush1.bf16.msra.mxu0 %v2848
      %2859 = vmatprep.subr.bf16.mxu0 %v2825
      %2860 = vmatpush1.bf16.msra.mxu0 %v2824
      %2861 = vmatprep.subr.bf16.mxu0 %v2823
      %2862 = vmatpush1.bf16.msra.mxu0 %v2822
      %2863 = vmatprep.subr.bf16.mxu0 %v2821
      %2864 = vmatpush1.bf16.msra.mxu0 %v2820
      %2865 = vmatprep.subr.bf16.mxu0 %v2819
      %2866 = vmatpush1.bf16.msra.mxu0 %v2818
      %2867 = vmatprep.subr.bf16.mxu0 %v2817
      %2868 = vmatpush1.bf16.msra.mxu0 %v2816
      %2869 = vmatprep.subr.bf16.mxu0 0
      %2870 = vmatpush2.bf16.msra.mxu0 0
      %2871 = vmatprep.subr.bf16.mxu0 0
      %2872 = vmatpush2.bf16.msra.mxu0 0
      %2873 = vmatprep.subr.bf16.mxu0 0
      %2874 = vmatpush2.bf16.msra.mxu0 0
      %2875 = vmatprep.subr.bf16.mxu0 0
      %2876 = vmatpush2.bf16.msra.mxu0 0
      %2877 = vmatprep.subr.bf16.mxu0 0
      %2878 = vmatpush2.bf16.msra.mxu0 0
      %2879 = vmatprep.subr.bf16.mxu0 0
      %2880 = vmatpush2.bf16.msra.mxu0 0
      %2881 = vmatprep.subr.bf16.mxu0 0
      %2882 = vmatpush2.bf16.msra.mxu0 0
      %2883 = vmatprep.subr.bf16.mxu0 0
      %2884 = vmatpush2.bf16.msra.mxu0 0
      %2885 = vmatprep.mubr.bf16.mxu0 0
      %2886 = vmatmul.mubr.bf16.gmra.mxu0 %v2839
      %v2887 = vpop.f32.mrf.mxu0
      %v2888 = vadd.f32 0.0, %v2887
      %v2889 = vpop.f32.mrf.mxu0
      %v2890 = vadd.f32 0.0, %v2889
      %v2891 = vpop.f32.mrf.mxu0
      %v2892 = vadd.f32 0.0, %v2891
      %v2893 = vpop.f32.mrf.mxu0
      %v2894 = vadd.f32 0.0, %v2893
      %2895 = vmatprep.mubr.bf16.mxu0 0
      %2896 = vmatmul.mubr.bf16.gmra.mxu0 %v2842
      %v2897 = vpop.f32.mrf.mxu0
      %v2898 = vadd.f32 0.0, %v2897
      %v2899 = vpop.f32.mrf.mxu0
      %v2900 = vadd.f32 0.0, %v2899
      %v2901 = vpop.f32.mrf.mxu0
      %v2902 = vadd.f32 0.0, %v2901
      %v2903 = vpop.f32.mrf.mxu0
      %v2904 = vadd.f32 0.0, %v2903
      %2905 = vmatprep.mubr.bf16.mxu0 0
      %2906 = vmatmul.mubr.bf16.gmra.mxu0 %v2845
      %v2907 = vpop.f32.mrf.mxu0
      %v2908 = vadd.f32 0.0, %v2907
      %v2909 = vpop.f32.mrf.mxu0
      %v2910 = vadd.f32 0.0, %v2909
      %v2911 = vpop.f32.mrf.mxu0
      %v2912 = vadd.f32 0.0, %v2911
      %v2913 = vpop.f32.mrf.mxu0
      %v2914 = vadd.f32 0.0, %v2913
      %2915 = vdwg.mxu0
      %v2916 = vadd.f32 %v2756, %v2888
      %v2917 = vadd.f32 %v2757, %v2890
      %v2918 = vadd.f32 %v2758, %v2892
      %v2919 = vadd.f32 %v2759, %v2894
      %v2920 = vadd.f32 %v2760, %v2898
      %v2921 = vadd.f32 %v2761, %v2900
      %v2922 = vadd.f32 %v2762, %v2902
      %v2923 = vadd.f32 %v2763, %v2904
      %v2924 = vadd.f32 %v2764, %v2908
      %v2925 = vadd.f32 %v2765, %v2910
      %v2926 = vadd.f32 %v2766, %v2912
      %v2927 = vadd.f32 %v2767, %v2914
      %v2928 = vld [vmem:[%s6] sm:$0x3]
      %v2930 = vlaneseq
      %v2931 = vshrl.u32 %v2930, 7
      %v2932 = vsub.s32 0, %v2931
      %v2933 = vrot.slane %v2928, %v2932
      %v2934 = vlaneseq
      %v2935 = vshrl.u32 %v2934, 7
      %v2936 = vsub.s32 1, %v2935
      %v2937 = vrot.slane %v2928, %v2936
      %v2940 = vadd.f32 %v2916, %v2933
      %v2941 = vadd.f32 %v2917, %v2937
      %v2942 = vadd.f32 %v2918, %v2933
      %v2943 = vadd.f32 %v2919, %v2937
      %v2944 = vadd.f32 %v2920, %v2933
      %v2945 = vadd.f32 %v2921, %v2937
      %v2946 = vadd.f32 %v2922, %v2933
      %v2947 = vadd.f32 %v2923, %v2937
      %v2948 = vadd.f32 %v2924, %v2933
      %v2949 = vadd.f32 %v2925, %v2937
      %v2950 = vadd.f32 %v2926, %v2933
      %v2951 = vadd.f32 %v2927, %v2937
      %v2952 = vmax.f32 %v2940, 0.0
      %v2953 = vmax.f32 %v2941, 0.0
      %v2954 = vmax.f32 %v2942, 0.0
      %v2955 = vmax.f32 %v2943, 0.0
      %v2956 = vmax.f32 %v2944, 0.0
      %v2957 = vmax.f32 %v2945, 0.0
      %v2958 = vmax.f32 %v2946, 0.0
      %v2959 = vmax.f32 %v2947, 0.0
      %v2960 = vmax.f32 %v2948, 0.0
      %v2961 = vmax.f32 %v2949, 0.0
      %v2962 = vmax.f32 %v2950, 0.0
      %v2963 = vmax.f32 %v2951, 0.0
      %2976 = vrot.lane.b32.xlu0 %v2952, 112
      %v2977 = vpop.permute.xlu0 %2976
      %2978 = vrot.lane.b32.xlu0 %v2953, 112
      %v2979 = vpop.permute.xlu0 %2978
      %2980 = vrot.lane.b32.xlu0 %v2954, 112
      %v2981 = vpop.permute.xlu0 %2980
      %2982 = vrot.lane.b32.xlu0 %v2955, 112
      %v2983 = vpop.permute.xlu0 %2982
      %2984 = vrot.lane.b32.xlu0 %v2956, 112
      %v2985 = vpop.permute.xlu0 %2984
      %2986 = vrot.lane.b32.xlu0 %v2957, 112
      %v2987 = vpop.permute.xlu0 %2986
      %2988 = vrot.lane.b32.xlu0 %v2958, 112
      %v2989 = vpop.permute.xlu0 %2988
      %2990 = vrot.lane.b32.xlu0 %v2959, 112
      %v2991 = vpop.permute.xlu0 %2990
      %2992 = vrot.lane.b32.xlu0 %v2960, 112
      %v2993 = vpop.permute.xlu0 %2992
      %2994 = vrot.lane.b32.xlu0 %v2961, 112
      %v2995 = vpop.permute.xlu0 %2994
      %2996 = vrot.lane.b32.xlu0 %v2962, 112
      %v2997 = vpop.permute.xlu0 %2996
      %2998 = vrot.lane.b32.xlu0 %v2963, 112
      %v2999 = vpop.permute.xlu0 %2998
      %vm3000 = vcmask 916480
      %v3001 = vsel %vm3000, %v2977, %v2979
      %v3002 = vsel %vm3000, %v2981, %v2983
      %v3003 = vsel %vm3000, %v2985, %v2987
      %v3004 = vsel %vm3000, %v2989, %v2991
      %v3005 = vsel %vm3000, %v2993, %v2995
      %v3006 = vsel %vm3000, %v2997, %v2999
      %v3019 = vmax.f32 %v2952, %v3001
      %v3020 = vmax.f32 %v2953, %v2979
      %v3021 = vmax.f32 %v2954, %v3002
      %v3022 = vmax.f32 %v2955, %v2983
      %v3023 = vmax.f32 %v2956, %v3003
      %v3024 = vmax.f32 %v2957, %v2987
      %v3025 = vmax.f32 %v2958, %v3004
      %v3026 = vmax.f32 %v2959, %v2991
      %v3027 = vmax.f32 %v2960, %v3005
      %v3028 = vmax.f32 %v2961, %v2995
      %v3029 = vmax.f32 %v2962, %v3006
      %v3030 = vmax.f32 %v2963, %v2999
      %v3031 = vpack.c.bf16 %v3021, %v3019
      %v3032 = vpack.c.bf16 %v3022, %v3020
      %v3033 = vpack.c.bf16 %v3025, %v3023
      %v3034 = vpack.c.bf16 %v3026, %v3024
      %v3035 = vpack.c.bf16 %v3029, %v3027
      %v3036 = vpack.c.bf16 %v3030, %v3028
      %v3043 = vunpack.c.l.b16 %v3031
      %v3044 = vunpack.c.l.b16 %v3032
      %v3045 = vunpack.c.h.b16 %v3031
      %v3046 = vunpack.c.h.b16 %v3032
      %v3047 = vunpack.c.l.b16 %v3033
      %v3048 = vunpack.c.l.b16 %v3034
      %v3049 = vunpack.c.h.b16 %v3033
      %v3050 = vunpack.c.h.b16 %v3034
      %v3051 = vunpack.c.l.b16 %v3035
      %v3052 = vunpack.c.l.b16 %v3036
      %v3053 = vunpack.c.h.b16 %v3035
      %v3054 = vunpack.c.h.b16 %v3036
      %v3055 = vpack.c.b16 %v3044, %v3043
      %v3056 = vpack.c.b16 %v3046, %v3045
      %v3057 = vpack.c.b16 %v3048, %v3047
      %v3058 = vpack.c.b16 %v3050, %v3049
      %v3059 = vpack.c.b16 %v3052, %v3051
      %v3060 = vpack.c.b16 %v3054, %v3053
      %v3067 = vrot.slane %v3055, 5
      %v3068 = vrot.slane %v3067, 4
      %v3069 = vrot.slane %v3058, 5
      %v3070 = vrot.slane %v3069, 4
      %v3073 = vmax.bf16 %v3055, %v3068
      %v3074 = vmax.bf16 %v3058, %v3070
      %v3075 = vld [vmem:[%s7] sm:$0xf]
      %v3076 = vld [vmem:[%s7 + $0x4] sm:$0xf]
      %v3077 = vld [vmem:[%s7 + $0x8] sm:$0xf]
      %v3078 = vld [vmem:[%s7 + $0xc] sm:$0xf]
      %v3079 = vld [vmem:[%s7 + $0x10] sm:$0xf]
      %v3080 = vld [vmem:[%s7 + $0x14] sm:$0xf]
      %v3081 = vld [vmem:[%s7 + $0x18] sm:$0xf]
      %v3082 = vld [vmem:[%s7 + $0x1c] sm:$0xf]
      %v3083 = vld [vmem:[%s7 + $0x20] sm:$0xf]
      %v3084 = vld [vmem:[%s7 + $0x24] sm:$0xf]
      %v3085 = vld [vmem:[%s7 + $0x28] sm:$0xf]
      %v3086 = vld [vmem:[%s7 + $0x2c] sm:$0xf]
      %v3087 = vld [vmem:[%s7 + $0x30] sm:$0xf]
      %v3088 = vld [vmem:[%s7 + $0x34] sm:$0xf]
      %v3089 = vld [vmem:[%s7 + $0x38] sm:$0xf]
      %v3090 = vld [vmem:[%s7 + $0x3c] sm:$0xf]
      %v3091 = vld [vmem:[%s7 + $0x40] sm:$0xf]
      %v3092 = vld [vmem:[%s7 + $0x44] sm:$0xf]
      %s3093 = scalar_lea.vmem %s7, 72
      %v3094 = vld [vmem:[%s3093] sm:$0xf]
      %v3095 = vld [vmem:[%s3093 + $0x4] sm:$0xf]
      %v3096 = vld [vmem:[%s3093 + $0x8] sm:$0xf]
      %v3097 = vld [vmem:[%s3093 + $0xc] sm:$0xf]
      %v3098 = vld [vmem:[%s3093 + $0x10] sm:$0xf]
      %v3099 = vld [vmem:[%s3093 + $0x14] sm:$0xf]
      %v3100 = vld [vmem:[%s3093 + $0x18] sm:$0xf]
      %v3101 = vld [vmem:[%s3093 + $0x1c] sm:$0xf]
      %v3102 = vld [vmem:[%s3093 + $0x20] sm:$0xf]
      %v3103 = vld [vmem:[%s3093 + $0x24] sm:$0xf]
      %v3104 = vld [vmem:[%s3093 + $0x28] sm:$0xf]
      %v3105 = vld [vmem:[%s3093 + $0x2c] sm:$0xf]
      %v3106 = vld [vmem:[%s3093 + $0x30] sm:$0xf]
      %v3107 = vld [vmem:[%s3093 + $0x34] sm:$0xf]
      %v3108 = vld [vmem:[%s3093 + $0x38] sm:$0xf]
      %v3109 = vld [vmem:[%s3093 + $0x3c] sm:$0xf]
      %v3110 = vld [vmem:[%s3093 + $0x40] sm:$0xf]
      %v3111 = vld [vmem:[%s3093 + $0x44] sm:$0xf]
      %v3114 = vunpack.c.l.b16 %v3073
      %v3115 = vunpack.c.h.b16 %v3073
      %v3116 = vunpack.c.l.b16 %v3074
      %v3117 = vunpack.c.h.b16 %v3074
      %v3118 = vpack.c.b16 %v3114, %v3114
      %v3119 = vpack.c.b16 %v3115, %v3115
      %v3120 = vpack.c.b16 %v3116, %v3116
      %v3121 = vpack.c.b16 %v3117, %v3117
      %v3122 = vunpack.c.l.b16 %v3118
      %v3123 = vunpack.c.l.b16 %v3119
      %v3124 = vunpack.c.l.b16 %v3120
      %v3125 = vunpack.c.l.b16 %v3121
      %v3126 = vrot.slane %v3122, 4
      %v3127 = vrot.slane %v3124, 3
      %vm3128 = vcmask 1041409
      %v3129 = vsel %vm3128, %v3127, %v3126
      %v3130 = vrot.slane %v3123, 4
      %v3131 = vrot.slane %v3125, 3
      %v3132 = vsel %vm3128, %v3131, %v3130
      %v3133 = vpack.c.b16 %v3129, %v3129
      %v3134 = vpack.c.b16 %v3132, %v3132
      %v3154 = vunpack.c.l.b16 %v3094
      %v3155 = vunpack.c.l.b16 %v3095
      %v3156 = vunpack.c.l.b16 %v3096
      %v3157 = vunpack.c.l.b16 %v3097
      %v3158 = vunpack.c.l.b16 %v3098
      %v3159 = vunpack.c.l.b16 %v3099
      %v3160 = vunpack.c.l.b16 %v3100
      %v3161 = vunpack.c.l.b16 %v3101
      %v3162 = vunpack.c.l.b16 %v3102
      %v3163 = vunpack.c.l.b16 %v3103
      %v3164 = vunpack.c.l.b16 %v3104
      %v3165 = vunpack.c.l.b16 %v3105
      %v3166 = vunpack.c.l.b16 %v3106
      %v3167 = vunpack.c.l.b16 %v3107
      %v3168 = vunpack.c.l.b16 %v3108
      %v3169 = vunpack.c.l.b16 %v3109
      %v3170 = vunpack.c.l.b16 %v3110
      %v3171 = vunpack.c.l.b16 %v3111
      %v3172 = vpack.c.b16 %v3155, %v3154
      %v3173 = vpack.c.b16 %v3157, %v3156
      %v3174 = vpack.c.b16 %v3159, %v3158
      %v3175 = vpack.c.b16 %v3161, %v3160
      %v3176 = vpack.c.b16 %v3163, %v3162
      %v3177 = vpack.c.b16 %v3165, %v3164
      %v3178 = vpack.c.b16 %v3167, %v3166
      %v3179 = vpack.c.b16 %v3169, %v3168
      %v3180 = vpack.c.b16 %v3171, %v3170
      %vm3190 = vcmask 130048
      %v3192 = vsel %vm3190, %v3134, 0
      %3194 = vmatprep.subr.bf16.mxu0 0
      %3195 = vmatpush1.bf16.msra.mxu0 %v3179
      %3196 = vmatprep.subr.bf16.mxu0 0
      %3197 = vmatpush1.bf16.msra.mxu0 %v3178
      %3198 = vmatprep.subr.bf16.mxu0 0
      %3199 = vmatpush1.bf16.msra.mxu0 %v3177
      %3200 = vmatprep.subr.bf16.mxu0 0
      %3201 = vmatpush1.bf16.msra.mxu0 %v3176
      %3202 = vmatprep.subr.bf16.mxu0 0
      %3203 = vmatpush1.bf16.msra.mxu0 %v3175
      %3204 = vmatprep.subr.bf16.mxu0 0
      %3205 = vmatpush1.bf16.msra.mxu0 %v3174
      %3206 = vmatprep.subr.bf16.mxu0 0
      %3207 = vmatpush1.bf16.msra.mxu0 %v3173
      %3208 = vmatprep.subr.bf16.mxu0 0
      %3209 = vmatpush1.bf16.msra.mxu0 %v3172
      %3210 = vmatprep.subr.bf16.mxu0 0
      %3211 = vmatpush2.bf16.msra.mxu0 0
      %3212 = vmatprep.subr.bf16.mxu0 0
      %3213 = vmatpush2.bf16.msra.mxu0 0
      %3214 = vmatprep.subr.bf16.mxu0 0
      %3215 = vmatpush2.bf16.msra.mxu0 0
      %3216 = vmatprep.subr.bf16.mxu0 0
      %3217 = vmatpush2.bf16.msra.mxu0 0
      %3218 = vmatprep.subr.bf16.mxu0 0
      %3219 = vmatpush2.bf16.msra.mxu0 0
      %3220 = vmatprep.subr.bf16.mxu0 0
      %3221 = vmatpush2.bf16.msra.mxu0 0
      %3222 = vmatprep.subr.bf16.mxu0 0
      %3223 = vmatpush2.bf16.msra.mxu0 0
      %3224 = vmatprep.subr.bf16.mxu0 0
      %3225 = vmatpush2.bf16.msra.mxu0 %v3180
      %3226 = vmatprep.mubr.bf16.mxu0 %v3192
      %3227 = vmatmul.mubr.bf16.gmra.mxu0 %v3133
      %v3228 = vpop.f32.mrf.mxu0
      %v3229 = vadd.f32 0.0, %v3228
      %v3230 = vpop.f32.mrf.mxu0
      %v3231 = vpop.f32.mrf.mxu0
      %v3232 = vpop.f32.mrf.mxu0
      %3233 = vdwg.mxu0
      %v3234 = vrot.slane %v3124, 7
      %v3235 = vsel %vm3128, %v3234, %v3122
      %v3236 = vrot.slane %v3125, 7
      %v3237 = vsel %vm3128, %v3236, %v3123
      %v3238 = vpack.c.b16 %v3235, %v3235
      %v3239 = vpack.c.b16 %v3237, %v3237
      %v3259 = vunpack.c.l.b16 %v3075
      %v3260 = vunpack.c.l.b16 %v3076
      %v3261 = vunpack.c.l.b16 %v3077
      %v3262 = vunpack.c.l.b16 %v3078
      %v3263 = vunpack.c.l.b16 %v3079
      %v3264 = vunpack.c.l.b16 %v3080
      %v3265 = vunpack.c.l.b16 %v3081
      %v3266 = vunpack.c.l.b16 %v3082
      %v3267 = vunpack.c.l.b16 %v3083
      %v3268 = vunpack.c.l.b16 %v3084
      %v3269 = vunpack.c.l.b16 %v3085
      %v3270 = vunpack.c.l.b16 %v3086
      %v3271 = vunpack.c.l.b16 %v3087
      %v3272 = vunpack.c.l.b16 %v3088
      %v3273 = vunpack.c.l.b16 %v3089
      %v3274 = vunpack.c.l.b16 %v3090
      %v3275 = vunpack.c.l.b16 %v3091
      %v3276 = vunpack.c.l.b16 %v3092
      %v3277 = vpack.c.b16 %v3260, %v3259
      %v3278 = vpack.c.b16 %v3262, %v3261
      %v3279 = vpack.c.b16 %v3264, %v3263
      %v3280 = vpack.c.b16 %v3266, %v3265
      %v3281 = vpack.c.b16 %v3268, %v3267
      %v3282 = vpack.c.b16 %v3270, %v3269
      %v3283 = vpack.c.b16 %v3272, %v3271
      %v3284 = vpack.c.b16 %v3274, %v3273
      %v3285 = vpack.c.b16 %v3276, %v3275
      %v3296 = vsel %vm3190, %v3239, 0
      %3298 = vmatprep.subr.bf16.mxu0 0
      %3299 = vmatpush1.bf16.msra.mxu0 %v3284
      %3300 = vmatprep.subr.bf16.mxu0 0
      %3301 = vmatpush1.bf16.msra.mxu0 %v3283
      %3302 = vmatprep.subr.bf16.mxu0 0
      %3303 = vmatpush1.bf16.msra.mxu0 %v3282
      %3304 = vmatprep.subr.bf16.mxu0 0
      %3305 = vmatpush1.bf16.msra.mxu0 %v3281
      %3306 = vmatprep.subr.bf16.mxu0 0
      %3307 = vmatpush1.bf16.msra.mxu0 %v3280
      %3308 = vmatprep.subr.bf16.mxu0 0
      %3309 = vmatpush1.bf16.msra.mxu0 %v3279
      %3310 = vmatprep.subr.bf16.mxu0 0
      %3311 = vmatpush1.bf16.msra.mxu0 %v3278
      %3312 = vmatprep.subr.bf16.mxu0 0
      %3313 = vmatpush1.bf16.msra.mxu0 %v3277
      %3314 = vmatprep.subr.bf16.mxu0 0
      %3315 = vmatpush2.bf16.msra.mxu0 0
      %3316 = vmatprep.subr.bf16.mxu0 0
      %3317 = vmatpush2.bf16.msra.mxu0 0
      %3318 = vmatprep.subr.bf16.mxu0 0
      %3319 = vmatpush2.bf16.msra.mxu0 0
      %3320 = vmatprep.subr.bf16.mxu0 0
      %3321 = vmatpush2.bf16.msra.mxu0 0
      %3322 = vmatprep.subr.bf16.mxu0 0
      %3323 = vmatpush2.bf16.msra.mxu0 0
      %3324 = vmatprep.subr.bf16.mxu0 0
      %3325 = vmatpush2.bf16.msra.mxu0 0
      %3326 = vmatprep.subr.bf16.mxu0 0
      %3327 = vmatpush2.bf16.msra.mxu0 0
      %3328 = vmatprep.subr.bf16.mxu0 0
      %3329 = vmatpush2.bf16.msra.mxu0 %v3285
      %3330 = vmatprep.mubr.bf16.mxu0 %v3296
      %3331 = vmatmul.mubr.bf16.gmra.mxu0 %v3238
      %v3332 = vpop.f32.mrf.mxu0
      %v3333 = vadd.f32 %v3229, %v3332
      %v3334 = vpop.f32.mrf.mxu0
      %v3335 = vpop.f32.mrf.mxu0
      %v3336 = vpop.f32.mrf.mxu0
      %3337 = vdwg.mxu0
      %v3338 = vrot.slane %v3056, 5
      %v3339 = vrot.slane %v3338, 4
      %v3340 = vrot.slane %v3059, 5
      %v3341 = vrot.slane %v3340, 4
      %v3344 = vmax.bf16 %v3056, %v3339
      %v3345 = vmax.bf16 %v3059, %v3341
      %s3346 = scalar_lea.vmem %s7, 144
      %v3347 = vld [vmem:[%s3346] sm:$0xf]
      %v3348 = vld [vmem:[%s3346 + $0x4] sm:$0xf]
      %v3349 = vld [vmem:[%s3346 + $0x8] sm:$0xf]
      %v3350 = vld [vmem:[%s3346 + $0xc] sm:$0xf]
      %v3351 = vld [vmem:[%s3346 + $0x10] sm:$0xf]
      %v3352 = vld [vmem:[%s3346 + $0x14] sm:$0xf]
      %v3353 = vld [vmem:[%s3346 + $0x18] sm:$0xf]
      %v3354 = vld [vmem:[%s3346 + $0x1c] sm:$0xf]
      %v3355 = vld [vmem:[%s3346 + $0x20] sm:$0xf]
      %v3356 = vld [vmem:[%s3346 + $0x24] sm:$0xf]
      %v3357 = vld [vmem:[%s3346 + $0x28] sm:$0xf]
      %v3358 = vld [vmem:[%s3346 + $0x2c] sm:$0xf]
      %v3359 = vld [vmem:[%s3346 + $0x30] sm:$0xf]
      %v3360 = vld [vmem:[%s3346 + $0x34] sm:$0xf]
      %v3361 = vld [vmem:[%s3346 + $0x38] sm:$0xf]
      %v3362 = vld [vmem:[%s3346 + $0x3c] sm:$0xf]
      %v3363 = vld [vmem:[%s3346 + $0x40] sm:$0xf]
      %v3364 = vld [vmem:[%s3346 + $0x44] sm:$0xf]
      %v3367 = vunpack.c.l.b16 %v3344
      %v3368 = vunpack.c.h.b16 %v3344
      %v3369 = vunpack.c.l.b16 %v3345
      %v3370 = vunpack.c.h.b16 %v3345
      %v3371 = vpack.c.b16 %v3367, %v3367
      %v3372 = vpack.c.b16 %v3368, %v3368
      %v3373 = vpack.c.b16 %v3369, %v3369
      %v3374 = vpack.c.b16 %v3370, %v3370
      %v3375 = vunpack.c.l.b16 %v3371
      %v3376 = vunpack.c.l.b16 %v3372
      %v3377 = vunpack.c.l.b16 %v3373
      %v3378 = vunpack.c.l.b16 %v3374
      %v3379 = vrot.slane %v3377, 7
      %v3380 = vsel %vm3128, %v3379, %v3375
      %v3381 = vrot.slane %v3378, 7
      %v3382 = vsel %vm3128, %v3381, %v3376
      %v3383 = vpack.c.b16 %v3380, %v3380
      %v3384 = vpack.c.b16 %v3382, %v3382
      %v3404 = vunpack.c.l.b16 %v3347
      %v3405 = vunpack.c.l.b16 %v3348
      %v3406 = vunpack.c.l.b16 %v3349
      %v3407 = vunpack.c.l.b16 %v3350
      %v3408 = vunpack.c.l.b16 %v3351
      %v3409 = vunpack.c.l.b16 %v3352
      %v3410 = vunpack.c.l.b16 %v3353
      %v3411 = vunpack.c.l.b16 %v3354
      %v3412 = vunpack.c.l.b16 %v3355
      %v3413 = vunpack.c.l.b16 %v3356
      %v3414 = vunpack.c.l.b16 %v3357
      %v3415 = vunpack.c.l.b16 %v3358
      %v3416 = vunpack.c.l.b16 %v3359
      %v3417 = vunpack.c.l.b16 %v3360
      %v3418 = vunpack.c.l.b16 %v3361
      %v3419 = vunpack.c.l.b16 %v3362
      %v3420 = vunpack.c.l.b16 %v3363
      %v3421 = vunpack.c.l.b16 %v3364
      %v3422 = vpack.c.b16 %v3405, %v3404
      %v3423 = vpack.c.b16 %v3407, %v3406
      %v3424 = vpack.c.b16 %v3409, %v3408
      %v3425 = vpack.c.b16 %v3411, %v3410
      %v3426 = vpack.c.b16 %v3413, %v3412
      %v3427 = vpack.c.b16 %v3415, %v3414
      %v3428 = vpack.c.b16 %v3417, %v3416
      %v3429 = vpack.c.b16 %v3419, %v3418
      %v3430 = vpack.c.b16 %v3421, %v3420
      %v3441 = vsel %vm3190, %v3384, 0
      %3443 = vmatprep.subr.bf16.mxu0 0
      %3444 = vmatpush1.bf16.msra.mxu0 %v3429
      %3445 = vmatprep.subr.bf16.mxu0 0
      %3446 = vmatpush1.bf16.msra.mxu0 %v3428
      %3447 = vmatprep.subr.bf16.mxu0 0
      %3448 = vmatpush1.bf16.msra.mxu0 %v3427
      %3449 = vmatprep.subr.bf16.mxu0 0
      %3450 = vmatpush1.bf16.msra.mxu0 %v3426
      %3451 = vmatprep.subr.bf16.mxu0 0
      %3452 = vmatpush1.bf16.msra.mxu0 %v3425
      %3453 = vmatprep.subr.bf16.mxu0 0
      %3454 = vmatpush1.bf16.msra.mxu0 %v3424
      %3455 = vmatprep.subr.bf16.mxu0 0
      %3456 = vmatpush1.bf16.msra.mxu0 %v3423
      %3457 = vmatprep.subr.bf16.mxu0 0
      %3458 = vmatpush1.bf16.msra.mxu0 %v3422
      %3459 = vmatprep.subr.bf16.mxu0 0
      %3460 = vmatpush2.bf16.msra.mxu0 0
      %3461 = vmatprep.subr.bf16.mxu0 0
      %3462 = vmatpush2.bf16.msra.mxu0 0
      %3463 = vmatprep.subr.bf16.mxu0 0
      %3464 = vmatpush2.bf16.msra.mxu0 0
      %3465 = vmatprep.subr.bf16.mxu0 0
      %3466 = vmatpush2.bf16.msra.mxu0 0
      %3467 = vmatprep.subr.bf16.mxu0 0
      %3468 = vmatpush2.bf16.msra.mxu0 0
      %3469 = vmatprep.subr.bf16.mxu0 0
      %3470 = vmatpush2.bf16.msra.mxu0 0
      %3471 = vmatprep.subr.bf16.mxu0 0
      %3472 = vmatpush2.bf16.msra.mxu0 0
      %3473 = vmatprep.subr.bf16.mxu0 0
      %3474 = vmatpush2.bf16.msra.mxu0 %v3430
      %3475 = vmatprep.mubr.bf16.mxu0 %v3441
      %3476 = vmatmul.mubr.bf16.gmra.mxu0 %v3383
      %v3477 = vpop.f32.mrf.mxu0
      %v3478 = vadd.f32 0.0, %v3477
      %v3479 = vpop.f32.mrf.mxu0
      %v3480 = vpop.f32.mrf.mxu0
      %v3481 = vpop.f32.mrf.mxu0
      %3482 = vdwg.mxu0
      %v3483 = vadd.f32 %v3333, %v3478
      %s3484 = scalar_lea.vmem %s7, 216
      %v3485 = vld [vmem:[%s3484] sm:$0xf]
      %v3486 = vld [vmem:[%s3484 + $0x4] sm:$0xf]
      %v3487 = vld [vmem:[%s3484 + $0x8] sm:$0xf]
      %v3488 = vld [vmem:[%s3484 + $0xc] sm:$0xf]
      %v3489 = vld [vmem:[%s3484 + $0x10] sm:$0xf]
      %v3490 = vld [vmem:[%s3484 + $0x14] sm:$0xf]
      %v3491 = vld [vmem:[%s3484 + $0x18] sm:$0xf]
      %v3492 = vld [vmem:[%s3484 + $0x1c] sm:$0xf]
      %v3493 = vld [vmem:[%s3484 + $0x20] sm:$0xf]
      %v3494 = vld [vmem:[%s3484 + $0x24] sm:$0xf]
      %v3495 = vld [vmem:[%s3484 + $0x28] sm:$0xf]
      %v3496 = vld [vmem:[%s3484 + $0x2c] sm:$0xf]
      %v3497 = vld [vmem:[%s3484 + $0x30] sm:$0xf]
      %v3498 = vld [vmem:[%s3484 + $0x34] sm:$0xf]
      %v3499 = vld [vmem:[%s3484 + $0x38] sm:$0xf]
      %v3500 = vld [vmem:[%s3484 + $0x3c] sm:$0xf]
      %v3501 = vld [vmem:[%s3484 + $0x40] sm:$0xf]
      %v3502 = vld [vmem:[%s3484 + $0x44] sm:$0xf]
      %v3503 = vrot.slane %v3375, 4
      %v3504 = vrot.slane %v3377, 3
      %v3505 = vsel %vm3128, %v3504, %v3503
      %v3506 = vrot.slane %v3376, 4
      %v3507 = vrot.slane %v3378, 3
      %v3508 = vsel %vm3128, %v3507, %v3506
      %v3509 = vpack.c.b16 %v3505, %v3505
      %v3510 = vpack.c.b16 %v3508, %v3508
      %v3530 = vunpack.c.l.b16 %v3485
      %v3531 = vunpack.c.l.b16 %v3486
      %v3532 = vunpack.c.l.b16 %v3487
      %v3533 = vunpack.c.l.b16 %v3488
      %v3534 = vunpack.c.l.b16 %v3489
      %v3535 = vunpack.c.l.b16 %v3490
      %v3536 = vunpack.c.l.b16 %v3491
      %v3537 = vunpack.c.l.b16 %v3492
      %v3538 = vunpack.c.l.b16 %v3493
      %v3539 = vunpack.c.l.b16 %v3494
      %v3540 = vunpack.c.l.b16 %v3495
      %v3541 = vunpack.c.l.b16 %v3496
      %v3542 = vunpack.c.l.b16 %v3497
      %v3543 = vunpack.c.l.b16 %v3498
      %v3544 = vunpack.c.l.b16 %v3499
      %v3545 = vunpack.c.l.b16 %v3500
      %v3546 = vunpack.c.l.b16 %v3501
      %v3547 = vunpack.c.l.b16 %v3502
      %v3548 = vpack.c.b16 %v3531, %v3530
      %v3549 = vpack.c.b16 %v3533, %v3532
      %v3550 = vpack.c.b16 %v3535, %v3534
      %v3551 = vpack.c.b16 %v3537, %v3536
      %v3552 = vpack.c.b16 %v3539, %v3538
      %v3553 = vpack.c.b16 %v3541, %v3540
      %v3554 = vpack.c.b16 %v3543, %v3542
      %v3555 = vpack.c.b16 %v3545, %v3544
      %v3556 = vpack.c.b16 %v3547, %v3546
      %v3567 = vsel %vm3190, %v3510, 0
      %3569 = vmatprep.subr.bf16.mxu0 0
      %3570 = vmatpush1.bf16.msra.mxu0 %v3555
      %3571 = vmatprep.subr.bf16.mxu0 0
      %3572 = vmatpush1.bf16.msra.mxu0 %v3554
      %3573 = vmatprep.subr.bf16.mxu0 0
      %3574 = vmatpush1.bf16.msra.mxu0 %v3553
      %3575 = vmatprep.subr.bf16.mxu0 0
      %3576 = vmatpush1.bf16.msra.mxu0 %v3552
      %3577 = vmatprep.subr.bf16.mxu0 0
      %3578 = vmatpush1.bf16.msra.mxu0 %v3551
      %3579 = vmatprep.subr.bf16.mxu0 0
      %3580 = vmatpush1.bf16.msra.mxu0 %v3550
      %3581 = vmatprep.subr.bf16.mxu0 0
      %3582 = vmatpush1.bf16.msra.mxu0 %v3549
      %3583 = vmatprep.subr.bf16.mxu0 0
      %3584 = vmatpush1.bf16.msra.mxu0 %v3548
      %3585 = vmatprep.subr.bf16.mxu0 0
      %3586 = vmatpush2.bf16.msra.mxu0 0
      %3587 = vmatprep.subr.bf16.mxu0 0
      %3588 = vmatpush2.bf16.msra.mxu0 0
      %3589 = vmatprep.subr.bf16.mxu0 0
      %3590 = vmatpush2.bf16.msra.mxu0 0
      %3591 = vmatprep.subr.bf16.mxu0 0
      %3592 = vmatpush2.bf16.msra.mxu0 0
      %3593 = vmatprep.subr.bf16.mxu0 0
      %3594 = vmatpush2.bf16.msra.mxu0 0
      %3595 = vmatprep.subr.bf16.mxu0 0
      %3596 = vmatpush2.bf16.msra.mxu0 0
      %3597 = vmatprep.subr.bf16.mxu0 0
      %3598 = vmatpush2.bf16.msra.mxu0 0
      %3599 = vmatprep.subr.bf16.mxu0 0
      %3600 = vmatpush2.bf16.msra.mxu0 %v3556
      %3601 = vmatprep.mubr.bf16.mxu0 %v3567
      %3602 = vmatmul.mubr.bf16.gmra.mxu0 %v3509
      %v3603 = vpop.f32.mrf.mxu0
      %v3604 = vadd.f32 0.0, %v3603
      %v3605 = vpop.f32.mrf.mxu0
      %v3606 = vpop.f32.mrf.mxu0
      %v3607 = vpop.f32.mrf.mxu0
      %3608 = vdwg.mxu0
      %v3609 = vadd.f32 %v3483, %v3604
      %v3610 = vrot.slane %v3057, 5
      %v3611 = vrot.slane %v3610, 4
      %v3612 = vrot.slane %v3060, 5
      %v3613 = vrot.slane %v3612, 4
      %v3616 = vmax.bf16 %v3057, %v3611
      %v3617 = vmax.bf16 %v3060, %v3613
      %s3618 = scalar_lea.vmem %s7, 288
      %v3619 = vld [vmem:[%s3618] sm:$0xf]
      %v3620 = vld [vmem:[%s3618 + $0x4] sm:$0xf]
      %v3621 = vld [vmem:[%s3618 + $0x8] sm:$0xf]
      %v3622 = vld [vmem:[%s3618 + $0xc] sm:$0xf]
      %v3623 = vld [vmem:[%s3618 + $0x10] sm:$0xf]
      %v3624 = vld [vmem:[%s3618 + $0x14] sm:$0xf]
      %v3625 = vld [vmem:[%s3618 + $0x18] sm:$0xf]
      %v3626 = vld [vmem:[%s3618 + $0x1c] sm:$0xf]
      %v3627 = vld [vmem:[%s3618 + $0x20] sm:$0xf]
      %v3628 = vld [vmem:[%s3618 + $0x24] sm:$0xf]
      %v3629 = vld [vmem:[%s3618 + $0x28] sm:$0xf]
      %v3630 = vld [vmem:[%s3618 + $0x2c] sm:$0xf]
      %v3631 = vld [vmem:[%s3618 + $0x30] sm:$0xf]
      %v3632 = vld [vmem:[%s3618 + $0x34] sm:$0xf]
      %v3633 = vld [vmem:[%s3618 + $0x38] sm:$0xf]
      %v3634 = vld [vmem:[%s3618 + $0x3c] sm:$0xf]
      %v3635 = vld [vmem:[%s3618 + $0x40] sm:$0xf]
      %v3636 = vld [vmem:[%s3618 + $0x44] sm:$0xf]
      %v3639 = vunpack.c.l.b16 %v3616
      %v3640 = vunpack.c.h.b16 %v3616
      %v3641 = vunpack.c.l.b16 %v3617
      %v3642 = vunpack.c.h.b16 %v3617
      %v3643 = vpack.c.b16 %v3639, %v3639
      %v3644 = vpack.c.b16 %v3640, %v3640
      %v3645 = vpack.c.b16 %v3641, %v3641
      %v3646 = vpack.c.b16 %v3642, %v3642
      %v3647 = vunpack.c.l.b16 %v3643
      %v3648 = vunpack.c.l.b16 %v3644
      %v3649 = vunpack.c.l.b16 %v3645
      %v3650 = vunpack.c.l.b16 %v3646
      %v3651 = vrot.slane %v3649, 7
      %v3652 = vsel %vm3128, %v3651, %v3647
      %v3653 = vrot.slane %v3650, 7
      %v3654 = vsel %vm3128, %v3653, %v3648
      %v3655 = vpack.c.b16 %v3652, %v3652
      %v3656 = vpack.c.b16 %v3654, %v3654
      %v3676 = vunpack.c.l.b16 %v3619
      %v3677 = vunpack.c.l.b16 %v3620
      %v3678 = vunpack.c.l.b16 %v3621
      %v3679 = vunpack.c.l.b16 %v3622
      %v3680 = vunpack.c.l.b16 %v3623
      %v3681 = vunpack.c.l.b16 %v3624
      %v3682 = vunpack.c.l.b16 %v3625
      %v3683 = vunpack.c.l.b16 %v3626
      %v3684 = vunpack.c.l.b16 %v3627
      %v3685 = vunpack.c.l.b16 %v3628
      %v3686 = vunpack.c.l.b16 %v3629
      %v3687 = vunpack.c.l.b16 %v3630
      %v3688 = vunpack.c.l.b16 %v3631
      %v3689 = vunpack.c.l.b16 %v3632
      %v3690 = vunpack.c.l.b16 %v3633
      %v3691 = vunpack.c.l.b16 %v3634
      %v3692 = vunpack.c.l.b16 %v3635
      %v3693 = vunpack.c.l.b16 %v3636
      %v3694 = vpack.c.b16 %v3677, %v3676
      %v3695 = vpack.c.b16 %v3679, %v3678
      %v3696 = vpack.c.b16 %v3681, %v3680
      %v3697 = vpack.c.b16 %v3683, %v3682
      %v3698 = vpack.c.b16 %v3685, %v3684
      %v3699 = vpack.c.b16 %v3687, %v3686
      %v3700 = vpack.c.b16 %v3689, %v3688
      %v3701 = vpack.c.b16 %v3691, %v3690
      %v3702 = vpack.c.b16 %v3693, %v3692
      %v3713 = vsel %vm3190, %v3656, 0
      %3715 = vmatprep.subr.bf16.mxu0 0
      %3716 = vmatpush1.bf16.msra.mxu0 %v3701
      %3717 = vmatprep.subr.bf16.mxu0 0
      %3718 = vmatpush1.bf16.msra.mxu0 %v3700
      %3719 = vmatprep.subr.bf16.mxu0 0
      %3720 = vmatpush1.bf16.msra.mxu0 %v3699
      %3721 = vmatprep.subr.bf16.mxu0 0
      %3722 = vmatpush1.bf16.msra.mxu0 %v3698
      %3723 = vmatprep.subr.bf16.mxu0 0
      %3724 = vmatpush1.bf16.msra.mxu0 %v3697
      %3725 = vmatprep.subr.bf16.mxu0 0
      %3726 = vmatpush1.bf16.msra.mxu0 %v3696
      %3727 = vmatprep.subr.bf16.mxu0 0
      %3728 = vmatpush1.bf16.msra.mxu0 %v3695
      %3729 = vmatprep.subr.bf16.mxu0 0
      %3730 = vmatpush1.bf16.msra.mxu0 %v3694
      %3731 = vmatprep.subr.bf16.mxu0 0
      %3732 = vmatpush2.bf16.msra.mxu0 0
      %3733 = vmatprep.subr.bf16.mxu0 0
      %3734 = vmatpush2.bf16.msra.mxu0 0
      %3735 = vmatprep.subr.bf16.mxu0 0
      %3736 = vmatpush2.bf16.msra.mxu0 0
      %3737 = vmatprep.subr.bf16.mxu0 0
      %3738 = vmatpush2.bf16.msra.mxu0 0
      %3739 = vmatprep.subr.bf16.mxu0 0
      %3740 = vmatpush2.bf16.msra.mxu0 0
      %3741 = vmatprep.subr.bf16.mxu0 0
      %3742 = vmatpush2.bf16.msra.mxu0 0
      %3743 = vmatprep.subr.bf16.mxu0 0
      %3744 = vmatpush2.bf16.msra.mxu0 0
      %3745 = vmatprep.subr.bf16.mxu0 0
      %3746 = vmatpush2.bf16.msra.mxu0 %v3702
      %3747 = vmatprep.mubr.bf16.mxu0 %v3713
      %3748 = vmatmul.mubr.bf16.gmra.mxu0 %v3655
      %v3749 = vpop.f32.mrf.mxu0
      %v3750 = vadd.f32 0.0, %v3749
      %v3751 = vpop.f32.mrf.mxu0
      %v3752 = vpop.f32.mrf.mxu0
      %v3753 = vpop.f32.mrf.mxu0
      %3754 = vdwg.mxu0
      %v3755 = vadd.f32 %v3609, %v3750
      %v3756 = vld [vmem:[%s8] sm:$0x1]
      %v3758 = vlaneseq
      %v3759 = vshrl.u32 %v3758, 7
      %v3760 = vsub.s32 0, %v3759
      %v3761 = vrot.slane %v3756, %v3760
      %v3763 = vadd.f32 %v3755, %v3761
      %v3764 = vmax.f32 %v3763, 0.0
      %v3765 = vpack.c.bf16 %v3764, %v3764
      %v3766 = vld [vmem:[%s9] sm:$0xf]
      %v3767 = vld [vmem:[%s9 + $0x4] sm:$0xf]
      %v3768 = vld [vmem:[%s9 + $0x8] sm:$0xf]
      %v3769 = vld [vmem:[%s9 + $0xc] sm:$0xf]
      %v3770 = vld [vmem:[%s9 + $0x10] sm:$0xf]
      %v3771 = vld [vmem:[%s9 + $0x14] sm:$0xf]
      %v3772 = vld [vmem:[%s9 + $0x18] sm:$0xf]
      %v3773 = vld [vmem:[%s9 + $0x1c] sm:$0xf]
      %v3774 = vld [vmem:[%s9 + $0x20] sm:$0xf]
      %v3775 = vld [vmem:[%s9 + $0x24] sm:$0xf]
      %v3776 = vld [vmem:[%s9 + $0x28] sm:$0xf]
      %v3777 = vld [vmem:[%s9 + $0x2c] sm:$0xf]
      %v3778 = vld [vmem:[%s9 + $0x30] sm:$0xf]
      %v3779 = vld [vmem:[%s9 + $0x34] sm:$0xf]
      %v3780 = vld [vmem:[%s9 + $0x38] sm:$0xf]
      %v3781 = vld [vmem:[%s10] sm:$0x1]
      %v3783 = vlaneseq
      %v3784 = vshrl.u32 %v3783, 7
      %v3785 = vsub.s32 0, %v3784
      %v3786 = vrot.slane %v3781, %v3785
      %v3803 = vunpack.c.l.b16 %v3766
      %v3804 = vunpack.c.l.b16 %v3767
      %v3805 = vunpack.c.l.b16 %v3768
      %v3806 = vunpack.c.l.b16 %v3769
      %v3807 = vunpack.c.l.b16 %v3770
      %v3808 = vunpack.c.l.b16 %v3771
      %v3809 = vunpack.c.l.b16 %v3772
      %v3810 = vunpack.c.l.b16 %v3773
      %v3811 = vunpack.c.l.b16 %v3774
      %v3812 = vunpack.c.l.b16 %v3775
      %v3813 = vunpack.c.l.b16 %v3776
      %v3814 = vunpack.c.l.b16 %v3777
      %v3815 = vunpack.c.l.b16 %v3778
      %v3816 = vunpack.c.l.b16 %v3779
      %v3817 = vunpack.c.l.b16 %v3780
      %v3818 = vpack.c.b16 %v3804, %v3803
      %v3819 = vpack.c.b16 %v3806, %v3805
      %v3820 = vpack.c.b16 %v3808, %v3807
      %v3821 = vpack.c.b16 %v3810, %v3809
      %v3822 = vpack.c.b16 %v3812, %v3811
      %v3823 = vpack.c.b16 %v3814, %v3813
      %v3824 = vpack.c.b16 %v3816, %v3815
      %v3825 = vpack.c.b16 %v3817, %v3817
      %vm3833 = vcmask 982016
      %v3835 = vsel %vm3833, %v3765, 0
      %vm3837 = vcmask 1043456
      %v3839 = vsel %vm3837, %v3825, 0
      %3841 = vmatprep.subr.bf16.mxu0 0
      %3842 = vmatpush1.bf16.msra.mxu0 %v3839
      %3843 = vmatprep.subr.bf16.mxu0 0
      %3844 = vmatpush1.bf16.msra.mxu0 %v3824
      %3845 = vmatprep.subr.bf16.mxu0 0
      %3846 = vmatpush1.bf16.msra.mxu0 %v3823
      %3847 = vmatprep.subr.bf16.mxu0 0
      %3848 = vmatpush1.bf16.msra.mxu0 %v3822
      %3849 = vmatprep.subr.bf16.mxu0 0
      %3850 = vmatpush1.bf16.msra.mxu0 %v3821
      %3851 = vmatprep.subr.bf16.mxu0 0
      %3852 = vmatpush1.bf16.msra.mxu0 %v3820
      %3853 = vmatprep.subr.bf16.mxu0 0
      %3854 = vmatpush1.bf16.msra.mxu0 %v3819
      %3855 = vmatprep.subr.bf16.mxu0 0
      %3856 = vmatpush1.bf16.msra.mxu0 %v3818
      %3857 = vmatprep.subr.bf16.mxu0 0
      %3858 = vmatpush2.bf16.msra.mxu0 0
      %3859 = vmatprep.subr.bf16.mxu0 0
      %3860 = vmatpush2.bf16.msra.mxu0 0
      %3861 = vmatprep.subr.bf16.mxu0 0
      %3862 = vmatpush2.bf16.msra.mxu0 0
      %3863 = vmatprep.subr.bf16.mxu0 0
      %3864 = vmatpush2.bf16.msra.mxu0 0
      %3865 = vmatprep.subr.bf16.mxu0 0
      %3866 = vmatpush2.bf16.msra.mxu0 0
      %3867 = vmatprep.subr.bf16.mxu0 0
      %3868 = vmatpush2.bf16.msra.mxu0 0
      %3869 = vmatprep.subr.bf16.mxu0 0
      %3870 = vmatpush2.bf16.msra.mxu0 0
      %3871 = vmatprep.subr.bf16.mxu0 0
      %3872 = vmatpush2.bf16.msra.mxu0 0
      %3873 = vmatprep.mubr.bf16.mxu0 0
      %3874 = vmatmul.mubr.bf16.gmra.mxu0 %v3835
      %v3875 = vpop.f32.mrf.mxu0
      %v3876 = vadd.f32 %v3786, %v3875
      %v3877 = vpop.f32.mrf.mxu0
      %v3878 = vpop.f32.mrf.mxu0
      %v3879 = vpop.f32.mrf.mxu0
      %3880 = vdwg.mxu0
      %v3881 = vmax.f32 %v3876, 0.0
      %v3882 = vpack.c.bf16 %v3881, %v3881
      %v3883 = vld [vmem:[%s11] sm:$0xf]
      %v3884 = vld [vmem:[%s11 + $0x4] sm:$0xf]
      %v3885 = vld [vmem:[%s11 + $0x8] sm:$0xf]
      %v3886 = vld [vmem:[%s11 + $0xc] sm:$0xf]
      %v3887 = vld [vmem:[%s11 + $0x10] sm:$0xf]
      %v3888 = vld [vmem:[%s11 + $0x14] sm:$0xf]
      %v3889 = vld [vmem:[%s11 + $0x18] sm:$0xf]
      %v3890 = vld [vmem:[%s11 + $0x1c] sm:$0xf]
      %v3891 = vld [vmem:[%s11 + $0x20] sm:$0xf]
      %v3892 = vld [vmem:[%s11 + $0x24] sm:$0xf]
      %v3893 = vld [vmem:[%s11 + $0x28] sm:$0x3]
      %v3894 = vld [vmem:[%s12] sm:$0x1]
      %v3896 = vlaneseq
      %v3897 = vshrl.u32 %v3896, 7
      %v3898 = vsub.s32 0, %v3897
      %v3899 = vrot.slane %v3894, %v3898
      %v3912 = vunpack.c.l.b16 %v3883
      %v3913 = vunpack.c.l.b16 %v3884
      %v3914 = vunpack.c.l.b16 %v3885
      %v3915 = vunpack.c.l.b16 %v3886
      %v3916 = vunpack.c.l.b16 %v3887
      %v3917 = vunpack.c.l.b16 %v3888
      %v3918 = vunpack.c.l.b16 %v3889
      %v3919 = vunpack.c.l.b16 %v3890
      %v3920 = vunpack.c.l.b16 %v3891
      %v3921 = vunpack.c.l.b16 %v3892
      %v3922 = vunpack.c.l.b16 %v3893
      %v3923 = vpack.c.b16 %v3913, %v3912
      %v3924 = vpack.c.b16 %v3915, %v3914
      %v3925 = vpack.c.b16 %v3917, %v3916
      %v3926 = vpack.c.b16 %v3919, %v3918
      %v3927 = vpack.c.b16 %v3921, %v3920
      %v3928 = vpack.c.b16 %v3922, %v3922
      %v3935 = vsel %vm2174, %v3882, 0
      %v3938 = vsel %vm2184, %v3928, 0
      %3940 = vmatprep.subr.bf16.mxu0 0
      %3941 = vmatpush1.bf16.msra.mxu0 0
      %3942 = vmatprep.subr.bf16.mxu0 0
      %3943 = vmatpush1.bf16.msra.mxu0 0
      %3944 = vmatprep.subr.bf16.mxu0 0
      %3945 = vmatpush1.bf16.msra.mxu0 %v3938
      %3946 = vmatprep.subr.bf16.mxu0 0
      %3947 = vmatpush1.bf16.msra.mxu0 %v3927
      %3948 = vmatprep.subr.bf16.mxu0 0
      %3949 = vmatpush1.bf16.msra.mxu0 %v3926
      %3950 = vmatprep.subr.bf16.mxu0 0
      %3951 = vmatpush1.bf16.msra.mxu0 %v3925
      %3952 = vmatprep.subr.bf16.mxu0 0
      %3953 = vmatpush1.bf16.msra.mxu0 %v3924
      %3954 = vmatprep.subr.bf16.mxu0 0
      %3955 = vmatpush1.bf16.msra.mxu0 %v3923
      %3956 = vmatprep.subr.bf16.mxu0 0
      %3957 = vmatpush2.bf16.msra.mxu0 0
      %3958 = vmatprep.subr.bf16.mxu0 0
      %3959 = vmatpush2.bf16.msra.mxu0 0
      %3960 = vmatprep.subr.bf16.mxu0 0
      %3961 = vmatpush2.bf16.msra.mxu0 0
      %3962 = vmatprep.subr.bf16.mxu0 0
      %3963 = vmatpush2.bf16.msra.mxu0 0
      %3964 = vmatprep.subr.bf16.mxu0 0
      %3965 = vmatpush2.bf16.msra.mxu0 0
      %3966 = vmatprep.subr.bf16.mxu0 0
      %3967 = vmatpush2.bf16.msra.mxu0 0
      %3968 = vmatprep.subr.bf16.mxu0 0
      %3969 = vmatpush2.bf16.msra.mxu0 0
      %3970 = vmatprep.subr.bf16.mxu0 0
      %3971 = vmatpush2.bf16.msra.mxu0 0
      %3972 = vmatprep.mubr.bf16.mxu0 0
      %3973 = vmatmul.mubr.bf16.gmra.mxu0 %v3935
      %v3974 = vpop.f32.mrf.mxu0
      %v3975 = vadd.f32 %v3899, %v3974
      %v3976 = vpop.f32.mrf.mxu0
      %v3977 = vpop.f32.mrf.mxu0
      %v3978 = vpop.f32.mrf.mxu0
      %3979 = vdwg.mxu0
      %3980 = vst [vmem:[%s443] sm:$0x3] %v3975
      %p3981 = scmp.lt.s32.totalorder %s24, 2
      %s3982 = scalar_select %p3981, %s24, 2
      %s3983 = smul.addr %s3982, 2
      %s3984 = scalar_lea.vmem %s13, %s3983
      // Predicated region
      $region73: #{net_forward.1} parent=71 // pred_check
        %p3985 = pneg %p320
      $region74: #{net_forward.1} parent=71 // pred_check_branch
        %3987 = sbr.rel (%p3985) target = $region76
      $region75: #{net_forward.1} parent=71 // pred_region
        _
      $region76: #{net_forward.1} parent=71 // pred_fallthru
        _
    $region72: #{net_forward.1} parent=5 // pred_fallthru
      _
    %p3988 = scmp.le.s32.totalorder 2, %s19
    // Predicated region
    $region77: #{net_forward.1} parent=5 // pred_check
      %p3989 = pneg %p3988
    $region78: #{net_forward.1} parent=5 // pred_check_branch
      %3991 = sbr.rel (%p3989) target = $region80
    $region79: #{net_forward.1} parent=5 // pred_region
      %s3992 = ssub.s32 %s19, 2
      // Predicated region
      $region81: #{net_forward.1} parent=79 // pred_check
        %p3993 = pneg %p326
      $region82: #{net_forward.1} parent=79 // pred_check_branch
        %3995 = sbr.rel (%p3993) target = $region84
      $region83: #{net_forward.1} parent=79 // pred_region
        %p3996 = scmp.lt.s32.totalorder %s25, 2
        %s3997 = scalar_select %p3996, %s25, 2
        %s3998 = smul.addr %s3997, 2
        %s3999 = scalar_lea.vmem %s13, %s3998
      $region84: #{net_forward.1} parent=79 // pred_fallthru
        _
    $region80: #{net_forward.1} parent=5 // pred_fallthru
      _
  $region6: #{net_forward.1} parent=0 // loop_footer
    %s23 = sadd.s32 1, %s19
  $region7: #{net_forward.1} parent=0 // loop_footer_branch
    %18 = sbr.rel target = $region3
  $region8: #{net_forward.1} parent=0 // loop_exit
    _

</llo_original>
